<compile_context>
chip_gen: v7x
topology: tpu7x:2x2x1
jax: 0.10.0
libtpu: 0.0.40
codegen_flags: <defaults>
</compile_context>

<pallas_src>
import functools

import jax
import jax.numpy as jnp
from jax.experimental import pallas as pl
from jax.experimental.pallas import tpu as pltpu


def implicit_euler_kernel(t_ref, x0_ref, zb_ref, w_ref, hist_ref, state_ref,
                          *, t_chunk, b_tile, hw, num_iterations, dt_scale):
    """One (batch-block, time-chunk) grid point of the implicit-Euler solve.

    t_ref     : SMEM scalar-prefetch ref, t values (T,)
    x0_ref    : (C, B_tile*HW) VMEM tile, initial state for this batch block
    zb_ref    : (C, B_tile*HW) VMEM tile, conditioning + bias folded (z + b)
    w_ref     : (C, C) VMEM tile, 1x1-conv flux weights
    hist_ref  : (T_chunk, B_tile, C, HW) VMEM output block (history chunk,
                already in the final (T, B, C, HW) layout)
    state_ref : (C, B_tile*HW) VMEM scratch, running state carried across
                time chunks for the current batch block
    """
    ti = pl.program_id(1)                       # time-chunk index ("arbitrary")

    dt = (t_ref[1] - t_ref[0]) * dt_scale       # scalar, SMEM reads only
    w = w_ref[...]
    zb = zb_ref[...]

    # At the first time chunk of each batch block, the carried state is x0.
    @pl.when(ti == 0)
    def _init():
        state_ref[...] = x0_ref[...]

    # Chunk-local state lives in vregs; scratch is only touched at chunk edges.
    x = state_ref[...]

    for lt in range(t_chunk):                   # capped unroll (t_chunk <= 4)
        g = ti * t_chunk + lt                   # global time index
        t_next = t_ref[g]
        # per-step constant, hoisted out of the (1+num_iterations) flux evals
        c = zb + t_next

        def flux(v):
            # synthetic conditioned flux: tanh(W @ v + (z + b) + t_next)
            return jnp.tanh(
                jnp.dot(w, v, preferred_element_type=jnp.float32) + c)

        x_next = x + dt * flux(x)               # explicit predictor
        for _ in range(num_iterations):         # fixed-point correctors
            x_next = x + dt * flux(x_next)

        if lt == 0:
            # Global step 0 stores x0 itself; that case only occurs at ti == 0.
            x = jnp.where(ti == 0, x, x_next)
        else:
            x = x_next

        # Emit history directly in the (T, B, C, HW) target layout: per-batch
        # static, 128-aligned lane slabs (unmasked vst for HW % 128 == 0).
        for lb in range(b_tile):
            hist_ref[lt, lb] = x[:, lb * hw:(lb + 1) * hw]

    state_ref[...] = x                          # carry to the next time chunk


def _choose_tiles(T, B, C, HW, itemsize=4, target_lanes=2048,
                  vmem_budget_bytes=24 * 2**20, max_t_chunk=4):
    """Pick (t_chunk, b_tile) and estimate resident VMEM bytes."""
    # ---- batch tile: the "parallel" lane-blocking axis --------------------
    if HW % 128 == 0:
        cands = [d for d in range(1, B + 1) if B % d == 0 and d * HW <= target_lanes]
        b_tile = max(cands) if cands else 1
        # Prefer >= 2 blocks along the parallel axis (2 TensorCores on v7x)
        # as long as each block keeps a reasonable lane width.
        if b_tile == B and B > 1:
            halves = [d for d in range(1, B) if B % d == 0 and d * HW >= 512]
            if halves:
                b_tile = max(halves)
    else:
        # Input lane blocks must be multiples of 128 unless full-dim.
        b_tile = B

    def est(t_chunk, b_t):
        n_tile = b_t * HW
        inp = 2 * (2 * C * n_tile + C * C)          # x0, zb, w (double-buffered)
        out = 2 * t_chunk * b_t * C * HW            # history chunk (double-buffered)
        scr = C * n_tile                            # persistent state scratch
        return (inp + out + scr) * itemsize

    # ---- time chunk: bounds both unroll and resident history --------------
    t_chunk = 1
    for d in range(1, T + 1):
        if T % d == 0 and d <= max_t_chunk and est(d, b_tile) <= vmem_budget_bytes:
            t_chunk = d

    return t_chunk, b_tile, est(t_chunk, b_tile)


def fno_flux_implicit_euler_solve(x0_nchw, z_nchw, t, w, b, dt_scale=1.0,
                                  num_iterations=3):
    """Pallas implementation of ImplicitEuler.forward(x0, z, t)."""
    B, C, H, W = x0_nchw.shape
    HW = H * W
    N = B * HW
    T = t.shape[0]

    t_chunk, b_tile, vmem_est = _choose_tiles(T, B, C, HW)
    n_tile = b_tile * HW

    # NCHW -> (C, B*HW): channels on sublanes, batch*spatial lane-dense.
    # (Input-side transposes are O(1/T) of the history traffic; the big
    #  output-side transpose is eliminated by emitting (T,B,C,HW) directly.)
    x0 = jnp.transpose(x0_nchw, (1, 0, 2, 3)).reshape(C, N).astype(jnp.float32)
    z = jnp.transpose(z_nchw, (1, 0, 2, 3)).reshape(C, N).astype(jnp.float32)
    # loop-invariant conditioning + bias, folded once
    zb = (z + b.reshape(C, 1)).astype(jnp.float32)

    kernel = functools.partial(
        implicit_euler_kernel, t_chunk=t_chunk, b_tile=b_tile, hw=HW,
        num_iterations=num_iterations, dt_scale=float(dt_scale))

    # Explicit VMEM limit: generous vs the tile estimate, but capped v7x-safe.
    vmem_limit = int(min(64 * 2**20, max(8 * 2**20, 2 * vmem_est)))

    hist = pl.pallas_call(
        kernel,
        out_shape=jax.ShapeDtypeStruct((T, B, C, HW), jnp.float32),
        grid_spec=pltpu.PrefetchScalarGridSpec(
            num_scalar_prefetch=1,                     # t lands in SMEM
            grid=(B // b_tile, T // t_chunk),          # (batch blocks, time chunks)
            in_specs=[
                pl.BlockSpec((C, n_tile), lambda bi, ti, *_: (0, bi)),   # x0
                pl.BlockSpec((C, n_tile), lambda bi, ti, *_: (0, bi)),   # z + b
                pl.BlockSpec((C, C), lambda bi, ti, *_: (0, 0)),         # W
            ],
            out_specs=pl.BlockSpec(
                (t_chunk, b_tile, C, HW),
                lambda bi, ti, *_: (ti, bi, 0, 0)),
            scratch_shapes=[pltpu.VMEM((C, n_tile), jnp.float32)],       # state
        ),
        compiler_params=pltpu.CompilerParams(
            dimension_semantics=("parallel", "arbitrary"),
            vmem_limit_bytes=vmem_limit),
    )(t.astype(jnp.float32), x0, zb, w)

    # (T, B, C, HW) -> (T, B, C, H, W): pure reshape, no HBM transpose.
    return hist.reshape(T, B, C, H, W)


def reference_solve(x0, z, t, w, b, dt_scale=1.0, num_iterations=3):
    """Pure-JAX reference of the implicit-Euler loop (NCHW semantics)."""
    T = t.shape[0]
    dt = (t[1] - t[0]) * dt_scale
    bias = b.reshape(1, -1, 1, 1)

    def flux(x, tn):
        return jnp.tanh(jnp.einsum('oc,bchw->bohw', w, x) + bias + z + tn)

    xs = [x0]
    x = x0
    for i in range(1, T):
        tn = t[i]
        x_next = x + dt * flux(x, tn)
        for _ in range(num_iterations):
            x_next = x + dt * flux(x_next, tn)
        x = x_next
        xs.append(x)
    return jnp.stack(xs, axis=0)


if __name__ == "__main__":
    key = jax.random.PRNGKey(0)
    k1, k2, k3, k4 = jax.random.split(key, 4)

    B, C, H, W = 4, 8, 16, 16     # batch, channels, spatial (HW = 256 lanes)
    T = 8                         # number of time steps (len(t))
    NUM_ITERATIONS = 3            # ImplicitEuler default num_iterations
    DT_SCALE = 0.5                # the module's `dt` scale factor

    x0 = jax.random.normal(k1, (B, C, H, W), dtype=jnp.float32)
    z = jax.random.normal(k2, (B, C, H, W), dtype=jnp.float32)
    t = jnp.linspace(0.0, 1.0, T, dtype=jnp.float32)

    # deterministic synthetic flux parameters (1x1 conv over channels)
    w = 0.1 * jax.random.normal(k3, (C, C), dtype=jnp.float32)
    b = 0.1 * jax.random.normal(k4, (C, 1), dtype=jnp.float32)

    out = fno_flux_implicit_euler_solve(
        x0, z, t, w, b, dt_scale=DT_SCALE, num_iterations=NUM_ITERATIONS)
    out = jax.block_until_ready(out)

    ref = reference_solve(x0, z, t, w, b, dt_scale=DT_SCALE,
                          num_iterations=NUM_ITERATIONS)
    assert out.shape == (T, B, C, H, W), out.shape
    assert jnp.allclose(out, ref, atol=1e-4, rtol=1e-4), "mismatch vs reference"

    print("KERNEL_OK")
</pallas_src>

<mosaic_0001>
module attributes {stable_mosaic.version = 11 : i64} {
  func.func @implicit_euler_kernel(%arg0: i32, %arg1: i32, %arg2: memref<8xf32, #tpu.memory_space<smem>>, %arg3: memref<8x512xf32, #tpu.memory_space<vmem>>, %arg4: memref<8x512xf32, #tpu.memory_space<vmem>>, %arg5: memref<8x8xf32, #tpu.memory_space<vmem>>, %arg6: memref<4x2x8x256xf32, #tpu.memory_space<vmem>>, %arg7: memref<8x512xf32, #tpu.memory_space<vmem>>) attributes {dimension_semantics = [#tpu.dimension_semantics<parallel>, #tpu.dimension_semantics<arbitrary>], iteration_bounds = array<i64: 2, 2>, scalar_prefetch = 1 : i64, scratch_operands = 1 : i64, tpu.core_type = #tpu.core_type<tc>, window_params = [{transform_indices = @transform_0, window_bounds = array<i64: 8, 512>}, {transform_indices = @transform_1, window_bounds = array<i64: 8, 512>}, {pipeline_mode = #tpu.pipeline_mode<synchronous>, transform_indices = @transform_2, window_bounds = array<i64: 8, 8>}, {transform_indices = @transform_3, window_bounds = array<i64: 4, 2, 8, 256>}]} {
    %c1 = arith.constant 1 : index
    %0 = memref.load %arg2[%c1] : memref<8xf32, #tpu.memory_space<smem>>
    %c0 = arith.constant 0 : index
    %1 = memref.load %arg2[%c0] : memref<8xf32, #tpu.memory_space<smem>>
    %2 = arith.subf %0, %1 : f32
    %cst = arith.constant 5.000000e-01 : f32
    %3 = arith.mulf %2, %cst : f32
    %c0_0 = arith.constant 0 : index
    %c0_1 = arith.constant 0 : index
    %4 = vector.load %arg5[%c0_0, %c0_1] : memref<8x8xf32, #tpu.memory_space<vmem>>, vector<8x8xf32>
    %c0_2 = arith.constant 0 : index
    %c0_3 = arith.constant 0 : index
    %5 = vector.load %arg4[%c0_2, %c0_3] : memref<8x512xf32, #tpu.memory_space<vmem>>, vector<8x512xf32>
    %c0_i32 = arith.constant 0 : i32
    %6 = arith.cmpi eq, %arg1, %c0_i32 : i32
    %7 = arith.extui %6 : i1 to i32
    %c0_i32_4 = arith.constant 0 : i32
    %8 = arith.cmpi ne, %7, %c0_i32_4 : i32
    scf.if %8 {
      %c0_60 = arith.constant 0 : index
      %c0_61 = arith.constant 0 : index
      %165 = vector.load %arg3[%c0_60, %c0_61] : memref<8x512xf32, #tpu.memory_space<vmem>>, vector<8x512xf32>
      %c0_62 = arith.constant 0 : index
      %c0_63 = arith.constant 0 : index
      %166 = vector.load %arg7[%c0_62, %c0_63] : memref<8x512xf32, #tpu.memory_space<vmem>>, vector<8x512xf32>
      tpu.vector_store %arg7[%c0_62, %c0_63], %165 {strides = array<i32>} : memref<8x512xf32, #tpu.memory_space<vmem>>, vector<8x512xf32>,
    } else {
    }
    %c0_5 = arith.constant 0 : index
    %c0_6 = arith.constant 0 : index
    %9 = vector.load %arg7[%c0_5, %c0_6] : memref<8x512xf32, #tpu.memory_space<vmem>>, vector<8x512xf32>
    %c4_i32 = arith.constant 4 : i32
    %10 = arith.muli %arg1, %c4_i32 : i32
    %c0_i32_7 = arith.constant 0 : i32
    %11 = arith.addi %10, %c0_i32_7 : i32
    %12 = arith.index_cast %11 : i32 to index
    %13 = memref.load %arg2[%12] : memref<8xf32, #tpu.memory_space<smem>>
    %14 = vector.broadcast %13 : f32 to vector<8x512xf32>
    %15 = arith.addf %5, %14 : vector<8x512xf32>
    %cst_8 = arith.constant dense<0.000000e+00> : vector<8x512xf32>
    %16 = tpu.matmul %4, %9, %cst_8 {dimension_numbers = #tpu.dot_dimension_numbers<[1], [0], [0], [1], [0, 0, 1, 1], [], []>} : vector<8x8xf32>, vector<8x512xf32>, vector<8x512xf32> -> vector<8x512xf32>
    %17 = arith.addf %16, %15 : vector<8x512xf32>
    %18 = math.tanh %17 : vector<8x512xf32>
    %19 = vector.broadcast %3 : f32 to vector<8x512xf32>
    %20 = arith.mulf %19, %18 : vector<8x512xf32>
    %21 = arith.addf %9, %20 : vector<8x512xf32>
    %cst_9 = arith.constant dense<0.000000e+00> : vector<8x512xf32>
    %22 = tpu.matmul %4, %21, %cst_9 {dimension_numbers = #tpu.dot_dimension_numbers<[1], [0], [0], [1], [0, 0, 1, 1], [], []>} : vector<8x8xf32>, vector<8x512xf32>, vector<8x512xf32> -> vector<8x512xf32>
    %23 = arith.addf %22, %15 : vector<8x512xf32>
    %24 = math.tanh %23 : vector<8x512xf32>
    %25 = vector.broadcast %3 : f32 to vector<8x512xf32>
    %26 = arith.mulf %25, %24 : vector<8x512xf32>
    %27 = arith.addf %9, %26 : vector<8x512xf32>
    %cst_10 = arith.constant dense<0.000000e+00> : vector<8x512xf32>
    %28 = tpu.matmul %4, %27, %cst_10 {dimension_numbers = #tpu.dot_dimension_numbers<[1], [0], [0], [1], [0, 0, 1, 1], [], []>} : vector<8x8xf32>, vector<8x512xf32>, vector<8x512xf32> -> vector<8x512xf32>
    %29 = arith.addf %28, %15 : vector<8x512xf32>
    %30 = math.tanh %29 : vector<8x512xf32>
    %31 = vector.broadcast %3 : f32 to vector<8x512xf32>
    %32 = arith.mulf %31, %30 : vector<8x512xf32>
    %33 = arith.addf %9, %32 : vector<8x512xf32>
    %cst_11 = arith.constant dense<0.000000e+00> : vector<8x512xf32>
    %34 = tpu.matmul %4, %33, %cst_11 {dimension_numbers = #tpu.dot_dimension_numbers<[1], [0], [0], [1], [0, 0, 1, 1], [], []>} : vector<8x8xf32>, vector<8x512xf32>, vector<8x512xf32> -> vector<8x512xf32>
    %35 = arith.addf %34, %15 : vector<8x512xf32>
    %36 = math.tanh %35 : vector<8x512xf32>
    %37 = vector.broadcast %3 : f32 to vector<8x512xf32>
    %38 = arith.mulf %37, %36 : vector<8x512xf32>
    %39 = arith.addf %9, %38 : vector<8x512xf32>
    %c0_i32_12 = arith.constant 0 : i32
    %40 = arith.cmpi eq, %arg1, %c0_i32_12 : i32
    %41 = arith.select %40, %9, %39 : vector<8x512xf32>
    %42 = vector.extract_strided_slice %41 {offsets = [0, 0], sizes = [8, 256], strides = [1, 1]} : vector<8x512xf32> to vector<8x256xf32>
    %c0_13 = arith.constant 0 : index
    %c0_14 = arith.constant 0 : index
    %c0_15 = arith.constant 0 : index
    %c0_16 = arith.constant 0 : index
    %43 = vector.load %arg6[%c0_13, %c0_14, %c0_15, %c0_16] : memref<4x2x8x256xf32, #tpu.memory_space<vmem>>, vector<1x1x8x256xf32>
    %44 = vector.shape_cast %43 : vector<1x1x8x256xf32> to vector<8x256xf32>
    %45 = vector.shape_cast %42 : vector<8x256xf32> to vector<1x1x8x256xf32>
    tpu.vector_store %arg6[%c0_13, %c0_14, %c0_15, %c0_16], %45 {strides = array<i32>} : memref<4x2x8x256xf32, #tpu.memory_space<vmem>>, vector<1x1x8x256xf32>,
    %46 = vector.extract_strided_slice %41 {offsets = [0, 256], sizes = [8, 256], strides = [1, 1]} : vector<8x512xf32> to vector<8x256xf32>
    %c0_17 = arith.constant 0 : index
    %c1_18 = arith.constant 1 : index
    %c0_19 = arith.constant 0 : index
    %c0_20 = arith.constant 0 : index
    %47 = vector.load %arg6[%c0_17, %c1_18, %c0_19, %c0_20] : memref<4x2x8x256xf32, #tpu.memory_space<vmem>>, vector<1x1x8x256xf32>
    %48 = vector.shape_cast %47 : vector<1x1x8x256xf32> to vector<8x256xf32>
    %49 = vector.shape_cast %46 : vector<8x256xf32> to vector<1x1x8x256xf32>
    tpu.vector_store %arg6[%c0_17, %c1_18, %c0_19, %c0_20], %49 {strides = array<i32>} : memref<4x2x8x256xf32, #tpu.memory_space<vmem>>, vector<1x1x8x256xf32>,
    %c4_i32_21 = arith.constant 4 : i32
    %50 = arith.muli %arg1, %c4_i32_21 : i32
    %c1_i32 = arith.constant 1 : i32
    %51 = arith.addi %50, %c1_i32 : i32
    %52 = arith.index_cast %51 : i32 to index
    %53 = memref.load %arg2[%52] : memref<8xf32, #tpu.memory_space<smem>>
    %54 = vector.broadcast %53 : f32 to vector<8x512xf32>
    %55 = arith.addf %5, %54 : vector<8x512xf32>
    %cst_22 = arith.constant dense<0.000000e+00> : vector<8x512xf32>
    %56 = tpu.matmul %4, %41, %cst_22 {dimension_numbers = #tpu.dot_dimension_numbers<[1], [0], [0], [1], [0, 0, 1, 1], [], []>} : vector<8x8xf32>, vector<8x512xf32>, vector<8x512xf32> -> vector<8x512xf32>
    %57 = arith.addf %56, %55 : vector<8x512xf32>
    %58 = math.tanh %57 : vector<8x512xf32>
    %59 = vector.broadcast %3 : f32 to vector<8x512xf32>
    %60 = arith.mulf %59, %58 : vector<8x512xf32>
    %61 = arith.addf %41, %60 : vector<8x512xf32>
    %cst_23 = arith.constant dense<0.000000e+00> : vector<8x512xf32>
    %62 = tpu.matmul %4, %61, %cst_23 {dimension_numbers = #tpu.dot_dimension_numbers<[1], [0], [0], [1], [0, 0, 1, 1], [], []>} : vector<8x8xf32>, vector<8x512xf32>, vector<8x512xf32> -> vector<8x512xf32>
    %63 = arith.addf %62, %55 : vector<8x512xf32>
    %64 = math.tanh %63 : vector<8x512xf32>
    %65 = vector.broadcast %3 : f32 to vector<8x512xf32>
    %66 = arith.mulf %65, %64 : vector<8x512xf32>
    %67 = arith.addf %41, %66 : vector<8x512xf32>
    %cst_24 = arith.constant dense<0.000000e+00> : vector<8x512xf32>
    %68 = tpu.matmul %4, %67, %cst_24 {dimension_numbers = #tpu.dot_dimension_numbers<[1], [0], [0], [1], [0, 0, 1, 1], [], []>} : vector<8x8xf32>, vector<8x512xf32>, vector<8x512xf32> -> vector<8x512xf32>
    %69 = arith.addf %68, %55 : vector<8x512xf32>
    %70 = math.tanh %69 : vector<8x512xf32>
    %71 = vector.broadcast %3 : f32 to vector<8x512xf32>
    %72 = arith.mulf %71, %70 : vector<8x512xf32>
    %73 = arith.addf %41, %72 : vector<8x512xf32>
    %cst_25 = arith.constant dense<0.000000e+00> : vector<8x512xf32>
    %74 = tpu.matmul %4, %73, %cst_25 {dimension_numbers = #tpu.dot_dimension_numbers<[1], [0], [0], [1], [0, 0, 1, 1], [], []>} : vector<8x8xf32>, vector<8x512xf32>, vector<8x512xf32> -> vector<8x512xf32>
    %75 = arith.addf %74, %55 : vector<8x512xf32>
    %76 = math.tanh %75 : vector<8x512xf32>
    %77 = vector.broadcast %3 : f32 to vector<8x512xf32>
    %78 = arith.mulf %77, %76 : vector<8x512xf32>
    %79 = arith.addf %41, %78 : vector<8x512xf32>
    %80 = vector.extract_strided_slice %79 {offsets = [0, 0], sizes = [8, 256], strides = [1, 1]} : vector<8x512xf32> to vector<8x256xf32>
    %c1_26 = arith.constant 1 : index
    %c0_27 = arith.constant 0 : index
    %c0_28 = arith.constant 0 : index
    %c0_29 = arith.constant 0 : index
    %81 = vector.load %arg6[%c1_26, %c0_27, %c0_28, %c0_29] : memref<4x2x8x256xf32, #tpu.memory_space<vmem>>, vector<1x1x8x256xf32>
    %82 = vector.shape_cast %81 : vector<1x1x8x256xf32> to vector<8x256xf32>
    %83 = vector.shape_cast %80 : vector<8x256xf32> to vector<1x1x8x256xf32>
    tpu.vector_store %arg6[%c1_26, %c0_27, %c0_28, %c0_29], %83 {strides = array<i32>} : memref<4x2x8x256xf32, #tpu.memory_space<vmem>>, vector<1x1x8x256xf32>,
    %84 = vector.extract_strided_slice %79 {offsets = [0, 256], sizes = [8, 256], strides = [1, 1]} : vector<8x512xf32> to vector<8x256xf32>
    %c1_30 = arith.constant 1 : index
    %c1_31 = arith.constant 1 : index
    %c0_32 = arith.constant 0 : index
    %c0_33 = arith.constant 0 : index
    %85 = vector.load %arg6[%c1_30, %c1_31, %c0_32, %c0_33] : memref<4x2x8x256xf32, #tpu.memory_space<vmem>>, vector<1x1x8x256xf32>
    %86 = vector.shape_cast %85 : vector<1x1x8x256xf32> to vector<8x256xf32>
    %87 = vector.shape_cast %84 : vector<8x256xf32> to vector<1x1x8x256xf32>
    tpu.vector_store %arg6[%c1_30, %c1_31, %c0_32, %c0_33], %87 {strides = array<i32>} : memref<4x2x8x256xf32, #tpu.memory_space<vmem>>, vector<1x1x8x256xf32>,
    %c4_i32_34 = arith.constant 4 : i32
    %88 = arith.muli %arg1, %c4_i32_34 : i32
    %c2_i32 = arith.constant 2 : i32
    %89 = arith.addi %88, %c2_i32 : i32
    %90 = arith.index_cast %89 : i32 to index
    %91 = memref.load %arg2[%90] : memref<8xf32, #tpu.memory_space<smem>>
    %92 = vector.broadcast %91 : f32 to vector<8x512xf32>
    %93 = arith.addf %5, %92 : vector<8x512xf32>
    %cst_35 = arith.constant dense<0.000000e+00> : vector<8x512xf32>
    %94 = tpu.matmul %4, %79, %cst_35 {dimension_numbers = #tpu.dot_dimension_numbers<[1], [0], [0], [1], [0, 0, 1, 1], [], []>} : vector<8x8xf32>, vector<8x512xf32>, vector<8x512xf32> -> vector<8x512xf32>
    %95 = arith.addf %94, %93 : vector<8x512xf32>
    %96 = math.tanh %95 : vector<8x512xf32>
    %97 = vector.broadcast %3 : f32 to vector<8x512xf32>
    %98 = arith.mulf %97, %96 : vector<8x512xf32>
    %99 = arith.addf %79, %98 : vector<8x512xf32>
    %cst_36 = arith.constant dense<0.000000e+00> : vector<8x512xf32>
    %100 = tpu.matmul %4, %99, %cst_36 {dimension_numbers = #tpu.dot_dimension_numbers<[1], [0], [0], [1], [0, 0, 1, 1], [], []>} : vector<8x8xf32>, vector<8x512xf32>, vector<8x512xf32> -> vector<8x512xf32>
    %101 = arith.addf %100, %93 : vector<8x512xf32>
    %102 = math.tanh %101 : vector<8x512xf32>
    %103 = vector.broadcast %3 : f32 to vector<8x512xf32>
    %104 = arith.mulf %103, %102 : vector<8x512xf32>
    %105 = arith.addf %79, %104 : vector<8x512xf32>
    %cst_37 = arith.constant dense<0.000000e+00> : vector<8x512xf32>
    %106 = tpu.matmul %4, %105, %cst_37 {dimension_numbers = #tpu.dot_dimension_numbers<[1], [0], [0], [1], [0, 0, 1, 1], [], []>} : vector<8x8xf32>, vector<8x512xf32>, vector<8x512xf32> -> vector<8x512xf32>
    %107 = arith.addf %106, %93 : vector<8x512xf32>
    %108 = math.tanh %107 : vector<8x512xf32>
    %109 = vector.broadcast %3 : f32 to vector<8x512xf32>
    %110 = arith.mulf %109, %108 : vector<8x512xf32>
    %111 = arith.addf %79, %110 : vector<8x512xf32>
    %cst_38 = arith.constant dense<0.000000e+00> : vector<8x512xf32>
    %112 = tpu.matmul %4, %111, %cst_38 {dimension_numbers = #tpu.dot_dimension_numbers<[1], [0], [0], [1], [0, 0, 1, 1], [], []>} : vector<8x8xf32>, vector<8x512xf32>, vector<8x512xf32> -> vector<8x512xf32>
    %113 = arith.addf %112, %93 : vector<8x512xf32>
    %114 = math.tanh %113 : vector<8x512xf32>
    %115 = vector.broadcast %3 : f32 to vector<8x512xf32>
    %116 = arith.mulf %115, %114 : vector<8x512xf32>
    %117 = arith.addf %79, %116 : vector<8x512xf32>
    %118 = vector.extract_strided_slice %117 {offsets = [0, 0], sizes = [8, 256], strides = [1, 1]} : vector<8x512xf32> to vector<8x256xf32>
    %c2 = arith.constant 2 : index
    %c0_39 = arith.constant 0 : index
    %c0_40 = arith.constant 0 : index
    %c0_41 = arith.constant 0 : index
    %119 = vector.load %arg6[%c2, %c0_39, %c0_40, %c0_41] : memref<4x2x8x256xf32, #tpu.memory_space<vmem>>, vector<1x1x8x256xf32>
    %120 = vector.shape_cast %119 : vector<1x1x8x256xf32> to vector<8x256xf32>
    %121 = vector.shape_cast %118 : vector<8x256xf32> to vector<1x1x8x256xf32>
    tpu.vector_store %arg6[%c2, %c0_39, %c0_40, %c0_41], %121 {strides = array<i32>} : memref<4x2x8x256xf32, #tpu.memory_space<vmem>>, vector<1x1x8x256xf32>,
    %122 = vector.extract_strided_slice %117 {offsets = [0, 256], sizes = [8, 256], strides = [1, 1]} : vector<8x512xf32> to vector<8x256xf32>
    %c2_42 = arith.constant 2 : index
    %c1_43 = arith.constant 1 : index
    %c0_44 = arith.constant 0 : index
    %c0_45 = arith.constant 0 : index
    %123 = vector.load %arg6[%c2_42, %c1_43, %c0_44, %c0_45] : memref<4x2x8x256xf32, #tpu.memory_space<vmem>>, vector<1x1x8x256xf32>
    %124 = vector.shape_cast %123 : vector<1x1x8x256xf32> to vector<8x256xf32>
    %125 = vector.shape_cast %122 : vector<8x256xf32> to vector<1x1x8x256xf32>
    tpu.vector_store %arg6[%c2_42, %c1_43, %c0_44, %c0_45], %125 {strides = array<i32>} : memref<4x2x8x256xf32, #tpu.memory_space<vmem>>, vector<1x1x8x256xf32>,
    %c4_i32_46 = arith.constant 4 : i32
    %126 = arith.muli %arg1, %c4_i32_46 : i32
    %c3_i32 = arith.constant 3 : i32
    %127 = arith.addi %126, %c3_i32 : i32
    %128 = arith.index_cast %127 : i32 to index
    %129 = memref.load %arg2[%128] : memref<8xf32, #tpu.memory_space<smem>>
    %130 = vector.broadcast %129 : f32 to vector<8x512xf32>
    %131 = arith.addf %5, %130 : vector<8x512xf32>
    %cst_47 = arith.constant dense<0.000000e+00> : vector<8x512xf32>
    %132 = tpu.matmul %4, %117, %cst_47 {dimension_numbers = #tpu.dot_dimension_numbers<[1], [0], [0], [1], [0, 0, 1, 1], [], []>} : vector<8x8xf32>, vector<8x512xf32>, vector<8x512xf32> -> vector<8x512xf32>
    %133 = arith.addf %132, %131 : vector<8x512xf32>
    %134 = math.tanh %133 : vector<8x512xf32>
    %135 = vector.broadcast %3 : f32 to vector<8x512xf32>
    %136 = arith.mulf %135, %134 : vector<8x512xf32>
    %137 = arith.addf %117, %136 : vector<8x512xf32>
    %cst_48 = arith.constant dense<0.000000e+00> : vector<8x512xf32>
    %138 = tpu.matmul %4, %137, %cst_48 {dimension_numbers = #tpu.dot_dimension_numbers<[1], [0], [0], [1], [0, 0, 1, 1], [], []>} : vector<8x8xf32>, vector<8x512xf32>, vector<8x512xf32> -> vector<8x512xf32>
    %139 = arith.addf %138, %131 : vector<8x512xf32>
    %140 = math.tanh %139 : vector<8x512xf32>
    %141 = vector.broadcast %3 : f32 to vector<8x512xf32>
    %142 = arith.mulf %141, %140 : vector<8x512xf32>
    %143 = arith.addf %117, %142 : vector<8x512xf32>
    %cst_49 = arith.constant dense<0.000000e+00> : vector<8x512xf32>
    %144 = tpu.matmul %4, %143, %cst_49 {dimension_numbers = #tpu.dot_dimension_numbers<[1], [0], [0], [1], [0, 0, 1, 1], [], []>} : vector<8x8xf32>, vector<8x512xf32>, vector<8x512xf32> -> vector<8x512xf32>
    %145 = arith.addf %144, %131 : vector<8x512xf32>
    %146 = math.tanh %145 : vector<8x512xf32>
    %147 = vector.broadcast %3 : f32 to vector<8x512xf32>
    %148 = arith.mulf %147, %146 : vector<8x512xf32>
    %149 = arith.addf %117, %148 : vector<8x512xf32>
    %cst_50 = arith.constant dense<0.000000e+00> : vector<8x512xf32>
    %150 = tpu.matmul %4, %149, %cst_50 {dimension_numbers = #tpu.dot_dimension_numbers<[1], [0], [0], [1], [0, 0, 1, 1], [], []>} : vector<8x8xf32>, vector<8x512xf32>, vector<8x512xf32> -> vector<8x512xf32>
    %151 = arith.addf %150, %131 : vector<8x512xf32>
    %152 = math.tanh %151 : vector<8x512xf32>
    %153 = vector.broadcast %3 : f32 to vector<8x512xf32>
    %154 = arith.mulf %153, %152 : vector<8x512xf32>
    %155 = arith.addf %117, %154 : vector<8x512xf32>
    %156 = vector.extract_strided_slice %155 {offsets = [0, 0], sizes = [8, 256], strides = [1, 1]} : vector<8x512xf32> to vector<8x256xf32>
    %c3 = arith.constant 3 : index
    %c0_51 = arith.constant 0 : index
    %c0_52 = arith.constant 0 : index
    %c0_53 = arith.constant 0 : index
    %157 = vector.load %arg6[%c3, %c0_51, %c0_52, %c0_53] : memref<4x2x8x256xf32, #tpu.memory_space<vmem>>, vector<1x1x8x256xf32>
    %158 = vector.shape_cast %157 : vector<1x1x8x256xf32> to vector<8x256xf32>
    %159 = vector.shape_cast %156 : vector<8x256xf32> to vector<1x1x8x256xf32>
    tpu.vector_store %arg6[%c3, %c0_51, %c0_52, %c0_53], %159 {strides = array<i32>} : memref<4x2x8x256xf32, #tpu.memory_space<vmem>>, vector<1x1x8x256xf32>,
    %160 = vector.extract_strided_slice %155 {offsets = [0, 256], sizes = [8, 256], strides = [1, 1]} : vector<8x512xf32> to vector<8x256xf32>
    %c3_54 = arith.constant 3 : index
    %c1_55 = arith.constant 1 : index
    %c0_56 = arith.constant 0 : index
    %c0_57 = arith.constant 0 : index
    %161 = vector.load %arg6[%c3_54, %c1_55, %c0_56, %c0_57] : memref<4x2x8x256xf32, #tpu.memory_space<vmem>>, vector<1x1x8x256xf32>
    %162 = vector.shape_cast %161 : vector<1x1x8x256xf32> to vector<8x256xf32>
    %163 = vector.shape_cast %160 : vector<8x256xf32> to vector<1x1x8x256xf32>
    tpu.vector_store %arg6[%c3_54, %c1_55, %c0_56, %c0_57], %163 {strides = array<i32>} : memref<4x2x8x256xf32, #tpu.memory_space<vmem>>, vector<1x1x8x256xf32>,
    %c0_58 = arith.constant 0 : index
    %c0_59 = arith.constant 0 : index
    %164 = vector.load %arg7[%c0_58, %c0_59] : memref<8x512xf32, #tpu.memory_space<vmem>>, vector<8x512xf32>
    tpu.vector_store %arg7[%c0_58, %c0_59], %155 {strides = array<i32>} : memref<8x512xf32, #tpu.memory_space<vmem>>, vector<8x512xf32>,
    return
  }
  func.func @transform_0(%arg0: i32, %arg1: i32, %arg2: memref<8xf32, #tpu.memory_space<smem>>) -> (i32, i32) {
    %c0_i32 = arith.constant 0 : i32
    %c0_i32_0 = arith.constant 0 : i32
    return %c0_i32, %arg0 : i32, i32
  }
  func.func @transform_1(%arg0: i32, %arg1: i32, %arg2: memref<8xf32, #tpu.memory_space<smem>>) -> (i32, i32) {
    %c0_i32 = arith.constant 0 : i32
    %c0_i32_0 = arith.constant 0 : i32
    return %c0_i32, %arg0 : i32, i32
  }
  func.func @transform_2(%arg0: i32, %arg1: i32, %arg2: memref<8xf32, #tpu.memory_space<smem>>) -> (i32, i32) {
    %c0_i32 = arith.constant 0 : i32
    %c0_i32_0 = arith.constant 0 : i32
    %c0_i32_1 = arith.constant 0 : i32
    return %c0_i32, %c0_i32_0 : i32, i32
  }
  func.func @transform_3(%arg0: i32, %arg1: i32, %arg2: memref<8xf32, #tpu.memory_space<smem>>) -> (i32, i32, i32, i32) {
    %c0_i32 = arith.constant 0 : i32
    %c0_i32_0 = arith.constant 0 : i32
    %c0_i32_1 = arith.constant 0 : i32
    return %arg1, %arg0, %c0_i32, %c0_i32_0 : i32, i32, i32, i32
  }
}

</mosaic_0001>

<llo_original>
// kernel: tpu_custom_call.1
$region0: #{tpu_custom_call.1}
  #allocation0 [shape = 'u32[]', space=smem, size = 0x4, offset = 0x4, fixed_abs, tag = 'smem constant byte address 0x4 - core index']
  #allocation1 [shape = 'u32[144,128]{1,0:T(1,128)}', space=vmem, size = 0x12000, scoped, tag = 'internal scratch']
  #allocation2 [shape = 'f32[8,512]{1,0:T(8,128)}', space=vmem, size = 0x4000, scoped, tag = 'scratch operand']
  #allocation3 [shape = 's32[1]{0}', space=sflag, size = 0x4, scoped, tag = 'scoped memory for tpu_custom_call.1']
  #allocation4 [shape = 'u8[512]{0}', space=smem, size = 0x200, scoped, tag = 'prefetched SMEM operand 0']
  #allocation11 [shape = 's32[]', space=sflag, size = 0x4, offset = 0, fixed_abs, tag = 'sflag constant byte address 0x0 - dummy sync flag']
  %s0 = inlined_call_operand.hbm [shape: f32[8], index: 0, kind: input, shape index: {}]
  %s1 = inlined_call_operand.hbm [shape: f32[8,1024], index: 1, kind: input, shape index: {}]
  %s2 = inlined_call_operand.hbm [shape: f32[8,1024], index: 2, kind: input, shape index: {}]
  %s3 = inlined_call_operand.vmem [shape: f32[8,8], index: 3, kind: input, shape index: {}]
  %s4 = inlined_call_operand.hbm [shape: f32[8,4,8,256], index: 4, kind: output, shape index: {}]
  %s5 = sld [smem:[#allocation0]]
  $region57: #{tpu_custom_call.1} parent=0
    _
  %s7 = ssub.s32 1, %s5
  %s8 = scalar_select 0, %s7, %s5
  %10 = dma.hbm_to_smem %s0, 16, [#allocation4], [#allocation3]
  %11 = dma.done [#allocation3], 16
  %12 = sfence
  $region1: #{tpu_custom_call.1} parent=0
    #allocation5 [shape = 'u8[32768]{0}', space=vmem, size = 0x8000, scoped, tag = 'input window, operand 1']
    #allocation6 [shape = 's32[2]{0}', space=sflag, size = 0x8, scoped, tag = 'scoped memory for tpu_custom_call.1']
    #allocation7 [shape = 's32[2]{0}', space=sflag, size = 0x8, scoped, tag = 'scoped memory for tpu_custom_call.1']
    #allocation8 [shape = 'u8[32768]{0}', space=vmem, size = 0x8000, scoped, tag = 'input window, operand 2']
    #allocation9 [shape = 's32[2]{0}', space=sflag, size = 0x8, scoped, tag = 'scoped memory for tpu_custom_call.1']
    #allocation10 [shape = 'u8[131072]{0}', space=vmem, size = 0x20000, scoped, tag = 'output window, operand 0']
    %13 = vsyncpa [#allocation6], 0
    %s14 = scalar_lea.sflag [#allocation6], 1
    %15 = vsyncpa %s14, 0
    %16 = vsyncpa [#allocation9], 0
    %s17 = scalar_lea.sflag [#allocation9], 1
    %18 = vsyncpa %s17, 0
    %19 = vsyncpa [#allocation7], 0
    %s20 = scalar_lea.sflag [#allocation7], 1
    %21 = vsyncpa %s20, 0
    loop: start=0, step=1, limit=6
    $region2: #{tpu_custom_call.1} parent=1 // loop_pre_header
      _
    $region3: #{tpu_custom_call.1} parent=1 // loop_header
      %s23 = sphi 0, %s27
      %p24 = scmp.ge.s32.totalorder %s23, 6
      %s30 = sphi 0, %s42
      %s31 = sphi 0, %s38
      %s32 = sphi 0, %s30
      %s33 = sphi 0, %s31
      %s34 = sphi 0, %s32
      %s35 = sphi 0, %s33
      %s45 = sphi 0, %s47
      %s48 = sphi 0, %s45
      %s49 = sphi 0, %s48
      %s65 = sphi 0, %s49
      %s71 = sphi 0, %s73
      %s74 = sphi 0, %s71
      %s75 = sphi 0, %s74
      %s91 = sphi 0, %s75
      %s95 = sphi 0, %s95
      %s97 = sphi 0, %s95
      %s98 = sphi 0, %s97
      %s112 = sphi 0, %s98
      %s120 = sphi 0, %s122
      %s123 = sphi 0, %s120
      %s124 = sphi 0, %s123
      %s140 = sphi 0, %s124
    $region4: #{tpu_custom_call.1} parent=1 // loop_header_branch
      %26 = sbr.rel (%p24) target = $region8
    $region5: #{tpu_custom_call.1} parent=1 // loop_body
      %s28 = ssub.s32 %s23, 1
      %s29 = ssub.s32 %s23, 2
      %s36 = sadd.s32 1, %s31
      %p37 = scmp.ge.s32.totalorder %s36, 2
      %s38 = scalar_select %p37, 0, %s36
      %s39 = sadd.s32 1, %s30
      %s40 = scalar_select %p37, %s39, %s30
      %p41 = scmp.ge.s32.totalorder %s40, 2
      %s42 = scalar_select %p41, 0, %s40
      %s43 = ssub.s32 %s30, %s42
      %p44 = scmp.eq.s32.totalorder %s43, 0
      %s46 = sadd.s32 %s45, 1
      %s47 = scalar_select %p44, %s45, %s46
      %p50 = pneg %p44
      %p51 = scmp.eq.s32.totalorder %s23, 3
      %p52 = por %p50, %p51
      %p53 = scmp.ne.s32.totalorder %s45, %s48
      %p54 = scmp.eq.s32.totalorder %s23, 0
      %p55 = por %p53, %p54
      %p56 = scmp.ne.s32.totalorder %s45, %s48
      %p57 = scmp.eq.s32.totalorder %s28, 3
      %p58 = por %p56, %p57
      %p59 = scmp.ne.s32.totalorder %s48, %s49
      %p60 = scmp.eq.s32.totalorder %s28, 0
      %p61 = por %p59, %p60
      %p62 = scmp.ne.s32.totalorder %s48, %s49
      %p63 = scmp.eq.s32.totalorder %s29, 3
      %p64 = por %p62, %p63
      %p66 = scmp.ne.s32.totalorder %s49, %s65
      %p67 = scmp.eq.s32.totalorder %s29, 0
      %p68 = por %p66, %p67
      %s69 = ssub.s32 %s30, %s42
      %p70 = scmp.eq.s32.totalorder %s69, 0
      %s72 = sadd.s32 %s71, 1
      %s73 = scalar_select %p70, %s71, %s72
      %p76 = pneg %p70
      %p77 = scmp.eq.s32.totalorder %s23, 3
      %p78 = por %p76, %p77
      %p79 = scmp.ne.s32.totalorder %s71, %s74
      %p80 = scmp.eq.s32.totalorder %s23, 0
      %p81 = por %p79, %p80
      %p82 = scmp.ne.s32.totalorder %s71, %s74
      %p83 = scmp.eq.s32.totalorder %s28, 3
      %p84 = por %p82, %p83
      %p85 = scmp.ne.s32.totalorder %s74, %s75
      %p86 = scmp.eq.s32.totalorder %s28, 0
      %p87 = por %p85, %p86
      %p88 = scmp.ne.s32.totalorder %s74, %s75
      %p89 = scmp.eq.s32.totalorder %s29, 3
      %p90 = por %p88, %p89
      %p92 = scmp.ne.s32.totalorder %s75, %s91
      %p93 = scmp.eq.s32.totalorder %s29, 0
      %p94 = por %p92, %p93
      %s96 = sadd.s32 %s95, 1
      %p99 = scmp.eq.s32.totalorder %s23, 3
      %p100 = scmp.ne.s32.totalorder %s95, %s97
      %p101 = scmp.eq.s32.totalorder %s23, 0
      %p102 = por %p100, %p101
      %p103 = scmp.ne.s32.totalorder %s95, %s97
      %p104 = scmp.eq.s32.totalorder %s28, 3
      %p105 = por %p103, %p104
      %p106 = scmp.ne.s32.totalorder %s97, %s98
      %p107 = scmp.eq.s32.totalorder %s28, 0
      %p108 = por %p106, %p107
      %p109 = scmp.ne.s32.totalorder %s97, %s98
      %p110 = scmp.eq.s32.totalorder %s29, 3
      %p111 = por %p109, %p110
      %p113 = scmp.ne.s32.totalorder %s98, %s112
      %p114 = scmp.eq.s32.totalorder %s29, 0
      %p115 = por %p113, %p114
      %s116 = ssub.s32 %s31, %s38
      %s117 = ssub.s32 %s30, %s42
      %s118 = sor.u32 %s116, %s117
      %p119 = scmp.eq.s32.totalorder %s118, 0
      %s121 = sadd.s32 %s120, 1
      %s122 = scalar_select %p119, %s120, %s121
      %p125 = pneg %p119
      %p126 = scmp.eq.s32.totalorder %s23, 3
      %p127 = por %p125, %p126
      %p128 = scmp.ne.s32.totalorder %s120, %s123
      %p129 = scmp.eq.s32.totalorder %s23, 0
      %p130 = por %p128, %p129
      %p131 = scmp.ne.s32.totalorder %s120, %s123
      %p132 = scmp.eq.s32.totalorder %s28, 3
      %p133 = por %p131, %p132
      %p134 = scmp.ne.s32.totalorder %s123, %s124
      %p135 = scmp.eq.s32.totalorder %s28, 0
      %p136 = por %p134, %p135
      %p137 = scmp.ne.s32.totalorder %s123, %s124
      %p138 = scmp.eq.s32.totalorder %s29, 3
      %p139 = por %p137, %p138
      %p141 = scmp.ne.s32.totalorder %s124, %s140
      %p142 = scmp.eq.s32.totalorder %s29, 0
      %p143 = por %p141, %p142
      %p144 = scmp.le.s32.totalorder 1, %s23
      %p145 = scmp.lt.s32.totalorder %s23, 5
      %p146 = pnand %p144, %p145
      %p147 = pneg %p146
      // Predicated region
      $region9: #{tpu_custom_call.1} parent=5 // pred_check
        _
      $region10: #{tpu_custom_call.1} parent=5 // pred_check_branch
        %149 = sbr.rel (%p146) target = $region12
      $region11: #{tpu_custom_call.1} parent=5 // pred_region
        %s150 = ssub.s32 %s23, 1
        // Predicated region
        $region13: #{tpu_custom_call.1} parent=11 // pred_check
          %p151 = pneg %p108
        $region14: #{tpu_custom_call.1} parent=11 // pred_check_branch
          %153 = sbr.rel (%p151) target = $region16
        $region15: #{tpu_custom_call.1} parent=11 // pred_region
          _
        $region16: #{tpu_custom_call.1} parent=11 // pred_fallthru
          _
      $region12: #{tpu_custom_call.1} parent=5 // pred_fallthru
        _
      %p154 = scmp.lt.s32.totalorder %s23, 4
      // Predicated region
      $region17: #{tpu_custom_call.1} parent=5 // pred_check
        %p155 = pneg %p154
      $region18: #{tpu_custom_call.1} parent=5 // pred_check_branch
        %157 = sbr.rel (%p155) target = $region20
      $region19: #{tpu_custom_call.1} parent=5 // pred_region
        // Predicated region
        $region21: #{tpu_custom_call.1} parent=19 // pred_check
          %p158 = pneg %p55
        $region22: #{tpu_custom_call.1} parent=19 // pred_check_branch
          %160 = sbr.rel (%p158) target = $region24
        $region23: #{tpu_custom_call.1} parent=19 // pred_region
          %s161 = sand.u32 %s45, 1
          %s162 = scalar_lea.sflag [#allocation6], %s161
          %s163 = sand.u32 %s45, 1
          %s164 = smul.addr %s163, 32
          %s165 = scalar_lea.vmem [#allocation5], %s164
          %s166 = smul.u32 4, %s30
          %s168 = ssub.s32 512, 512
          %169 = vsyncadd %s162, %s168
          %s170 = smul.addr %s166, 128
          %s171 = scalar_lea.hbm %s1, %s170
          %s173 = sshll.u32 %s165, 4
          %s174 = int_to_ptr.vmem [resolvable:$true] %s173
          %176 = dma.hbm_to_vmem [thread:$0]  %s171, 512, %s174, %s162
        $region24: #{tpu_custom_call.1} parent=19 // pred_fallthru
          _
        // Predicated region
        $region25: #{tpu_custom_call.1} parent=19 // pred_check
          %p177 = pneg %p81
        $region26: #{tpu_custom_call.1} parent=19 // pred_check_branch
          %179 = sbr.rel (%p177) target = $region28
        $region27: #{tpu_custom_call.1} parent=19 // pred_region
          %s180 = sand.u32 %s71, 1
          %s181 = scalar_lea.sflag [#allocation9], %s180
          %s182 = sand.u32 %s71, 1
          %s183 = smul.addr %s182, 32
          %s184 = scalar_lea.vmem [#allocation8], %s183
          %s185 = smul.u32 4, %s30
          %s187 = ssub.s32 512, 512
          %188 = vsyncadd %s181, %s187
          %s189 = smul.addr %s185, 128
          %s190 = scalar_lea.hbm %s2, %s189
          %s192 = sshll.u32 %s184, 4
          %s193 = int_to_ptr.vmem [resolvable:$true] %s192
          %195 = dma.hbm_to_vmem [thread:$0]  %s190, 512, %s193, %s181
        $region28: #{tpu_custom_call.1} parent=19 // pred_fallthru
          _
      $region20: #{tpu_custom_call.1} parent=5 // pred_fallthru
        _
      %p196 = scmp.le.s32.totalorder 1, %s23
      %p197 = scmp.lt.s32.totalorder %s23, 5
      %p198 = pnand %p196, %p197
      %p199 = pneg %p198
      // Predicated region
      $region29: #{tpu_custom_call.1} parent=5 // pred_check
        _
      $region30: #{tpu_custom_call.1} parent=5 // pred_check_branch
        %201 = sbr.rel (%p198) target = $region32
      $region31: #{tpu_custom_call.1} parent=5 // pred_region
        %s202 = ssub.s32 %s23, 1
        %s203 = sand.u32 %s48, 1
        %s204 = scalar_lea.sflag [#allocation6], %s203
        %s205 = sand.u32 %s48, 1
        %s206 = smul.addr %s205, 32
        %s207 = scalar_lea.vmem [#allocation5], %s206
        // Predicated region
        $region33: #{tpu_custom_call.1} parent=31 // pred_check
          %p208 = pneg %p61
        $region34: #{tpu_custom_call.1} parent=31 // pred_check_branch
          %210 = sbr.rel (%p208) target = $region36
        $region35: #{tpu_custom_call.1} parent=31 // pred_region
          %211 = dma.done %s204, 512
        $region36: #{tpu_custom_call.1} parent=31 // pred_fallthru
          _
        %s212 = sand.u32 %s74, 1
        %s213 = scalar_lea.sflag [#allocation9], %s212
        %s214 = sand.u32 %s74, 1
        %s215 = smul.addr %s214, 32
        %s216 = scalar_lea.vmem [#allocation8], %s215
        // Predicated region
        $region37: #{tpu_custom_call.1} parent=31 // pred_check
          %p217 = pneg %p87
        $region38: #{tpu_custom_call.1} parent=31 // pred_check_branch
          %219 = sbr.rel (%p217) target = $region40
        $region39: #{tpu_custom_call.1} parent=31 // pred_region
          %220 = dma.done %s213, 512
        $region40: #{tpu_custom_call.1} parent=31 // pred_fallthru
          _
        %s221 = sand.u32 %s48, 1
        %s222 = scalar_lea.sflag [#allocation6], %s221
        %s223 = sand.u32 %s48, 1
        %s224 = smul.addr %s223, 32
        %s225 = scalar_lea.vmem [#allocation5], %s224
        %p226 = pneg %p61
        %p227 = pneg %p58
        %s228 = sand.u32 %s74, 1
        %s229 = scalar_lea.sflag [#allocation9], %s228
        %s230 = sand.u32 %s74, 1
        %s231 = smul.addr %s230, 32
        %s232 = scalar_lea.vmem [#allocation8], %s231
        %p233 = pneg %p87
        %p234 = pneg %p84
        %p235 = pneg %p108
        %p236 = pneg %p105
        %p237 = pneg %p136
        %p238 = pneg %p133
        %s239 = sand.u32 %s123, 1
        %s240 = scalar_lea.sflag [#allocation7], %s239
        %s241 = sand.u32 %s123, 1
        %s242 = smul.addr %s241, 128
        %s243 = scalar_lea.vmem [#allocation10], %s242
        %s244 = smul.u32 4, %s32
        %s245 = smul.u32 4, %s32
        %s246 = smul.u32 4, %s33
        %s247 = smul.u32 2, %s32
        %s248 = sld [smem:[#allocation4 + $0x1]]
        %s249 = sld [smem:[#allocation4]]
        %s250 = ssub.f32 %s248, %s249
        %s251 = smul.f32 %s250, 0.5
        %v252 = vld [vmem:[%s3] sm:$0xff]
        %v253 = vld [vmem:[%s216] sm:$0xff]
        %v254 = vld [vmem:[%s216 + $0x8] sm:$0xff]
        %v255 = vld [vmem:[%s216 + $0x10] sm:$0xff]
        %v256 = vld [vmem:[%s216 + $0x18] sm:$0xff]
        %p257 = scmp.eq.s32.totalorder %s33, 0
        // Predicated region
        $region41: #{tpu_custom_call.1} parent=31 // pred_check
          %p258 = pneg %p257
        $region42: #{tpu_custom_call.1} parent=31 // pred_check_branch
          %260 = sbr.rel (%p258) target = $region44
        $region43: #{tpu_custom_call.1} parent=31 // pred_region
          %v261 = vld [vmem:[%s207] sm:$0xff]
          %v262 = vld [vmem:[%s207 + $0x8] sm:$0xff]
          %v263 = vld [vmem:[%s207 + $0x10] sm:$0xff]
          %v264 = vld [vmem:[%s207 + $0x18] sm:$0xff]
          %265 = vst [vmem:[#allocation2] sm:$0xff] %v261
          %266 = vst [vmem:[#allocation2 + $0x8] sm:$0xff] %v262
          %267 = vst [vmem:[#allocation2 + $0x10] sm:$0xff] %v263
          %268 = vst [vmem:[#allocation2 + $0x18] sm:$0xff] %v264
        $region44: #{tpu_custom_call.1} parent=31 // pred_fallthru
          _
        %v269 = vld [vmem:[#allocation2] sm:$0xff]
        %v270 = vld [vmem:[#allocation2 + $0x8] sm:$0xff]
        %v271 = vld [vmem:[#allocation2 + $0x10] sm:$0xff]
        %v272 = vld [vmem:[#allocation2 + $0x18] sm:$0xff]
        %s273 = smul.u32 %s33, 4
        %s274 = sld [smem:[#allocation4 + %s273]]
        %v275 = vstv %s274
        %v276 = vadd.f32 %v253, %v275
        %v277 = vadd.f32 %v254, %v275
        %v278 = vadd.f32 %v255, %v275
        %v279 = vadd.f32 %v256, %v275
        %vm280 = vcmask 64512
        %v282 = vsel %vm280, %v252, 0
        %284 = vmatprep.subr.mxu0 %v270
        %285 = vmatpush1.msra.mxu0 %v269
        %286 = vmatprep.subr.mxu0 0.0
        %287 = vmatpush1.msra.mxu0 0.0
        %288 = vmatprep.subr.mxu0 0.0
        %289 = vmatpush1.msra.mxu0 0.0
        %290 = vmatprep.subr.mxu0 0.0
        %291 = vmatpush1.msra.mxu0 0.0
        %292 = vmatprep.subr.mxu0 0.0
        %293 = vmatpush1.msra.mxu0 0.0
        %294 = vmatprep.subr.mxu0 0.0
        %295 = vmatpush1.msra.mxu0 0.0
        %296 = vmatprep.subr.mxu0 0.0
        %297 = vmatpush1.msra.mxu0 0.0
        %298 = vmatprep.subr.mxu0 0.0
        %299 = vmatpush1.msra.mxu0 0.0
        %300 = vmatprep.subr.mxu0 0.0
        %301 = vmatpush1.msra.mxu0 0.0
        %302 = vmatprep.subr.mxu0 0.0
        %303 = vmatpush1.msra.mxu0 0.0
        %304 = vmatprep.subr.mxu0 0.0
        %305 = vmatpush1.msra.mxu0 0.0
        %306 = vmatprep.subr.mxu0 0.0
        %307 = vmatpush1.msra.mxu0 0.0
        %308 = vmatprep.subr.mxu0 0.0
        %309 = vmatpush1.msra.mxu0 0.0
        %310 = vmatprep.subr.mxu0 0.0
        %311 = vmatpush1.msra.mxu0 0.0
        %312 = vmatprep.subr.mxu0 0.0
        %313 = vmatpush1.msra.mxu0 0.0
        %314 = vmatprep.subr.mxu0 0.0
        %315 = vmatpush1.msra.mxu0 0.0
        %316 = vmatprep.subr.mxu0 0.0
        %317 = vmatpush1.msra.mxu0 0.0
        %318 = vmatprep.subr.mxu0 0.0
        %319 = vmatpush1.msra.mxu0 0.0
        %320 = vmatprep.subr.mxu0 0.0
        %321 = vmatpush1.msra.mxu0 0.0
        %322 = vmatprep.subr.mxu0 0.0
        %323 = vmatpush1.msra.mxu0 0.0
        %324 = vmatprep.subr.mxu0 0.0
        %325 = vmatpush1.msra.mxu0 0.0
        %326 = vmatprep.subr.mxu0 0.0
        %327 = vmatpush1.msra.mxu0 0.0
        %328 = vmatprep.subr.mxu0 0.0
        %329 = vmatpush1.msra.mxu0 0.0
        %330 = vmatprep.subr.mxu0 0.0
        %331 = vmatpush1.msra.mxu0 0.0
        %332 = vmatprep.subr.mxu0 0.0
        %333 = vmatpush1.msra.mxu0 0.0
        %334 = vmatprep.subr.mxu0 0.0
        %335 = vmatpush1.msra.mxu0 0.0
        %336 = vmatprep.subr.mxu0 0.0
        %337 = vmatpush1.msra.mxu0 0.0
        %338 = vmatprep.subr.mxu0 0.0
        %339 = vmatpush1.msra.mxu0 0.0
        %340 = vmatprep.subr.mxu0 0.0
        %341 = vmatpush1.msra.mxu0 0.0
        %342 = vmatprep.subr.mxu0 0.0
        %343 = vmatpush1.msra.mxu0 0.0
        %344 = vmatprep.subr.mxu0 0.0
        %345 = vmatpush1.msra.mxu0 0.0
        %346 = vmatprep.subr.mxu0 0.0
        %347 = vmatpush1.msra.mxu0 0.0
        %348 = vmatprep.mubr.f32.mxu0 0.0
        %349 = vmatmul.mubr.f32.gmra.mrb[0].mxu0 %v282
        %v350 = vpop.f32.mrb[0].mxu0
        %v351 = vadd.f32 %v276, %v350
        %v352 = vpop.f32.mrb[0].mxu0
        %v353 = vadd.f32 %v277, %v352
        %354 = vdwg.mxu0
        %355 = vmatprep.subr.mxu0 %v272
        %356 = vmatpush1.msra.mxu0 %v271
        %357 = vmatprep.subr.mxu0 0.0
        %358 = vmatpush1.msra.mxu0 0.0
        %359 = vmatprep.subr.mxu0 0.0
        %360 = vmatpush1.msra.mxu0 0.0
        %361 = vmatprep.subr.mxu0 0.0
        %362 = vmatpush1.msra.mxu0 0.0
        %363 = vmatprep.subr.mxu0 0.0
        %364 = vmatpush1.msra.mxu0 0.0
        %365 = vmatprep.subr.mxu0 0.0
        %366 = vmatpush1.msra.mxu0 0.0
        %367 = vmatprep.subr.mxu0 0.0
        %368 = vmatpush1.msra.mxu0 0.0
        %369 = vmatprep.subr.mxu0 0.0
        %370 = vmatpush1.msra.mxu0 0.0
        %371 = vmatprep.subr.mxu0 0.0
        %372 = vmatpush1.msra.mxu0 0.0
        %373 = vmatprep.subr.mxu0 0.0
        %374 = vmatpush1.msra.mxu0 0.0
        %375 = vmatprep.subr.mxu0 0.0
        %376 = vmatpush1.msra.mxu0 0.0
        %377 = vmatprep.subr.mxu0 0.0
        %378 = vmatpush1.msra.mxu0 0.0
        %379 = vmatprep.subr.mxu0 0.0
        %380 = vmatpush1.msra.mxu0 0.0
        %381 = vmatprep.subr.mxu0 0.0
        %382 = vmatpush1.msra.mxu0 0.0
        %383 = vmatprep.subr.mxu0 0.0
        %384 = vmatpush1.msra.mxu0 0.0
        %385 = vmatprep.subr.mxu0 0.0
        %386 = vmatpush1.msra.mxu0 0.0
        %387 = vmatprep.subr.mxu0 0.0
        %388 = vmatpush1.msra.mxu0 0.0
        %389 = vmatprep.subr.mxu0 0.0
        %390 = vmatpush1.msra.mxu0 0.0
        %391 = vmatprep.subr.mxu0 0.0
        %392 = vmatpush1.msra.mxu0 0.0
        %393 = vmatprep.subr.mxu0 0.0
        %394 = vmatpush1.msra.mxu0 0.0
        %395 = vmatprep.subr.mxu0 0.0
        %396 = vmatpush1.msra.mxu0 0.0
        %397 = vmatprep.subr.mxu0 0.0
        %398 = vmatpush1.msra.mxu0 0.0
        %399 = vmatprep.subr.mxu0 0.0
        %400 = vmatpush1.msra.mxu0 0.0
        %401 = vmatprep.subr.mxu0 0.0
        %402 = vmatpush1.msra.mxu0 0.0
        %403 = vmatprep.subr.mxu0 0.0
        %404 = vmatpush1.msra.mxu0 0.0
        %405 = vmatprep.subr.mxu0 0.0
        %406 = vmatpush1.msra.mxu0 0.0
        %407 = vmatprep.subr.mxu0 0.0
        %408 = vmatpush1.msra.mxu0 0.0
        %409 = vmatprep.subr.mxu0 0.0
        %410 = vmatpush1.msra.mxu0 0.0
        %411 = vmatprep.subr.mxu0 0.0
        %412 = vmatpush1.msra.mxu0 0.0
        %413 = vmatprep.subr.mxu0 0.0
        %414 = vmatpush1.msra.mxu0 0.0
        %415 = vmatprep.subr.mxu0 0.0
        %416 = vmatpush1.msra.mxu0 0.0
        %417 = vmatprep.subr.mxu0 0.0
        %418 = vmatpush1.msra.mxu0 0.0
        %419 = vmatprep.mubr.f32.mxu0 0.0
        %420 = vmatmul.mubr.f32.gmra.mrb[0].mxu0 %v282
        %v421 = vpop.f32.mrb[0].mxu0
        %v422 = vadd.f32 %v278, %v421
        %v423 = vpop.f32.mrb[0].mxu0
        %v424 = vadd.f32 %v279, %v423
        %425 = vdwg.mxu0
        %v426 = vtanh.pop %v351
        %v427 = vtanh.pop %v353
        %v428 = vtanh.pop %v422
        %v429 = vtanh.pop %v424
        %v430 = vstv %s251
        %v431 = vmul.f32 %v430, %v426
        %v432 = vmul.f32 %v430, %v427
        %v433 = vmul.f32 %v430, %v428
        %v434 = vmul.f32 %v430, %v429
        %v435 = vadd.f32 %v269, %v431
        %v436 = vadd.f32 %v270, %v432
        %v437 = vadd.f32 %v271, %v433
        %v438 = vadd.f32 %v272, %v434
        %439 = vmatprep.subr.mxu0 %v436
        %440 = vmatpush1.msra.mxu0 %v435
        %441 = vmatprep.subr.mxu0 0.0
        %442 = vmatpush1.msra.mxu0 0.0
        %443 = vmatprep.subr.mxu0 0.0
        %444 = vmatpush1.msra.mxu0 0.0
        %445 = vmatprep.subr.mxu0 0.0
        %446 = vmatpush1.msra.mxu0 0.0
        %447 = vmatprep.subr.mxu0 0.0
        %448 = vmatpush1.msra.mxu0 0.0
        %449 = vmatprep.subr.mxu0 0.0
        %450 = vmatpush1.msra.mxu0 0.0
        %451 = vmatprep.subr.mxu0 0.0
        %452 = vmatpush1.msra.mxu0 0.0
        %453 = vmatprep.subr.mxu0 0.0
        %454 = vmatpush1.msra.mxu0 0.0
        %455 = vmatprep.subr.mxu0 0.0
        %456 = vmatpush1.msra.mxu0 0.0
        %457 = vmatprep.subr.mxu0 0.0
        %458 = vmatpush1.msra.mxu0 0.0
        %459 = vmatprep.subr.mxu0 0.0
        %460 = vmatpush1.msra.mxu0 0.0
        %461 = vmatprep.subr.mxu0 0.0
        %462 = vmatpush1.msra.mxu0 0.0
        %463 = vmatprep.subr.mxu0 0.0
        %464 = vmatpush1.msra.mxu0 0.0
        %465 = vmatprep.subr.mxu0 0.0
        %466 = vmatpush1.msra.mxu0 0.0
        %467 = vmatprep.subr.mxu0 0.0
        %468 = vmatpush1.msra.mxu0 0.0
        %469 = vmatprep.subr.mxu0 0.0
        %470 = vmatpush1.msra.mxu0 0.0
        %471 = vmatprep.subr.mxu0 0.0
        %472 = vmatpush1.msra.mxu0 0.0
        %473 = vmatprep.subr.mxu0 0.0
        %474 = vmatpush1.msra.mxu0 0.0
        %475 = vmatprep.subr.mxu0 0.0
        %476 = vmatpush1.msra.mxu0 0.0
        %477 = vmatprep.subr.mxu0 0.0
        %478 = vmatpush1.msra.mxu0 0.0
        %479 = vmatprep.subr.mxu0 0.0
        %480 = vmatpush1.msra.mxu0 0.0
        %481 = vmatprep.subr.mxu0 0.0
        %482 = vmatpush1.msra.mxu0 0.0
        %483 = vmatprep.subr.mxu0 0.0
        %484 = vmatpush1.msra.mxu0 0.0
        %485 = vmatprep.subr.mxu0 0.0
        %486 = vmatpush1.msra.mxu0 0.0
        %487 = vmatprep.subr.mxu0 0.0
        %488 = vmatpush1.msra.mxu0 0.0
        %489 = vmatprep.subr.mxu0 0.0
        %490 = vmatpush1.msra.mxu0 0.0
        %491 = vmatprep.subr.mxu0 0.0
        %492 = vmatpush1.msra.mxu0 0.0
        %493 = vmatprep.subr.mxu0 0.0
        %494 = vmatpush1.msra.mxu0 0.0
        %495 = vmatprep.subr.mxu0 0.0
        %496 = vmatpush1.msra.mxu0 0.0
        %497 = vmatprep.subr.mxu0 0.0
        %498 = vmatpush1.msra.mxu0 0.0
        %499 = vmatprep.subr.mxu0 0.0
        %500 = vmatpush1.msra.mxu0 0.0
        %501 = vmatprep.subr.mxu0 0.0
        %502 = vmatpush1.msra.mxu0 0.0
        %503 = vmatprep.mubr.f32.mxu0 0.0
        %504 = vmatmul.mubr.f32.gmra.mrb[0].mxu0 %v282
        %v505 = vpop.f32.mrb[0].mxu0
        %v506 = vadd.f32 %v276, %v505
        %v507 = vpop.f32.mrb[0].mxu0
        %v508 = vadd.f32 %v277, %v507
        %509 = vdwg.mxu0
        %510 = vmatprep.subr.mxu0 %v438
        %511 = vmatpush1.msra.mxu0 %v437
        %512 = vmatprep.subr.mxu0 0.0
        %513 = vmatpush1.msra.mxu0 0.0
        %514 = vmatprep.subr.mxu0 0.0
        %515 = vmatpush1.msra.mxu0 0.0
        %516 = vmatprep.subr.mxu0 0.0
        %517 = vmatpush1.msra.mxu0 0.0
        %518 = vmatprep.subr.mxu0 0.0
        %519 = vmatpush1.msra.mxu0 0.0
        %520 = vmatprep.subr.mxu0 0.0
        %521 = vmatpush1.msra.mxu0 0.0
        %522 = vmatprep.subr.mxu0 0.0
        %523 = vmatpush1.msra.mxu0 0.0
        %524 = vmatprep.subr.mxu0 0.0
        %525 = vmatpush1.msra.mxu0 0.0
        %526 = vmatprep.subr.mxu0 0.0
        %527 = vmatpush1.msra.mxu0 0.0
        %528 = vmatprep.subr.mxu0 0.0
        %529 = vmatpush1.msra.mxu0 0.0
        %530 = vmatprep.subr.mxu0 0.0
        %531 = vmatpush1.msra.mxu0 0.0
        %532 = vmatprep.subr.mxu0 0.0
        %533 = vmatpush1.msra.mxu0 0.0
        %534 = vmatprep.subr.mxu0 0.0
        %535 = vmatpush1.msra.mxu0 0.0
        %536 = vmatprep.subr.mxu0 0.0
        %537 = vmatpush1.msra.mxu0 0.0
        %538 = vmatprep.subr.mxu0 0.0
        %539 = vmatpush1.msra.mxu0 0.0
        %540 = vmatprep.subr.mxu0 0.0
        %541 = vmatpush1.msra.mxu0 0.0
        %542 = vmatprep.subr.mxu0 0.0
        %543 = vmatpush1.msra.mxu0 0.0
        %544 = vmatprep.subr.mxu0 0.0
        %545 = vmatpush1.msra.mxu0 0.0
        %546 = vmatprep.subr.mxu0 0.0
        %547 = vmatpush1.msra.mxu0 0.0
        %548 = vmatprep.subr.mxu0 0.0
        %549 = vmatpush1.msra.mxu0 0.0
        %550 = vmatprep.subr.mxu0 0.0
        %551 = vmatpush1.msra.mxu0 0.0
        %552 = vmatprep.subr.mxu0 0.0
        %553 = vmatpush1.msra.mxu0 0.0
        %554 = vmatprep.subr.mxu0 0.0
        %555 = vmatpush1.msra.mxu0 0.0
        %556 = vmatprep.subr.mxu0 0.0
        %557 = vmatpush1.msra.mxu0 0.0
        %558 = vmatprep.subr.mxu0 0.0
        %559 = vmatpush1.msra.mxu0 0.0
        %560 = vmatprep.subr.mxu0 0.0
        %561 = vmatpush1.msra.mxu0 0.0
        %562 = vmatprep.subr.mxu0 0.0
        %563 = vmatpush1.msra.mxu0 0.0
        %564 = vmatprep.subr.mxu0 0.0
        %565 = vmatpush1.msra.mxu0 0.0
        %566 = vmatprep.subr.mxu0 0.0
        %567 = vmatpush1.msra.mxu0 0.0
        %568 = vmatprep.subr.mxu0 0.0
        %569 = vmatpush1.msra.mxu0 0.0
        %570 = vmatprep.subr.mxu0 0.0
        %571 = vmatpush1.msra.mxu0 0.0
        %572 = vmatprep.subr.mxu0 0.0
        %573 = vmatpush1.msra.mxu0 0.0
        %574 = vmatprep.mubr.f32.mxu0 0.0
        %575 = vmatmul.mubr.f32.gmra.mrb[0].mxu0 %v282
        %v576 = vpop.f32.mrb[0].mxu0
        %v577 = vadd.f32 %v278, %v576
        %v578 = vpop.f32.mrb[0].mxu0
        %v579 = vadd.f32 %v279, %v578
        %580 = vdwg.mxu0
        %v581 = vtanh.pop %v506
        %v582 = vtanh.pop %v508
        %v583 = vtanh.pop %v577
        %v584 = vtanh.pop %v579
        %v585 = vmul.f32 %v430, %v581
        %v586 = vmul.f32 %v430, %v582
        %v587 = vmul.f32 %v430, %v583
        %v588 = vmul.f32 %v430, %v584
        %v589 = vadd.f32 %v269, %v585
        %v590 = vadd.f32 %v270, %v586
        %v591 = vadd.f32 %v271, %v587
        %v592 = vadd.f32 %v272, %v588
        %593 = vmatprep.subr.mxu0 %v590
        %594 = vmatpush1.msra.mxu0 %v589
        %595 = vmatprep.subr.mxu0 0.0
        %596 = vmatpush1.msra.mxu0 0.0
        %597 = vmatprep.subr.mxu0 0.0
        %598 = vmatpush1.msra.mxu0 0.0
        %599 = vmatprep.subr.mxu0 0.0
        %600 = vmatpush1.msra.mxu0 0.0
        %601 = vmatprep.subr.mxu0 0.0
        %602 = vmatpush1.msra.mxu0 0.0
        %603 = vmatprep.subr.mxu0 0.0
        %604 = vmatpush1.msra.mxu0 0.0
        %605 = vmatprep.subr.mxu0 0.0
        %606 = vmatpush1.msra.mxu0 0.0
        %607 = vmatprep.subr.mxu0 0.0
        %608 = vmatpush1.msra.mxu0 0.0
        %609 = vmatprep.subr.mxu0 0.0
        %610 = vmatpush1.msra.mxu0 0.0
        %611 = vmatprep.subr.mxu0 0.0
        %612 = vmatpush1.msra.mxu0 0.0
        %613 = vmatprep.subr.mxu0 0.0
        %614 = vmatpush1.msra.mxu0 0.0
        %615 = vmatprep.subr.mxu0 0.0
        %616 = vmatpush1.msra.mxu0 0.0
        %617 = vmatprep.subr.mxu0 0.0
        %618 = vmatpush1.msra.mxu0 0.0
        %619 = vmatprep.subr.mxu0 0.0
        %620 = vmatpush1.msra.mxu0 0.0
        %621 = vmatprep.subr.mxu0 0.0
        %622 = vmatpush1.msra.mxu0 0.0
        %623 = vmatprep.subr.mxu0 0.0
        %624 = vmatpush1.msra.mxu0 0.0
        %625 = vmatprep.subr.mxu0 0.0
        %626 = vmatpush1.msra.mxu0 0.0
        %627 = vmatprep.subr.mxu0 0.0
        %628 = vmatpush1.msra.mxu0 0.0
        %629 = vmatprep.subr.mxu0 0.0
        %630 = vmatpush1.msra.mxu0 0.0
        %631 = vmatprep.subr.mxu0 0.0
        %632 = vmatpush1.msra.mxu0 0.0
        %633 = vmatprep.subr.mxu0 0.0
        %634 = vmatpush1.msra.mxu0 0.0
        %635 = vmatprep.subr.mxu0 0.0
        %636 = vmatpush1.msra.mxu0 0.0
        %637 = vmatprep.subr.mxu0 0.0
        %638 = vmatpush1.msra.mxu0 0.0
        %639 = vmatprep.subr.mxu0 0.0
        %640 = vmatpush1.msra.mxu0 0.0
        %641 = vmatprep.subr.mxu0 0.0
        %642 = vmatpush1.msra.mxu0 0.0
        %643 = vmatprep.subr.mxu0 0.0
        %644 = vmatpush1.msra.mxu0 0.0
        %645 = vmatprep.subr.mxu0 0.0
        %646 = vmatpush1.msra.mxu0 0.0
        %647 = vmatprep.subr.mxu0 0.0
        %648 = vmatpush1.msra.mxu0 0.0
        %649 = vmatprep.subr.mxu0 0.0
        %650 = vmatpush1.msra.mxu0 0.0
        %651 = vmatprep.subr.mxu0 0.0
        %652 = vmatpush1.msra.mxu0 0.0
        %653 = vmatprep.subr.mxu0 0.0
        %654 = vmatpush1.msra.mxu0 0.0
        %655 = vmatprep.subr.mxu0 0.0
        %656 = vmatpush1.msra.mxu0 0.0
        %657 = vmatprep.mubr.f32.mxu0 0.0
        %658 = vmatmul.mubr.f32.gmra.mrb[0].mxu0 %v282
        %v659 = vpop.f32.mrb[0].mxu0
        %v660 = vadd.f32 %v276, %v659
        %v661 = vpop.f32.mrb[0].mxu0
        %v662 = vadd.f32 %v277, %v661
        %663 = vdwg.mxu0
        %664 = vmatprep.subr.mxu0 %v592
        %665 = vmatpush1.msra.mxu0 %v591
        %666 = vmatprep.subr.mxu0 0.0
        %667 = vmatpush1.msra.mxu0 0.0
        %668 = vmatprep.subr.mxu0 0.0
        %669 = vmatpush1.msra.mxu0 0.0
        %670 = vmatprep.subr.mxu0 0.0
        %671 = vmatpush1.msra.mxu0 0.0
        %672 = vmatprep.subr.mxu0 0.0
        %673 = vmatpush1.msra.mxu0 0.0
        %674 = vmatprep.subr.mxu0 0.0
        %675 = vmatpush1.msra.mxu0 0.0
        %676 = vmatprep.subr.mxu0 0.0
        %677 = vmatpush1.msra.mxu0 0.0
        %678 = vmatprep.subr.mxu0 0.0
        %679 = vmatpush1.msra.mxu0 0.0
        %680 = vmatprep.subr.mxu0 0.0
        %681 = vmatpush1.msra.mxu0 0.0
        %682 = vmatprep.subr.mxu0 0.0
        %683 = vmatpush1.msra.mxu0 0.0
        %684 = vmatprep.subr.mxu0 0.0
        %685 = vmatpush1.msra.mxu0 0.0
        %686 = vmatprep.subr.mxu0 0.0
        %687 = vmatpush1.msra.mxu0 0.0
        %688 = vmatprep.subr.mxu0 0.0
        %689 = vmatpush1.msra.mxu0 0.0
        %690 = vmatprep.subr.mxu0 0.0
        %691 = vmatpush1.msra.mxu0 0.0
        %692 = vmatprep.subr.mxu0 0.0
        %693 = vmatpush1.msra.mxu0 0.0
        %694 = vmatprep.subr.mxu0 0.0
        %695 = vmatpush1.msra.mxu0 0.0
        %696 = vmatprep.subr.mxu0 0.0
        %697 = vmatpush1.msra.mxu0 0.0
        %698 = vmatprep.subr.mxu0 0.0
        %699 = vmatpush1.msra.mxu0 0.0
        %700 = vmatprep.subr.mxu0 0.0
        %701 = vmatpush1.msra.mxu0 0.0
        %702 = vmatprep.subr.mxu0 0.0
        %703 = vmatpush1.msra.mxu0 0.0
        %704 = vmatprep.subr.mxu0 0.0
        %705 = vmatpush1.msra.mxu0 0.0
        %706 = vmatprep.subr.mxu0 0.0
        %707 = vmatpush1.msra.mxu0 0.0
        %708 = vmatprep.subr.mxu0 0.0
        %709 = vmatpush1.msra.mxu0 0.0
        %710 = vmatprep.subr.mxu0 0.0
        %711 = vmatpush1.msra.mxu0 0.0
        %712 = vmatprep.subr.mxu0 0.0
        %713 = vmatpush1.msra.mxu0 0.0
        %714 = vmatprep.subr.mxu0 0.0
        %715 = vmatpush1.msra.mxu0 0.0
        %716 = vmatprep.subr.mxu0 0.0
        %717 = vmatpush1.msra.mxu0 0.0
        %718 = vmatprep.subr.mxu0 0.0
        %719 = vmatpush1.msra.mxu0 0.0
        %720 = vmatprep.subr.mxu0 0.0
        %721 = vmatpush1.msra.mxu0 0.0
        %722 = vmatprep.subr.mxu0 0.0
        %723 = vmatpush1.msra.mxu0 0.0
        %724 = vmatprep.subr.mxu0 0.0
        %725 = vmatpush1.msra.mxu0 0.0
        %726 = vmatprep.subr.mxu0 0.0
        %727 = vmatpush1.msra.mxu0 0.0
        %728 = vmatprep.mubr.f32.mxu0 0.0
        %729 = vmatmul.mubr.f32.gmra.mrb[0].mxu0 %v282
        %v730 = vpop.f32.mrb[0].mxu0
        %v731 = vadd.f32 %v278, %v730
        %v732 = vpop.f32.mrb[0].mxu0
        %v733 = vadd.f32 %v279, %v732
        %734 = vdwg.mxu0
        %v735 = vtanh.pop %v660
        %v736 = vtanh.pop %v662
        %v737 = vtanh.pop %v731
        %v738 = vtanh.pop %v733
        %v739 = vmul.f32 %v430, %v735
        %v740 = vmul.f32 %v430, %v736
        %v741 = vmul.f32 %v430, %v737
        %v742 = vmul.f32 %v430, %v738
        %v743 = vadd.f32 %v269, %v739
        %v744 = vadd.f32 %v270, %v740
        %v745 = vadd.f32 %v271, %v741
        %v746 = vadd.f32 %v272, %v742
        %747 = vmatprep.subr.mxu0 %v744
        %748 = vmatpush1.msra.mxu0 %v743
        %749 = vmatprep.subr.mxu0 0.0
        %750 = vmatpush1.msra.mxu0 0.0
        %751 = vmatprep.subr.mxu0 0.0
        %752 = vmatpush1.msra.mxu0 0.0
        %753 = vmatprep.subr.mxu0 0.0
        %754 = vmatpush1.msra.mxu0 0.0
        %755 = vmatprep.subr.mxu0 0.0
        %756 = vmatpush1.msra.mxu0 0.0
        %757 = vmatprep.subr.mxu0 0.0
        %758 = vmatpush1.msra.mxu0 0.0
        %759 = vmatprep.subr.mxu0 0.0
        %760 = vmatpush1.msra.mxu0 0.0
        %761 = vmatprep.subr.mxu0 0.0
        %762 = vmatpush1.msra.mxu0 0.0
        %763 = vmatprep.subr.mxu0 0.0
        %764 = vmatpush1.msra.mxu0 0.0
        %765 = vmatprep.subr.mxu0 0.0
        %766 = vmatpush1.msra.mxu0 0.0
        %767 = vmatprep.subr.mxu0 0.0
        %768 = vmatpush1.msra.mxu0 0.0
        %769 = vmatprep.subr.mxu0 0.0
        %770 = vmatpush1.msra.mxu0 0.0
        %771 = vmatprep.subr.mxu0 0.0
        %772 = vmatpush1.msra.mxu0 0.0
        %773 = vmatprep.subr.mxu0 0.0
        %774 = vmatpush1.msra.mxu0 0.0
        %775 = vmatprep.subr.mxu0 0.0
        %776 = vmatpush1.msra.mxu0 0.0
        %777 = vmatprep.subr.mxu0 0.0
        %778 = vmatpush1.msra.mxu0 0.0
        %779 = vmatprep.subr.mxu0 0.0
        %780 = vmatpush1.msra.mxu0 0.0
        %781 = vmatprep.subr.mxu0 0.0
        %782 = vmatpush1.msra.mxu0 0.0
        %783 = vmatprep.subr.mxu0 0.0
        %784 = vmatpush1.msra.mxu0 0.0
        %785 = vmatprep.subr.mxu0 0.0
        %786 = vmatpush1.msra.mxu0 0.0
        %787 = vmatprep.subr.mxu0 0.0
        %788 = vmatpush1.msra.mxu0 0.0
        %789 = vmatprep.subr.mxu0 0.0
        %790 = vmatpush1.msra.mxu0 0.0
        %791 = vmatprep.subr.mxu0 0.0
        %792 = vmatpush1.msra.mxu0 0.0
        %793 = vmatprep.subr.mxu0 0.0
        %794 = vmatpush1.msra.mxu0 0.0
        %795 = vmatprep.subr.mxu0 0.0
        %796 = vmatpush1.msra.mxu0 0.0
        %797 = vmatprep.subr.mxu0 0.0
        %798 = vmatpush1.msra.mxu0 0.0
        %799 = vmatprep.subr.mxu0 0.0
        %800 = vmatpush1.msra.mxu0 0.0
        %801 = vmatprep.subr.mxu0 0.0
        %802 = vmatpush1.msra.mxu0 0.0
        %803 = vmatprep.subr.mxu0 0.0
        %804 = vmatpush1.msra.mxu0 0.0
        %805 = vmatprep.subr.mxu0 0.0
        %806 = vmatpush1.msra.mxu0 0.0
        %807 = vmatprep.subr.mxu0 0.0
        %808 = vmatpush1.msra.mxu0 0.0
        %809 = vmatprep.subr.mxu0 0.0
        %810 = vmatpush1.msra.mxu0 0.0
        %811 = vmatprep.mubr.f32.mxu0 0.0
        %812 = vmatmul.mubr.f32.gmra.mrb[0].mxu0 %v282
        %v813 = vpop.f32.mrb[0].mxu0
        %v814 = vadd.f32 %v276, %v813
        %v815 = vpop.f32.mrb[0].mxu0
        %v816 = vadd.f32 %v277, %v815
        %817 = vdwg.mxu0
        %818 = vmatprep.subr.mxu0 %v746
        %819 = vmatpush1.msra.mxu0 %v745
        %820 = vmatprep.subr.mxu0 0.0
        %821 = vmatpush1.msra.mxu0 0.0
        %822 = vmatprep.subr.mxu0 0.0
        %823 = vmatpush1.msra.mxu0 0.0
        %824 = vmatprep.subr.mxu0 0.0
        %825 = vmatpush1.msra.mxu0 0.0
        %826 = vmatprep.subr.mxu0 0.0
        %827 = vmatpush1.msra.mxu0 0.0
        %828 = vmatprep.subr.mxu0 0.0
        %829 = vmatpush1.msra.mxu0 0.0
        %830 = vmatprep.subr.mxu0 0.0
        %831 = vmatpush1.msra.mxu0 0.0
        %832 = vmatprep.subr.mxu0 0.0
        %833 = vmatpush1.msra.mxu0 0.0
        %834 = vmatprep.subr.mxu0 0.0
        %835 = vmatpush1.msra.mxu0 0.0
        %836 = vmatprep.subr.mxu0 0.0
        %837 = vmatpush1.msra.mxu0 0.0
        %838 = vmatprep.subr.mxu0 0.0
        %839 = vmatpush1.msra.mxu0 0.0
        %840 = vmatprep.subr.mxu0 0.0
        %841 = vmatpush1.msra.mxu0 0.0
        %842 = vmatprep.subr.mxu0 0.0
        %843 = vmatpush1.msra.mxu0 0.0
        %844 = vmatprep.subr.mxu0 0.0
        %845 = vmatpush1.msra.mxu0 0.0
        %846 = vmatprep.subr.mxu0 0.0
        %847 = vmatpush1.msra.mxu0 0.0
        %848 = vmatprep.subr.mxu0 0.0
        %849 = vmatpush1.msra.mxu0 0.0
        %850 = vmatprep.subr.mxu0 0.0
        %851 = vmatpush1.msra.mxu0 0.0
        %852 = vmatprep.subr.mxu0 0.0
        %853 = vmatpush1.msra.mxu0 0.0
        %854 = vmatprep.subr.mxu0 0.0
        %855 = vmatpush1.msra.mxu0 0.0
        %856 = vmatprep.subr.mxu0 0.0
        %857 = vmatpush1.msra.mxu0 0.0
        %858 = vmatprep.subr.mxu0 0.0
        %859 = vmatpush1.msra.mxu0 0.0
        %860 = vmatprep.subr.mxu0 0.0
        %861 = vmatpush1.msra.mxu0 0.0
        %862 = vmatprep.subr.mxu0 0.0
        %863 = vmatpush1.msra.mxu0 0.0
        %864 = vmatprep.subr.mxu0 0.0
        %865 = vmatpush1.msra.mxu0 0.0
        %866 = vmatprep.subr.mxu0 0.0
        %867 = vmatpush1.msra.mxu0 0.0
        %868 = vmatprep.subr.mxu0 0.0
        %869 = vmatpush1.msra.mxu0 0.0
        %870 = vmatprep.subr.mxu0 0.0
        %871 = vmatpush1.msra.mxu0 0.0
        %872 = vmatprep.subr.mxu0 0.0
        %873 = vmatpush1.msra.mxu0 0.0
        %874 = vmatprep.subr.mxu0 0.0
        %875 = vmatpush1.msra.mxu0 0.0
        %876 = vmatprep.subr.mxu0 0.0
        %877 = vmatpush1.msra.mxu0 0.0
        %878 = vmatprep.subr.mxu0 0.0
        %879 = vmatpush1.msra.mxu0 0.0
        %880 = vmatprep.subr.mxu0 0.0
        %881 = vmatpush1.msra.mxu0 0.0
        %882 = vmatprep.mubr.f32.mxu0 0.0
        %883 = vmatmul.mubr.f32.gmra.mrb[0].mxu0 %v282
        %v884 = vpop.f32.mrb[0].mxu0
        %v885 = vadd.f32 %v278, %v884
        %v886 = vpop.f32.mrb[0].mxu0
        %v887 = vadd.f32 %v279, %v886
        %888 = vdwg.mxu0
        %v889 = vtanh.pop %v814
        %v890 = vtanh.pop %v816
        %v891 = vtanh.pop %v885
        %v892 = vtanh.pop %v887
        %v893 = vmul.f32 %v430, %v889
        %v894 = vmul.f32 %v430, %v890
        %v895 = vmul.f32 %v430, %v891
        %v896 = vmul.f32 %v430, %v892
        %v897 = vadd.f32 %v269, %v893
        %v898 = vadd.f32 %v270, %v894
        %v899 = vadd.f32 %v271, %v895
        %v900 = vadd.f32 %v272, %v896
        %s901 = scalar_select %p257, 1, 0
        %v902 = vstv %s901
        %vm903 = vcmp.eq.s32.totalorder %v902, 1
        %v904 = vsel %vm903, %v269, %v897
        %v905 = vsel %vm903, %v270, %v898
        %v906 = vsel %vm903, %v271, %v899
        %v907 = vsel %vm903, %v272, %v900
        %908 = vst [vmem:[%s243] sm:$0xff] %v904
        %909 = vst [vmem:[%s243 + $0x8] sm:$0xff] %v905
        %s910 = scalar_lea.vmem %s243, 16 [#allocation10]
        %911 = vst [vmem:[%s910] sm:$0xff] %v906
        %912 = vst [vmem:[%s910 + $0x8] sm:$0xff] %v907
        %s913 = sadd.s32 %s273, 1
        %s914 = sld [smem:[#allocation4 + %s913]]
        %v915 = vstv %s914
        %v916 = vadd.f32 %v253, %v915
        %v917 = vadd.f32 %v254, %v915
        %v918 = vadd.f32 %v255, %v915
        %v919 = vadd.f32 %v256, %v915
        %920 = vmatprep.subr.mxu0 %v905
        %921 = vmatpush1.msra.mxu0 %v904
        %922 = vmatprep.subr.mxu0 0.0
        %923 = vmatpush1.msra.mxu0 0.0
        %924 = vmatprep.subr.mxu0 0.0
        %925 = vmatpush1.msra.mxu0 0.0
        %926 = vmatprep.subr.mxu0 0.0
        %927 = vmatpush1.msra.mxu0 0.0
        %928 = vmatprep.subr.mxu0 0.0
        %929 = vmatpush1.msra.mxu0 0.0
        %930 = vmatprep.subr.mxu0 0.0
        %931 = vmatpush1.msra.mxu0 0.0
        %932 = vmatprep.subr.mxu0 0.0
        %933 = vmatpush1.msra.mxu0 0.0
        %934 = vmatprep.subr.mxu0 0.0
        %935 = vmatpush1.msra.mxu0 0.0
        %936 = vmatprep.subr.mxu0 0.0
        %937 = vmatpush1.msra.mxu0 0.0
        %938 = vmatprep.subr.mxu0 0.0
        %939 = vmatpush1.msra.mxu0 0.0
        %940 = vmatprep.subr.mxu0 0.0
        %941 = vmatpush1.msra.mxu0 0.0
        %942 = vmatprep.subr.mxu0 0.0
        %943 = vmatpush1.msra.mxu0 0.0
        %944 = vmatprep.subr.mxu0 0.0
        %945 = vmatpush1.msra.mxu0 0.0
        %946 = vmatprep.subr.mxu0 0.0
        %947 = vmatpush1.msra.mxu0 0.0
        %948 = vmatprep.subr.mxu0 0.0
        %949 = vmatpush1.msra.mxu0 0.0
        %950 = vmatprep.subr.mxu0 0.0
        %951 = vmatpush1.msra.mxu0 0.0
        %952 = vmatprep.subr.mxu0 0.0
        %953 = vmatpush1.msra.mxu0 0.0
        %954 = vmatprep.subr.mxu0 0.0
        %955 = vmatpush1.msra.mxu0 0.0
        %956 = vmatprep.subr.mxu0 0.0
        %957 = vmatpush1.msra.mxu0 0.0
        %958 = vmatprep.subr.mxu0 0.0
        %959 = vmatpush1.msra.mxu0 0.0
        %960 = vmatprep.subr.mxu0 0.0
        %961 = vmatpush1.msra.mxu0 0.0
        %962 = vmatprep.subr.mxu0 0.0
        %963 = vmatpush1.msra.mxu0 0.0
        %964 = vmatprep.subr.mxu0 0.0
        %965 = vmatpush1.msra.mxu0 0.0
        %966 = vmatprep.subr.mxu0 0.0
        %967 = vmatpush1.msra.mxu0 0.0
        %968 = vmatprep.subr.mxu0 0.0
        %969 = vmatpush1.msra.mxu0 0.0
        %970 = vmatprep.subr.mxu0 0.0
        %971 = vmatpush1.msra.mxu0 0.0
        %972 = vmatprep.subr.mxu0 0.0
        %973 = vmatpush1.msra.mxu0 0.0
        %974 = vmatprep.subr.mxu0 0.0
        %975 = vmatpush1.msra.mxu0 0.0
        %976 = vmatprep.subr.mxu0 0.0
        %977 = vmatpush1.msra.mxu0 0.0
        %978 = vmatprep.subr.mxu0 0.0
        %979 = vmatpush1.msra.mxu0 0.0
        %980 = vmatprep.subr.mxu0 0.0
        %981 = vmatpush1.msra.mxu0 0.0
        %982 = vmatprep.subr.mxu0 0.0
        %983 = vmatpush1.msra.mxu0 0.0
        %984 = vmatprep.mubr.f32.mxu0 0.0
        %985 = vmatmul.mubr.f32.gmra.mrb[0].mxu0 %v282
        %v986 = vpop.f32.mrb[0].mxu0
        %v987 = vadd.f32 %v916, %v986
        %v988 = vpop.f32.mrb[0].mxu0
        %v989 = vadd.f32 %v917, %v988
        %990 = vdwg.mxu0
        %991 = vmatprep.subr.mxu0 %v907
        %992 = vmatpush1.msra.mxu0 %v906
        %993 = vmatprep.subr.mxu0 0.0
        %994 = vmatpush1.msra.mxu0 0.0
        %995 = vmatprep.subr.mxu0 0.0
        %996 = vmatpush1.msra.mxu0 0.0
        %997 = vmatprep.subr.mxu0 0.0
        %998 = vmatpush1.msra.mxu0 0.0
        %999 = vmatprep.subr.mxu0 0.0
        %1000 = vmatpush1.msra.mxu0 0.0
        %1001 = vmatprep.subr.mxu0 0.0
        %1002 = vmatpush1.msra.mxu0 0.0
        %1003 = vmatprep.subr.mxu0 0.0
        %1004 = vmatpush1.msra.mxu0 0.0
        %1005 = vmatprep.subr.mxu0 0.0
        %1006 = vmatpush1.msra.mxu0 0.0
        %1007 = vmatprep.subr.mxu0 0.0
        %1008 = vmatpush1.msra.mxu0 0.0
        %1009 = vmatprep.subr.mxu0 0.0
        %1010 = vmatpush1.msra.mxu0 0.0
        %1011 = vmatprep.subr.mxu0 0.0
        %1012 = vmatpush1.msra.mxu0 0.0
        %1013 = vmatprep.subr.mxu0 0.0
        %1014 = vmatpush1.msra.mxu0 0.0
        %1015 = vmatprep.subr.mxu0 0.0
        %1016 = vmatpush1.msra.mxu0 0.0
        %1017 = vmatprep.subr.mxu0 0.0
        %1018 = vmatpush1.msra.mxu0 0.0
        %1019 = vmatprep.subr.mxu0 0.0
        %1020 = vmatpush1.msra.mxu0 0.0
        %1021 = vmatprep.subr.mxu0 0.0
        %1022 = vmatpush1.msra.mxu0 0.0
        %1023 = vmatprep.subr.mxu0 0.0
        %1024 = vmatpush1.msra.mxu0 0.0
        %1025 = vmatprep.subr.mxu0 0.0
        %1026 = vmatpush1.msra.mxu0 0.0
        %1027 = vmatprep.subr.mxu0 0.0
        %1028 = vmatpush1.msra.mxu0 0.0
        %1029 = vmatprep.subr.mxu0 0.0
        %1030 = vmatpush1.msra.mxu0 0.0
        %1031 = vmatprep.subr.mxu0 0.0
        %1032 = vmatpush1.msra.mxu0 0.0
        %1033 = vmatprep.subr.mxu0 0.0
        %1034 = vmatpush1.msra.mxu0 0.0
        %1035 = vmatprep.subr.mxu0 0.0
        %1036 = vmatpush1.msra.mxu0 0.0
        %1037 = vmatprep.subr.mxu0 0.0
        %1038 = vmatpush1.msra.mxu0 0.0
        %1039 = vmatprep.subr.mxu0 0.0
        %1040 = vmatpush1.msra.mxu0 0.0
        %1041 = vmatprep.subr.mxu0 0.0
        %1042 = vmatpush1.msra.mxu0 0.0
        %1043 = vmatprep.subr.mxu0 0.0
        %1044 = vmatpush1.msra.mxu0 0.0
        %1045 = vmatprep.subr.mxu0 0.0
        %1046 = vmatpush1.msra.mxu0 0.0
        %1047 = vmatprep.subr.mxu0 0.0
        %1048 = vmatpush1.msra.mxu0 0.0
        %1049 = vmatprep.subr.mxu0 0.0
        %1050 = vmatpush1.msra.mxu0 0.0
        %1051 = vmatprep.subr.mxu0 0.0
        %1052 = vmatpush1.msra.mxu0 0.0
        %1053 = vmatprep.subr.mxu0 0.0
        %1054 = vmatpush1.msra.mxu0 0.0
        %1055 = vmatprep.mubr.f32.mxu0 0.0
        %1056 = vmatmul.mubr.f32.gmra.mrb[0].mxu0 %v282
        %v1057 = vpop.f32.mrb[0].mxu0
        %v1058 = vadd.f32 %v918, %v1057
        %v1059 = vpop.f32.mrb[0].mxu0
        %v1060 = vadd.f32 %v919, %v1059
        %1061 = vdwg.mxu0
        %v1062 = vtanh.pop %v987
        %v1063 = vtanh.pop %v989
        %v1064 = vtanh.pop %v1058
        %v1065 = vtanh.pop %v1060
        %v1066 = vmul.f32 %v430, %v1062
        %v1067 = vmul.f32 %v430, %v1063
        %v1068 = vmul.f32 %v430, %v1064
        %v1069 = vmul.f32 %v430, %v1065
        %v1070 = vadd.f32 %v904, %v1066
        %v1071 = vadd.f32 %v905, %v1067
        %v1072 = vadd.f32 %v906, %v1068
        %v1073 = vadd.f32 %v907, %v1069
        %1074 = vmatprep.subr.mxu0 %v1071
        %1075 = vmatpush1.msra.mxu0 %v1070
        %1076 = vmatprep.subr.mxu0 0.0
        %1077 = vmatpush1.msra.mxu0 0.0
        %1078 = vmatprep.subr.mxu0 0.0
        %1079 = vmatpush1.msra.mxu0 0.0
        %1080 = vmatprep.subr.mxu0 0.0
        %1081 = vmatpush1.msra.mxu0 0.0
        %1082 = vmatprep.subr.mxu0 0.0
        %1083 = vmatpush1.msra.mxu0 0.0
        %1084 = vmatprep.subr.mxu0 0.0
        %1085 = vmatpush1.msra.mxu0 0.0
        %1086 = vmatprep.subr.mxu0 0.0
        %1087 = vmatpush1.msra.mxu0 0.0
        %1088 = vmatprep.subr.mxu0 0.0
        %1089 = vmatpush1.msra.mxu0 0.0
        %1090 = vmatprep.subr.mxu0 0.0
        %1091 = vmatpush1.msra.mxu0 0.0
        %1092 = vmatprep.subr.mxu0 0.0
        %1093 = vmatpush1.msra.mxu0 0.0
        %1094 = vmatprep.subr.mxu0 0.0
        %1095 = vmatpush1.msra.mxu0 0.0
        %1096 = vmatprep.subr.mxu0 0.0
        %1097 = vmatpush1.msra.mxu0 0.0
        %1098 = vmatprep.subr.mxu0 0.0
        %1099 = vmatpush1.msra.mxu0 0.0
        %1100 = vmatprep.subr.mxu0 0.0
        %1101 = vmatpush1.msra.mxu0 0.0
        %1102 = vmatprep.subr.mxu0 0.0
        %1103 = vmatpush1.msra.mxu0 0.0
        %1104 = vmatprep.subr.mxu0 0.0
        %1105 = vmatpush1.msra.mxu0 0.0
        %1106 = vmatprep.subr.mxu0 0.0
        %1107 = vmatpush1.msra.mxu0 0.0
        %1108 = vmatprep.subr.mxu0 0.0
        %1109 = vmatpush1.msra.mxu0 0.0
        %1110 = vmatprep.subr.mxu0 0.0
        %1111 = vmatpush1.msra.mxu0 0.0
        %1112 = vmatprep.subr.mxu0 0.0
        %1113 = vmatpush1.msra.mxu0 0.0
        %1114 = vmatprep.subr.mxu0 0.0
        %1115 = vmatpush1.msra.mxu0 0.0
        %1116 = vmatprep.subr.mxu0 0.0
        %1117 = vmatpush1.msra.mxu0 0.0
        %1118 = vmatprep.subr.mxu0 0.0
        %1119 = vmatpush1.msra.mxu0 0.0
        %1120 = vmatprep.subr.mxu0 0.0
        %1121 = vmatpush1.msra.mxu0 0.0
        %1122 = vmatprep.subr.mxu0 0.0
        %1123 = vmatpush1.msra.mxu0 0.0
        %1124 = vmatprep.subr.mxu0 0.0
        %1125 = vmatpush1.msra.mxu0 0.0
        %1126 = vmatprep.subr.mxu0 0.0
        %1127 = vmatpush1.msra.mxu0 0.0
        %1128 = vmatprep.subr.mxu0 0.0
        %1129 = vmatpush1.msra.mxu0 0.0
        %1130 = vmatprep.subr.mxu0 0.0
        %1131 = vmatpush1.msra.mxu0 0.0
        %1132 = vmatprep.subr.mxu0 0.0
        %1133 = vmatpush1.msra.mxu0 0.0
        %1134 = vmatprep.subr.mxu0 0.0
        %1135 = vmatpush1.msra.mxu0 0.0
        %1136 = vmatprep.subr.mxu0 0.0
        %1137 = vmatpush1.msra.mxu0 0.0
        %1138 = vmatprep.mubr.f32.mxu0 0.0
        %1139 = vmatmul.mubr.f32.gmra.mrb[0].mxu0 %v282
        %v1140 = vpop.f32.mrb[0].mxu0
        %v1141 = vadd.f32 %v916, %v1140
        %v1142 = vpop.f32.mrb[0].mxu0
        %v1143 = vadd.f32 %v917, %v1142
        %1144 = vdwg.mxu0
        %1145 = vmatprep.subr.mxu0 %v1073
        %1146 = vmatpush1.msra.mxu0 %v1072
        %1147 = vmatprep.subr.mxu0 0.0
        %1148 = vmatpush1.msra.mxu0 0.0
        %1149 = vmatprep.subr.mxu0 0.0
        %1150 = vmatpush1.msra.mxu0 0.0
        %1151 = vmatprep.subr.mxu0 0.0
        %1152 = vmatpush1.msra.mxu0 0.0
        %1153 = vmatprep.subr.mxu0 0.0
        %1154 = vmatpush1.msra.mxu0 0.0
        %1155 = vmatprep.subr.mxu0 0.0
        %1156 = vmatpush1.msra.mxu0 0.0
        %1157 = vmatprep.subr.mxu0 0.0
        %1158 = vmatpush1.msra.mxu0 0.0
        %1159 = vmatprep.subr.mxu0 0.0
        %1160 = vmatpush1.msra.mxu0 0.0
        %1161 = vmatprep.subr.mxu0 0.0
        %1162 = vmatpush1.msra.mxu0 0.0
        %1163 = vmatprep.subr.mxu0 0.0
        %1164 = vmatpush1.msra.mxu0 0.0
        %1165 = vmatprep.subr.mxu0 0.0
        %1166 = vmatpush1.msra.mxu0 0.0
        %1167 = vmatprep.subr.mxu0 0.0
        %1168 = vmatpush1.msra.mxu0 0.0
        %1169 = vmatprep.subr.mxu0 0.0
        %1170 = vmatpush1.msra.mxu0 0.0
        %1171 = vmatprep.subr.mxu0 0.0
        %1172 = vmatpush1.msra.mxu0 0.0
        %1173 = vmatprep.subr.mxu0 0.0
        %1174 = vmatpush1.msra.mxu0 0.0
        %1175 = vmatprep.subr.mxu0 0.0
        %1176 = vmatpush1.msra.mxu0 0.0
        %1177 = vmatprep.subr.mxu0 0.0
        %1178 = vmatpush1.msra.mxu0 0.0
        %1179 = vmatprep.subr.mxu0 0.0
        %1180 = vmatpush1.msra.mxu0 0.0
        %1181 = vmatprep.subr.mxu0 0.0
        %1182 = vmatpush1.msra.mxu0 0.0
        %1183 = vmatprep.subr.mxu0 0.0
        %1184 = vmatpush1.msra.mxu0 0.0
        %1185 = vmatprep.subr.mxu0 0.0
        %1186 = vmatpush1.msra.mxu0 0.0
        %1187 = vmatprep.subr.mxu0 0.0
        %1188 = vmatpush1.msra.mxu0 0.0
        %1189 = vmatprep.subr.mxu0 0.0
        %1190 = vmatpush1.msra.mxu0 0.0
        %1191 = vmatprep.subr.mxu0 0.0
        %1192 = vmatpush1.msra.mxu0 0.0
        %1193 = vmatprep.subr.mxu0 0.0
        %1194 = vmatpush1.msra.mxu0 0.0
        %1195 = vmatprep.subr.mxu0 0.0
        %1196 = vmatpush1.msra.mxu0 0.0
        %1197 = vmatprep.subr.mxu0 0.0
        %1198 = vmatpush1.msra.mxu0 0.0
        %1199 = vmatprep.subr.mxu0 0.0
        %1200 = vmatpush1.msra.mxu0 0.0
        %1201 = vmatprep.subr.mxu0 0.0
        %1202 = vmatpush1.msra.mxu0 0.0
        %1203 = vmatprep.subr.mxu0 0.0
        %1204 = vmatpush1.msra.mxu0 0.0
        %1205 = vmatprep.subr.mxu0 0.0
        %1206 = vmatpush1.msra.mxu0 0.0
        %1207 = vmatprep.subr.mxu0 0.0
        %1208 = vmatpush1.msra.mxu0 0.0
        %1209 = vmatprep.mubr.f32.mxu0 0.0
        %1210 = vmatmul.mubr.f32.gmra.mrb[0].mxu0 %v282
        %v1211 = vpop.f32.mrb[0].mxu0
        %v1212 = vadd.f32 %v918, %v1211
        %v1213 = vpop.f32.mrb[0].mxu0
        %v1214 = vadd.f32 %v919, %v1213
        %1215 = vdwg.mxu0
        %v1216 = vtanh.pop %v1141
        %v1217 = vtanh.pop %v1143
        %v1218 = vtanh.pop %v1212
        %v1219 = vtanh.pop %v1214
        %v1220 = vmul.f32 %v430, %v1216
        %v1221 = vmul.f32 %v430, %v1217
        %v1222 = vmul.f32 %v430, %v1218
        %v1223 = vmul.f32 %v430, %v1219
        %v1224 = vadd.f32 %v904, %v1220
        %v1225 = vadd.f32 %v905, %v1221
        %v1226 = vadd.f32 %v906, %v1222
        %v1227 = vadd.f32 %v907, %v1223
        %1228 = vmatprep.subr.mxu0 %v1225
        %1229 = vmatpush1.msra.mxu0 %v1224
        %1230 = vmatprep.subr.mxu0 0.0
        %1231 = vmatpush1.msra.mxu0 0.0
        %1232 = vmatprep.subr.mxu0 0.0
        %1233 = vmatpush1.msra.mxu0 0.0
        %1234 = vmatprep.subr.mxu0 0.0
        %1235 = vmatpush1.msra.mxu0 0.0
        %1236 = vmatprep.subr.mxu0 0.0
        %1237 = vmatpush1.msra.mxu0 0.0
        %1238 = vmatprep.subr.mxu0 0.0
        %1239 = vmatpush1.msra.mxu0 0.0
        %1240 = vmatprep.subr.mxu0 0.0
        %1241 = vmatpush1.msra.mxu0 0.0
        %1242 = vmatprep.subr.mxu0 0.0
        %1243 = vmatpush1.msra.mxu0 0.0
        %1244 = vmatprep.subr.mxu0 0.0
        %1245 = vmatpush1.msra.mxu0 0.0
        %1246 = vmatprep.subr.mxu0 0.0
        %1247 = vmatpush1.msra.mxu0 0.0
        %1248 = vmatprep.subr.mxu0 0.0
        %1249 = vmatpush1.msra.mxu0 0.0
        %1250 = vmatprep.subr.mxu0 0.0
        %1251 = vmatpush1.msra.mxu0 0.0
        %1252 = vmatprep.subr.mxu0 0.0
        %1253 = vmatpush1.msra.mxu0 0.0
        %1254 = vmatprep.subr.mxu0 0.0
        %1255 = vmatpush1.msra.mxu0 0.0
        %1256 = vmatprep.subr.mxu0 0.0
        %1257 = vmatpush1.msra.mxu0 0.0
        %1258 = vmatprep.subr.mxu0 0.0
        %1259 = vmatpush1.msra.mxu0 0.0
        %1260 = vmatprep.subr.mxu0 0.0
        %1261 = vmatpush1.msra.mxu0 0.0
        %1262 = vmatprep.subr.mxu0 0.0
        %1263 = vmatpush1.msra.mxu0 0.0
        %1264 = vmatprep.subr.mxu0 0.0
        %1265 = vmatpush1.msra.mxu0 0.0
        %1266 = vmatprep.subr.mxu0 0.0
        %1267 = vmatpush1.msra.mxu0 0.0
        %1268 = vmatprep.subr.mxu0 0.0
        %1269 = vmatpush1.msra.mxu0 0.0
        %1270 = vmatprep.subr.mxu0 0.0
        %1271 = vmatpush1.msra.mxu0 0.0
        %1272 = vmatprep.subr.mxu0 0.0
        %1273 = vmatpush1.msra.mxu0 0.0
        %1274 = vmatprep.subr.mxu0 0.0
        %1275 = vmatpush1.msra.mxu0 0.0
        %1276 = vmatprep.subr.mxu0 0.0
        %1277 = vmatpush1.msra.mxu0 0.0
        %1278 = vmatprep.subr.mxu0 0.0
        %1279 = vmatpush1.msra.mxu0 0.0
        %1280 = vmatprep.subr.mxu0 0.0
        %1281 = vmatpush1.msra.mxu0 0.0
        %1282 = vmatprep.subr.mxu0 0.0
        %1283 = vmatpush1.msra.mxu0 0.0
        %1284 = vmatprep.subr.mxu0 0.0
        %1285 = vmatpush1.msra.mxu0 0.0
        %1286 = vmatprep.subr.mxu0 0.0
        %1287 = vmatpush1.msra.mxu0 0.0
        %1288 = vmatprep.subr.mxu0 0.0
        %1289 = vmatpush1.msra.mxu0 0.0
        %1290 = vmatprep.subr.mxu0 0.0
        %1291 = vmatpush1.msra.mxu0 0.0
        %1292 = vmatprep.mubr.f32.mxu0 0.0
        %1293 = vmatmul.mubr.f32.gmra.mrb[0].mxu0 %v282
        %v1294 = vpop.f32.mrb[0].mxu0
        %v1295 = vadd.f32 %v916, %v1294
        %v1296 = vpop.f32.mrb[0].mxu0
        %v1297 = vadd.f32 %v917, %v1296
        %1298 = vdwg.mxu0
        %1299 = vmatprep.subr.mxu0 %v1227
        %1300 = vmatpush1.msra.mxu0 %v1226
        %1301 = vmatprep.subr.mxu0 0.0
        %1302 = vmatpush1.msra.mxu0 0.0
        %1303 = vmatprep.subr.mxu0 0.0
        %1304 = vmatpush1.msra.mxu0 0.0
        %1305 = vmatprep.subr.mxu0 0.0
        %1306 = vmatpush1.msra.mxu0 0.0
        %1307 = vmatprep.subr.mxu0 0.0
        %1308 = vmatpush1.msra.mxu0 0.0
        %1309 = vmatprep.subr.mxu0 0.0
        %1310 = vmatpush1.msra.mxu0 0.0
        %1311 = vmatprep.subr.mxu0 0.0
        %1312 = vmatpush1.msra.mxu0 0.0
        %1313 = vmatprep.subr.mxu0 0.0
        %1314 = vmatpush1.msra.mxu0 0.0
        %1315 = vmatprep.subr.mxu0 0.0
        %1316 = vmatpush1.msra.mxu0 0.0
        %1317 = vmatprep.subr.mxu0 0.0
        %1318 = vmatpush1.msra.mxu0 0.0
        %1319 = vmatprep.subr.mxu0 0.0
        %1320 = vmatpush1.msra.mxu0 0.0
        %1321 = vmatprep.subr.mxu0 0.0
        %1322 = vmatpush1.msra.mxu0 0.0
        %1323 = vmatprep.subr.mxu0 0.0
        %1324 = vmatpush1.msra.mxu0 0.0
        %1325 = vmatprep.subr.mxu0 0.0
        %1326 = vmatpush1.msra.mxu0 0.0
        %1327 = vmatprep.subr.mxu0 0.0
        %1328 = vmatpush1.msra.mxu0 0.0
        %1329 = vmatprep.subr.mxu0 0.0
        %1330 = vmatpush1.msra.mxu0 0.0
        %1331 = vmatprep.subr.mxu0 0.0
        %1332 = vmatpush1.msra.mxu0 0.0
        %1333 = vmatprep.subr.mxu0 0.0
        %1334 = vmatpush1.msra.mxu0 0.0
        %1335 = vmatprep.subr.mxu0 0.0
        %1336 = vmatpush1.msra.mxu0 0.0
        %1337 = vmatprep.subr.mxu0 0.0
        %1338 = vmatpush1.msra.mxu0 0.0
        %1339 = vmatprep.subr.mxu0 0.0
        %1340 = vmatpush1.msra.mxu0 0.0
        %1341 = vmatprep.subr.mxu0 0.0
        %1342 = vmatpush1.msra.mxu0 0.0
        %1343 = vmatprep.subr.mxu0 0.0
        %1344 = vmatpush1.msra.mxu0 0.0
        %1345 = vmatprep.subr.mxu0 0.0
        %1346 = vmatpush1.msra.mxu0 0.0
        %1347 = vmatprep.subr.mxu0 0.0
        %1348 = vmatpush1.msra.mxu0 0.0
        %1349 = vmatprep.subr.mxu0 0.0
        %1350 = vmatpush1.msra.mxu0 0.0
        %1351 = vmatprep.subr.mxu0 0.0
        %1352 = vmatpush1.msra.mxu0 0.0
        %1353 = vmatprep.subr.mxu0 0.0
        %1354 = vmatpush1.msra.mxu0 0.0
        %1355 = vmatprep.subr.mxu0 0.0
        %1356 = vmatpush1.msra.mxu0 0.0
        %1357 = vmatprep.subr.mxu0 0.0
        %1358 = vmatpush1.msra.mxu0 0.0
        %1359 = vmatprep.subr.mxu0 0.0
        %1360 = vmatpush1.msra.mxu0 0.0
        %1361 = vmatprep.subr.mxu0 0.0
        %1362 = vmatpush1.msra.mxu0 0.0
        %1363 = vmatprep.mubr.f32.mxu0 0.0
        %1364 = vmatmul.mubr.f32.gmra.mrb[0].mxu0 %v282
        %v1365 = vpop.f32.mrb[0].mxu0
        %v1366 = vadd.f32 %v918, %v1365
        %v1367 = vpop.f32.mrb[0].mxu0
        %v1368 = vadd.f32 %v919, %v1367
        %1369 = vdwg.mxu0
        %v1370 = vtanh.pop %v1295
        %v1371 = vtanh.pop %v1297
        %v1372 = vtanh.pop %v1366
        %v1373 = vtanh.pop %v1368
        %v1374 = vmul.f32 %v430, %v1370
        %v1375 = vmul.f32 %v430, %v1371
        %v1376 = vmul.f32 %v430, %v1372
        %v1377 = vmul.f32 %v430, %v1373
        %v1378 = vadd.f32 %v904, %v1374
        %v1379 = vadd.f32 %v905, %v1375
        %v1380 = vadd.f32 %v906, %v1376
        %v1381 = vadd.f32 %v907, %v1377
        %1382 = vmatprep.subr.mxu0 %v1379
        %1383 = vmatpush1.msra.mxu0 %v1378
        %1384 = vmatprep.subr.mxu0 0.0
        %1385 = vmatpush1.msra.mxu0 0.0
        %1386 = vmatprep.subr.mxu0 0.0
        %1387 = vmatpush1.msra.mxu0 0.0
        %1388 = vmatprep.subr.mxu0 0.0
        %1389 = vmatpush1.msra.mxu0 0.0
        %1390 = vmatprep.subr.mxu0 0.0
        %1391 = vmatpush1.msra.mxu0 0.0
        %1392 = vmatprep.subr.mxu0 0.0
        %1393 = vmatpush1.msra.mxu0 0.0
        %1394 = vmatprep.subr.mxu0 0.0
        %1395 = vmatpush1.msra.mxu0 0.0
        %1396 = vmatprep.subr.mxu0 0.0
        %1397 = vmatpush1.msra.mxu0 0.0
        %1398 = vmatprep.subr.mxu0 0.0
        %1399 = vmatpush1.msra.mxu0 0.0
        %1400 = vmatprep.subr.mxu0 0.0
        %1401 = vmatpush1.msra.mxu0 0.0
        %1402 = vmatprep.subr.mxu0 0.0
        %1403 = vmatpush1.msra.mxu0 0.0
        %1404 = vmatprep.subr.mxu0 0.0
        %1405 = vmatpush1.msra.mxu0 0.0
        %1406 = vmatprep.subr.mxu0 0.0
        %1407 = vmatpush1.msra.mxu0 0.0
        %1408 = vmatprep.subr.mxu0 0.0
        %1409 = vmatpush1.msra.mxu0 0.0
        %1410 = vmatprep.subr.mxu0 0.0
        %1411 = vmatpush1.msra.mxu0 0.0
        %1412 = vmatprep.subr.mxu0 0.0
        %1413 = vmatpush1.msra.mxu0 0.0
        %1414 = vmatprep.subr.mxu0 0.0
        %1415 = vmatpush1.msra.mxu0 0.0
        %1416 = vmatprep.subr.mxu0 0.0
        %1417 = vmatpush1.msra.mxu0 0.0
        %1418 = vmatprep.subr.mxu0 0.0
        %1419 = vmatpush1.msra.mxu0 0.0
        %1420 = vmatprep.subr.mxu0 0.0
        %1421 = vmatpush1.msra.mxu0 0.0
        %1422 = vmatprep.subr.mxu0 0.0
        %1423 = vmatpush1.msra.mxu0 0.0
        %1424 = vmatprep.subr.mxu0 0.0
        %1425 = vmatpush1.msra.mxu0 0.0
        %1426 = vmatprep.subr.mxu0 0.0
        %1427 = vmatpush1.msra.mxu0 0.0
        %1428 = vmatprep.subr.mxu0 0.0
        %1429 = vmatpush1.msra.mxu0 0.0
        %1430 = vmatprep.subr.mxu0 0.0
        %1431 = vmatpush1.msra.mxu0 0.0
        %1432 = vmatprep.subr.mxu0 0.0
        %1433 = vmatpush1.msra.mxu0 0.0
        %1434 = vmatprep.subr.mxu0 0.0
        %1435 = vmatpush1.msra.mxu0 0.0
        %1436 = vmatprep.subr.mxu0 0.0
        %1437 = vmatpush1.msra.mxu0 0.0
        %1438 = vmatprep.subr.mxu0 0.0
        %1439 = vmatpush1.msra.mxu0 0.0
        %1440 = vmatprep.subr.mxu0 0.0
        %1441 = vmatpush1.msra.mxu0 0.0
        %1442 = vmatprep.subr.mxu0 0.0
        %1443 = vmatpush1.msra.mxu0 0.0
        %1444 = vmatprep.subr.mxu0 0.0
        %1445 = vmatpush1.msra.mxu0 0.0
        %1446 = vmatprep.mubr.f32.mxu0 0.0
        %1447 = vmatmul.mubr.f32.gmra.mrb[0].mxu0 %v282
        %v1448 = vpop.f32.mrb[0].mxu0
        %v1449 = vadd.f32 %v916, %v1448
        %v1450 = vpop.f32.mrb[0].mxu0
        %v1451 = vadd.f32 %v917, %v1450
        %1452 = vdwg.mxu0
        %1453 = vmatprep.subr.mxu0 %v1381
        %1454 = vmatpush1.msra.mxu0 %v1380
        %1455 = vmatprep.subr.mxu0 0.0
        %1456 = vmatpush1.msra.mxu0 0.0
        %1457 = vmatprep.subr.mxu0 0.0
        %1458 = vmatpush1.msra.mxu0 0.0
        %1459 = vmatprep.subr.mxu0 0.0
        %1460 = vmatpush1.msra.mxu0 0.0
        %1461 = vmatprep.subr.mxu0 0.0
        %1462 = vmatpush1.msra.mxu0 0.0
        %1463 = vmatprep.subr.mxu0 0.0
        %1464 = vmatpush1.msra.mxu0 0.0
        %1465 = vmatprep.subr.mxu0 0.0
        %1466 = vmatpush1.msra.mxu0 0.0
        %1467 = vmatprep.subr.mxu0 0.0
        %1468 = vmatpush1.msra.mxu0 0.0
        %1469 = vmatprep.subr.mxu0 0.0
        %1470 = vmatpush1.msra.mxu0 0.0
        %1471 = vmatprep.subr.mxu0 0.0
        %1472 = vmatpush1.msra.mxu0 0.0
        %1473 = vmatprep.subr.mxu0 0.0
        %1474 = vmatpush1.msra.mxu0 0.0
        %1475 = vmatprep.subr.mxu0 0.0
        %1476 = vmatpush1.msra.mxu0 0.0
        %1477 = vmatprep.subr.mxu0 0.0
        %1478 = vmatpush1.msra.mxu0 0.0
        %1479 = vmatprep.subr.mxu0 0.0
        %1480 = vmatpush1.msra.mxu0 0.0
        %1481 = vmatprep.subr.mxu0 0.0
        %1482 = vmatpush1.msra.mxu0 0.0
        %1483 = vmatprep.subr.mxu0 0.0
        %1484 = vmatpush1.msra.mxu0 0.0
        %1485 = vmatprep.subr.mxu0 0.0
        %1486 = vmatpush1.msra.mxu0 0.0
        %1487 = vmatprep.subr.mxu0 0.0
        %1488 = vmatpush1.msra.mxu0 0.0
        %1489 = vmatprep.subr.mxu0 0.0
        %1490 = vmatpush1.msra.mxu0 0.0
        %1491 = vmatprep.subr.mxu0 0.0
        %1492 = vmatpush1.msra.mxu0 0.0
        %1493 = vmatprep.subr.mxu0 0.0
        %1494 = vmatpush1.msra.mxu0 0.0
        %1495 = vmatprep.subr.mxu0 0.0
        %1496 = vmatpush1.msra.mxu0 0.0
        %1497 = vmatprep.subr.mxu0 0.0
        %1498 = vmatpush1.msra.mxu0 0.0
        %1499 = vmatprep.subr.mxu0 0.0
        %1500 = vmatpush1.msra.mxu0 0.0
        %1501 = vmatprep.subr.mxu0 0.0
        %1502 = vmatpush1.msra.mxu0 0.0
        %1503 = vmatprep.subr.mxu0 0.0
        %1504 = vmatpush1.msra.mxu0 0.0
        %1505 = vmatprep.subr.mxu0 0.0
        %1506 = vmatpush1.msra.mxu0 0.0
        %1507 = vmatprep.subr.mxu0 0.0
        %1508 = vmatpush1.msra.mxu0 0.0
        %1509 = vmatprep.subr.mxu0 0.0
        %1510 = vmatpush1.msra.mxu0 0.0
        %1511 = vmatprep.subr.mxu0 0.0
        %1512 = vmatpush1.msra.mxu0 0.0
        %1513 = vmatprep.subr.mxu0 0.0
        %1514 = vmatpush1.msra.mxu0 0.0
        %1515 = vmatprep.subr.mxu0 0.0
        %1516 = vmatpush1.msra.mxu0 0.0
        %1517 = vmatprep.mubr.f32.mxu0 0.0
        %1518 = vmatmul.mubr.f32.gmra.mrb[0].mxu0 %v282
        %v1519 = vpop.f32.mrb[0].mxu0
        %v1520 = vadd.f32 %v918, %v1519
        %v1521 = vpop.f32.mrb[0].mxu0
        %v1522 = vadd.f32 %v919, %v1521
        %1523 = vdwg.mxu0
        %v1524 = vtanh.pop %v1449
        %v1525 = vtanh.pop %v1451
        %v1526 = vtanh.pop %v1520
        %v1527 = vtanh.pop %v1522
        %v1528 = vmul.f32 %v430, %v1524
        %v1529 = vmul.f32 %v430, %v1525
        %v1530 = vmul.f32 %v430, %v1526
        %v1531 = vmul.f32 %v430, %v1527
        %v1532 = vadd.f32 %v904, %v1528
        %v1533 = vadd.f32 %v905, %v1529
        %v1534 = vadd.f32 %v906, %v1530
        %v1535 = vadd.f32 %v907, %v1531
        %s1536 = scalar_lea.vmem %s243, 32 [#allocation10]
        %1537 = vst [vmem:[%s1536] sm:$0xff] %v1532
        %1538 = vst [vmem:[%s1536 + $0x8] sm:$0xff] %v1533
        %s1539 = scalar_lea.vmem %s243, 48 [#allocation10]
        %1540 = vst [vmem:[%s1539] sm:$0xff] %v1534
        %1541 = vst [vmem:[%s1539 + $0x8] sm:$0xff] %v1535
        %s1542 = sadd.s32 %s273, 2
        %s1543 = sld [smem:[#allocation4 + %s1542]]
        %v1544 = vstv %s1543
        %v1545 = vadd.f32 %v253, %v1544
        %v1546 = vadd.f32 %v254, %v1544
        %v1547 = vadd.f32 %v255, %v1544
        %v1548 = vadd.f32 %v256, %v1544
        %1549 = vmatprep.subr.mxu0 %v1533
        %1550 = vmatpush1.msra.mxu0 %v1532
        %1551 = vmatprep.subr.mxu0 0.0
        %1552 = vmatpush1.msra.mxu0 0.0
        %1553 = vmatprep.subr.mxu0 0.0
        %1554 = vmatpush1.msra.mxu0 0.0
        %1555 = vmatprep.subr.mxu0 0.0
        %1556 = vmatpush1.msra.mxu0 0.0
        %1557 = vmatprep.subr.mxu0 0.0
        %1558 = vmatpush1.msra.mxu0 0.0
        %1559 = vmatprep.subr.mxu0 0.0
        %1560 = vmatpush1.msra.mxu0 0.0
        %1561 = vmatprep.subr.mxu0 0.0
        %1562 = vmatpush1.msra.mxu0 0.0
        %1563 = vmatprep.subr.mxu0 0.0
        %1564 = vmatpush1.msra.mxu0 0.0
        %1565 = vmatprep.subr.mxu0 0.0
        %1566 = vmatpush1.msra.mxu0 0.0
        %1567 = vmatprep.subr.mxu0 0.0
        %1568 = vmatpush1.msra.mxu0 0.0
        %1569 = vmatprep.subr.mxu0 0.0
        %1570 = vmatpush1.msra.mxu0 0.0
        %1571 = vmatprep.subr.mxu0 0.0
        %1572 = vmatpush1.msra.mxu0 0.0
        %1573 = vmatprep.subr.mxu0 0.0
        %1574 = vmatpush1.msra.mxu0 0.0
        %1575 = vmatprep.subr.mxu0 0.0
        %1576 = vmatpush1.msra.mxu0 0.0
        %1577 = vmatprep.subr.mxu0 0.0
        %1578 = vmatpush1.msra.mxu0 0.0
        %1579 = vmatprep.subr.mxu0 0.0
        %1580 = vmatpush1.msra.mxu0 0.0
        %1581 = vmatprep.subr.mxu0 0.0
        %1582 = vmatpush1.msra.mxu0 0.0
        %1583 = vmatprep.subr.mxu0 0.0
        %1584 = vmatpush1.msra.mxu0 0.0
        %1585 = vmatprep.subr.mxu0 0.0
        %1586 = vmatpush1.msra.mxu0 0.0
        %1587 = vmatprep.subr.mxu0 0.0
        %1588 = vmatpush1.msra.mxu0 0.0
        %1589 = vmatprep.subr.mxu0 0.0
        %1590 = vmatpush1.msra.mxu0 0.0
        %1591 = vmatprep.subr.mxu0 0.0
        %1592 = vmatpush1.msra.mxu0 0.0
        %1593 = vmatprep.subr.mxu0 0.0
        %1594 = vmatpush1.msra.mxu0 0.0
        %1595 = vmatprep.subr.mxu0 0.0
        %1596 = vmatpush1.msra.mxu0 0.0
        %1597 = vmatprep.subr.mxu0 0.0
        %1598 = vmatpush1.msra.mxu0 0.0
        %1599 = vmatprep.subr.mxu0 0.0
        %1600 = vmatpush1.msra.mxu0 0.0
        %1601 = vmatprep.subr.mxu0 0.0
        %1602 = vmatpush1.msra.mxu0 0.0
        %1603 = vmatprep.subr.mxu0 0.0
        %1604 = vmatpush1.msra.mxu0 0.0
        %1605 = vmatprep.subr.mxu0 0.0
        %1606 = vmatpush1.msra.mxu0 0.0
        %1607 = vmatprep.subr.mxu0 0.0
        %1608 = vmatpush1.msra.mxu0 0.0
        %1609 = vmatprep.subr.mxu0 0.0
        %1610 = vmatpush1.msra.mxu0 0.0
        %1611 = vmatprep.subr.mxu0 0.0
        %1612 = vmatpush1.msra.mxu0 0.0
        %1613 = vmatprep.mubr.f32.mxu0 0.0
        %1614 = vmatmul.mubr.f32.gmra.mrb[0].mxu0 %v282
        %v1615 = vpop.f32.mrb[0].mxu0
        %v1616 = vadd.f32 %v1545, %v1615
        %v1617 = vpop.f32.mrb[0].mxu0
        %v1618 = vadd.f32 %v1546, %v1617
        %1619 = vdwg.mxu0
        %1620 = vmatprep.subr.mxu0 %v1535
        %1621 = vmatpush1.msra.mxu0 %v1534
        %1622 = vmatprep.subr.mxu0 0.0
        %1623 = vmatpush1.msra.mxu0 0.0
        %1624 = vmatprep.subr.mxu0 0.0
        %1625 = vmatpush1.msra.mxu0 0.0
        %1626 = vmatprep.subr.mxu0 0.0
        %1627 = vmatpush1.msra.mxu0 0.0
        %1628 = vmatprep.subr.mxu0 0.0
        %1629 = vmatpush1.msra.mxu0 0.0
        %1630 = vmatprep.subr.mxu0 0.0
        %1631 = vmatpush1.msra.mxu0 0.0
        %1632 = vmatprep.subr.mxu0 0.0
        %1633 = vmatpush1.msra.mxu0 0.0
        %1634 = vmatprep.subr.mxu0 0.0
        %1635 = vmatpush1.msra.mxu0 0.0
        %1636 = vmatprep.subr.mxu0 0.0
        %1637 = vmatpush1.msra.mxu0 0.0
        %1638 = vmatprep.subr.mxu0 0.0
        %1639 = vmatpush1.msra.mxu0 0.0
        %1640 = vmatprep.subr.mxu0 0.0
        %1641 = vmatpush1.msra.mxu0 0.0
        %1642 = vmatprep.subr.mxu0 0.0
        %1643 = vmatpush1.msra.mxu0 0.0
        %1644 = vmatprep.subr.mxu0 0.0
        %1645 = vmatpush1.msra.mxu0 0.0
        %1646 = vmatprep.subr.mxu0 0.0
        %1647 = vmatpush1.msra.mxu0 0.0
        %1648 = vmatprep.subr.mxu0 0.0
        %1649 = vmatpush1.msra.mxu0 0.0
        %1650 = vmatprep.subr.mxu0 0.0
        %1651 = vmatpush1.msra.mxu0 0.0
        %1652 = vmatprep.subr.mxu0 0.0
        %1653 = vmatpush1.msra.mxu0 0.0
        %1654 = vmatprep.subr.mxu0 0.0
        %1655 = vmatpush1.msra.mxu0 0.0
        %1656 = vmatprep.subr.mxu0 0.0
        %1657 = vmatpush1.msra.mxu0 0.0
        %1658 = vmatprep.subr.mxu0 0.0
        %1659 = vmatpush1.msra.mxu0 0.0
        %1660 = vmatprep.subr.mxu0 0.0
        %1661 = vmatpush1.msra.mxu0 0.0
        %1662 = vmatprep.subr.mxu0 0.0
        %1663 = vmatpush1.msra.mxu0 0.0
        %1664 = vmatprep.subr.mxu0 0.0
        %1665 = vmatpush1.msra.mxu0 0.0
        %1666 = vmatprep.subr.mxu0 0.0
        %1667 = vmatpush1.msra.mxu0 0.0
        %1668 = vmatprep.subr.mxu0 0.0
        %1669 = vmatpush1.msra.mxu0 0.0
        %1670 = vmatprep.subr.mxu0 0.0
        %1671 = vmatpush1.msra.mxu0 0.0
        %1672 = vmatprep.subr.mxu0 0.0
        %1673 = vmatpush1.msra.mxu0 0.0
        %1674 = vmatprep.subr.mxu0 0.0
        %1675 = vmatpush1.msra.mxu0 0.0
        %1676 = vmatprep.subr.mxu0 0.0
        %1677 = vmatpush1.msra.mxu0 0.0
        %1678 = vmatprep.subr.mxu0 0.0
        %1679 = vmatpush1.msra.mxu0 0.0
        %1680 = vmatprep.subr.mxu0 0.0
        %1681 = vmatpush1.msra.mxu0 0.0
        %1682 = vmatprep.subr.mxu0 0.0
        %1683 = vmatpush1.msra.mxu0 0.0
        %1684 = vmatprep.mubr.f32.mxu0 0.0
        %1685 = vmatmul.mubr.f32.gmra.mrb[0].mxu0 %v282
        %v1686 = vpop.f32.mrb[0].mxu0
        %v1687 = vadd.f32 %v1547, %v1686
        %v1688 = vpop.f32.mrb[0].mxu0
        %v1689 = vadd.f32 %v1548, %v1688
        %1690 = vdwg.mxu0
        %v1691 = vtanh.pop %v1616
        %v1692 = vtanh.pop %v1618
        %v1693 = vtanh.pop %v1687
        %v1694 = vtanh.pop %v1689
        %v1695 = vmul.f32 %v430, %v1691
        %v1696 = vmul.f32 %v430, %v1692
        %v1697 = vmul.f32 %v430, %v1693
        %v1698 = vmul.f32 %v430, %v1694
        %v1699 = vadd.f32 %v1532, %v1695
        %v1700 = vadd.f32 %v1533, %v1696
        %v1701 = vadd.f32 %v1534, %v1697
        %v1702 = vadd.f32 %v1535, %v1698
        %1703 = vmatprep.subr.mxu0 %v1700
        %1704 = vmatpush1.msra.mxu0 %v1699
        %1705 = vmatprep.subr.mxu0 0.0
        %1706 = vmatpush1.msra.mxu0 0.0
        %1707 = vmatprep.subr.mxu0 0.0
        %1708 = vmatpush1.msra.mxu0 0.0
        %1709 = vmatprep.subr.mxu0 0.0
        %1710 = vmatpush1.msra.mxu0 0.0
        %1711 = vmatprep.subr.mxu0 0.0
        %1712 = vmatpush1.msra.mxu0 0.0
        %1713 = vmatprep.subr.mxu0 0.0
        %1714 = vmatpush1.msra.mxu0 0.0
        %1715 = vmatprep.subr.mxu0 0.0
        %1716 = vmatpush1.msra.mxu0 0.0
        %1717 = vmatprep.subr.mxu0 0.0
        %1718 = vmatpush1.msra.mxu0 0.0
        %1719 = vmatprep.subr.mxu0 0.0
        %1720 = vmatpush1.msra.mxu0 0.0
        %1721 = vmatprep.subr.mxu0 0.0
        %1722 = vmatpush1.msra.mxu0 0.0
        %1723 = vmatprep.subr.mxu0 0.0
        %1724 = vmatpush1.msra.mxu0 0.0
        %1725 = vmatprep.subr.mxu0 0.0
        %1726 = vmatpush1.msra.mxu0 0.0
        %1727 = vmatprep.subr.mxu0 0.0
        %1728 = vmatpush1.msra.mxu0 0.0
        %1729 = vmatprep.subr.mxu0 0.0
        %1730 = vmatpush1.msra.mxu0 0.0
        %1731 = vmatprep.subr.mxu0 0.0
        %1732 = vmatpush1.msra.mxu0 0.0
        %1733 = vmatprep.subr.mxu0 0.0
        %1734 = vmatpush1.msra.mxu0 0.0
        %1735 = vmatprep.subr.mxu0 0.0
        %1736 = vmatpush1.msra.mxu0 0.0
        %1737 = vmatprep.subr.mxu0 0.0
        %1738 = vmatpush1.msra.mxu0 0.0
        %1739 = vmatprep.subr.mxu0 0.0
        %1740 = vmatpush1.msra.mxu0 0.0
        %1741 = vmatprep.subr.mxu0 0.0
        %1742 = vmatpush1.msra.mxu0 0.0
        %1743 = vmatprep.subr.mxu0 0.0
        %1744 = vmatpush1.msra.mxu0 0.0
        %1745 = vmatprep.subr.mxu0 0.0
        %1746 = vmatpush1.msra.mxu0 0.0
        %1747 = vmatprep.subr.mxu0 0.0
        %1748 = vmatpush1.msra.mxu0 0.0
        %1749 = vmatprep.subr.mxu0 0.0
        %1750 = vmatpush1.msra.mxu0 0.0
        %1751 = vmatprep.subr.mxu0 0.0
        %1752 = vmatpush1.msra.mxu0 0.0
        %1753 = vmatprep.subr.mxu0 0.0
        %1754 = vmatpush1.msra.mxu0 0.0
        %1755 = vmatprep.subr.mxu0 0.0
        %1756 = vmatpush1.msra.mxu0 0.0
        %1757 = vmatprep.subr.mxu0 0.0
        %1758 = vmatpush1.msra.mxu0 0.0
        %1759 = vmatprep.subr.mxu0 0.0
        %1760 = vmatpush1.msra.mxu0 0.0
        %1761 = vmatprep.subr.mxu0 0.0
        %1762 = vmatpush1.msra.mxu0 0.0
        %1763 = vmatprep.subr.mxu0 0.0
        %1764 = vmatpush1.msra.mxu0 0.0
        %1765 = vmatprep.subr.mxu0 0.0
        %1766 = vmatpush1.msra.mxu0 0.0
        %1767 = vmatprep.mubr.f32.mxu0 0.0
        %1768 = vmatmul.mubr.f32.gmra.mrb[0].mxu0 %v282
        %v1769 = vpop.f32.mrb[0].mxu0
        %v1770 = vadd.f32 %v1545, %v1769
        %v1771 = vpop.f32.mrb[0].mxu0
        %v1772 = vadd.f32 %v1546, %v1771
        %1773 = vdwg.mxu0
        %1774 = vmatprep.subr.mxu0 %v1702
        %1775 = vmatpush1.msra.mxu0 %v1701
        %1776 = vmatprep.subr.mxu0 0.0
        %1777 = vmatpush1.msra.mxu0 0.0
        %1778 = vmatprep.subr.mxu0 0.0
        %1779 = vmatpush1.msra.mxu0 0.0
        %1780 = vmatprep.subr.mxu0 0.0
        %1781 = vmatpush1.msra.mxu0 0.0
        %1782 = vmatprep.subr.mxu0 0.0
        %1783 = vmatpush1.msra.mxu0 0.0
        %1784 = vmatprep.subr.mxu0 0.0
        %1785 = vmatpush1.msra.mxu0 0.0
        %1786 = vmatprep.subr.mxu0 0.0
        %1787 = vmatpush1.msra.mxu0 0.0
        %1788 = vmatprep.subr.mxu0 0.0
        %1789 = vmatpush1.msra.mxu0 0.0
        %1790 = vmatprep.subr.mxu0 0.0
        %1791 = vmatpush1.msra.mxu0 0.0
        %1792 = vmatprep.subr.mxu0 0.0
        %1793 = vmatpush1.msra.mxu0 0.0
        %1794 = vmatprep.subr.mxu0 0.0
        %1795 = vmatpush1.msra.mxu0 0.0
        %1796 = vmatprep.subr.mxu0 0.0
        %1797 = vmatpush1.msra.mxu0 0.0
        %1798 = vmatprep.subr.mxu0 0.0
        %1799 = vmatpush1.msra.mxu0 0.0
        %1800 = vmatprep.subr.mxu0 0.0
        %1801 = vmatpush1.msra.mxu0 0.0
        %1802 = vmatprep.subr.mxu0 0.0
        %1803 = vmatpush1.msra.mxu0 0.0
        %1804 = vmatprep.subr.mxu0 0.0
        %1805 = vmatpush1.msra.mxu0 0.0
        %1806 = vmatprep.subr.mxu0 0.0
        %1807 = vmatpush1.msra.mxu0 0.0
        %1808 = vmatprep.subr.mxu0 0.0
        %1809 = vmatpush1.msra.mxu0 0.0
        %1810 = vmatprep.subr.mxu0 0.0
        %1811 = vmatpush1.msra.mxu0 0.0
        %1812 = vmatprep.subr.mxu0 0.0
        %1813 = vmatpush1.msra.mxu0 0.0
        %1814 = vmatprep.subr.mxu0 0.0
        %1815 = vmatpush1.msra.mxu0 0.0
        %1816 = vmatprep.subr.mxu0 0.0
        %1817 = vmatpush1.msra.mxu0 0.0
        %1818 = vmatprep.subr.mxu0 0.0
        %1819 = vmatpush1.msra.mxu0 0.0
        %1820 = vmatprep.subr.mxu0 0.0
        %1821 = vmatpush1.msra.mxu0 0.0
        %1822 = vmatprep.subr.mxu0 0.0
        %1823 = vmatpush1.msra.mxu0 0.0
        %1824 = vmatprep.subr.mxu0 0.0
        %1825 = vmatpush1.msra.mxu0 0.0
        %1826 = vmatprep.subr.mxu0 0.0
        %1827 = vmatpush1.msra.mxu0 0.0
        %1828 = vmatprep.subr.mxu0 0.0
        %1829 = vmatpush1.msra.mxu0 0.0
        %1830 = vmatprep.subr.mxu0 0.0
        %1831 = vmatpush1.msra.mxu0 0.0
        %1832 = vmatprep.subr.mxu0 0.0
        %1833 = vmatpush1.msra.mxu0 0.0
        %1834 = vmatprep.subr.mxu0 0.0
        %1835 = vmatpush1.msra.mxu0 0.0
        %1836 = vmatprep.subr.mxu0 0.0
        %1837 = vmatpush1.msra.mxu0 0.0
        %1838 = vmatprep.mubr.f32.mxu0 0.0
        %1839 = vmatmul.mubr.f32.gmra.mrb[0].mxu0 %v282
        %v1840 = vpop.f32.mrb[0].mxu0
        %v1841 = vadd.f32 %v1547, %v1840
        %v1842 = vpop.f32.mrb[0].mxu0
        %v1843 = vadd.f32 %v1548, %v1842
        %1844 = vdwg.mxu0
        %v1845 = vtanh.pop %v1770
        %v1846 = vtanh.pop %v1772
        %v1847 = vtanh.pop %v1841
        %v1848 = vtanh.pop %v1843
        %v1849 = vmul.f32 %v430, %v1845
        %v1850 = vmul.f32 %v430, %v1846
        %v1851 = vmul.f32 %v430, %v1847
        %v1852 = vmul.f32 %v430, %v1848
        %v1853 = vadd.f32 %v1532, %v1849
        %v1854 = vadd.f32 %v1533, %v1850
        %v1855 = vadd.f32 %v1534, %v1851
        %v1856 = vadd.f32 %v1535, %v1852
        %1857 = vmatprep.subr.mxu0 %v1854
        %1858 = vmatpush1.msra.mxu0 %v1853
        %1859 = vmatprep.subr.mxu0 0.0
        %1860 = vmatpush1.msra.mxu0 0.0
        %1861 = vmatprep.subr.mxu0 0.0
        %1862 = vmatpush1.msra.mxu0 0.0
        %1863 = vmatprep.subr.mxu0 0.0
        %1864 = vmatpush1.msra.mxu0 0.0
        %1865 = vmatprep.subr.mxu0 0.0
        %1866 = vmatpush1.msra.mxu0 0.0
        %1867 = vmatprep.subr.mxu0 0.0
        %1868 = vmatpush1.msra.mxu0 0.0
        %1869 = vmatprep.subr.mxu0 0.0
        %1870 = vmatpush1.msra.mxu0 0.0
        %1871 = vmatprep.subr.mxu0 0.0
        %1872 = vmatpush1.msra.mxu0 0.0
        %1873 = vmatprep.subr.mxu0 0.0
        %1874 = vmatpush1.msra.mxu0 0.0
        %1875 = vmatprep.subr.mxu0 0.0
        %1876 = vmatpush1.msra.mxu0 0.0
        %1877 = vmatprep.subr.mxu0 0.0
        %1878 = vmatpush1.msra.mxu0 0.0
        %1879 = vmatprep.subr.mxu0 0.0
        %1880 = vmatpush1.msra.mxu0 0.0
        %1881 = vmatprep.subr.mxu0 0.0
        %1882 = vmatpush1.msra.mxu0 0.0
        %1883 = vmatprep.subr.mxu0 0.0
        %1884 = vmatpush1.msra.mxu0 0.0
        %1885 = vmatprep.subr.mxu0 0.0
        %1886 = vmatpush1.msra.mxu0 0.0
        %1887 = vmatprep.subr.mxu0 0.0
        %1888 = vmatpush1.msra.mxu0 0.0
        %1889 = vmatprep.subr.mxu0 0.0
        %1890 = vmatpush1.msra.mxu0 0.0
        %1891 = vmatprep.subr.mxu0 0.0
        %1892 = vmatpush1.msra.mxu0 0.0
        %1893 = vmatprep.subr.mxu0 0.0
        %1894 = vmatpush1.msra.mxu0 0.0
        %1895 = vmatprep.subr.mxu0 0.0
        %1896 = vmatpush1.msra.mxu0 0.0
        %1897 = vmatprep.subr.mxu0 0.0
        %1898 = vmatpush1.msra.mxu0 0.0
        %1899 = vmatprep.subr.mxu0 0.0
        %1900 = vmatpush1.msra.mxu0 0.0
        %1901 = vmatprep.subr.mxu0 0.0
        %1902 = vmatpush1.msra.mxu0 0.0
        %1903 = vmatprep.subr.mxu0 0.0
        %1904 = vmatpush1.msra.mxu0 0.0
        %1905 = vmatprep.subr.mxu0 0.0
        %1906 = vmatpush1.msra.mxu0 0.0
        %1907 = vmatprep.subr.mxu0 0.0
        %1908 = vmatpush1.msra.mxu0 0.0
        %1909 = vmatprep.subr.mxu0 0.0
        %1910 = vmatpush1.msra.mxu0 0.0
        %1911 = vmatprep.subr.mxu0 0.0
        %1912 = vmatpush1.msra.mxu0 0.0
        %1913 = vmatprep.subr.mxu0 0.0
        %1914 = vmatpush1.msra.mxu0 0.0
        %1915 = vmatprep.subr.mxu0 0.0
        %1916 = vmatpush1.msra.mxu0 0.0
        %1917 = vmatprep.subr.mxu0 0.0
        %1918 = vmatpush1.msra.mxu0 0.0
        %1919 = vmatprep.subr.mxu0 0.0
        %1920 = vmatpush1.msra.mxu0 0.0
        %1921 = vmatprep.mubr.f32.mxu0 0.0
        %1922 = vmatmul.mubr.f32.gmra.mrb[0].mxu0 %v282
        %v1923 = vpop.f32.mrb[0].mxu0
        %v1924 = vadd.f32 %v1545, %v1923
        %v1925 = vpop.f32.mrb[0].mxu0
        %v1926 = vadd.f32 %v1546, %v1925
        %1927 = vdwg.mxu0
        %1928 = vmatprep.subr.mxu0 %v1856
        %1929 = vmatpush1.msra.mxu0 %v1855
        %1930 = vmatprep.subr.mxu0 0.0
        %1931 = vmatpush1.msra.mxu0 0.0
        %1932 = vmatprep.subr.mxu0 0.0
        %1933 = vmatpush1.msra.mxu0 0.0
        %1934 = vmatprep.subr.mxu0 0.0
        %1935 = vmatpush1.msra.mxu0 0.0
        %1936 = vmatprep.subr.mxu0 0.0
        %1937 = vmatpush1.msra.mxu0 0.0
        %1938 = vmatprep.subr.mxu0 0.0
        %1939 = vmatpush1.msra.mxu0 0.0
        %1940 = vmatprep.subr.mxu0 0.0
        %1941 = vmatpush1.msra.mxu0 0.0
        %1942 = vmatprep.subr.mxu0 0.0
        %1943 = vmatpush1.msra.mxu0 0.0
        %1944 = vmatprep.subr.mxu0 0.0
        %1945 = vmatpush1.msra.mxu0 0.0
        %1946 = vmatprep.subr.mxu0 0.0
        %1947 = vmatpush1.msra.mxu0 0.0
        %1948 = vmatprep.subr.mxu0 0.0
        %1949 = vmatpush1.msra.mxu0 0.0
        %1950 = vmatprep.subr.mxu0 0.0
        %1951 = vmatpush1.msra.mxu0 0.0
        %1952 = vmatprep.subr.mxu0 0.0
        %1953 = vmatpush1.msra.mxu0 0.0
        %1954 = vmatprep.subr.mxu0 0.0
        %1955 = vmatpush1.msra.mxu0 0.0
        %1956 = vmatprep.subr.mxu0 0.0
        %1957 = vmatpush1.msra.mxu0 0.0
        %1958 = vmatprep.subr.mxu0 0.0
        %1959 = vmatpush1.msra.mxu0 0.0
        %1960 = vmatprep.subr.mxu0 0.0
        %1961 = vmatpush1.msra.mxu0 0.0
        %1962 = vmatprep.subr.mxu0 0.0
        %1963 = vmatpush1.msra.mxu0 0.0
        %1964 = vmatprep.subr.mxu0 0.0
        %1965 = vmatpush1.msra.mxu0 0.0
        %1966 = vmatprep.subr.mxu0 0.0
        %1967 = vmatpush1.msra.mxu0 0.0
        %1968 = vmatprep.subr.mxu0 0.0
        %1969 = vmatpush1.msra.mxu0 0.0
        %1970 = vmatprep.subr.mxu0 0.0
        %1971 = vmatpush1.msra.mxu0 0.0
        %1972 = vmatprep.subr.mxu0 0.0
        %1973 = vmatpush1.msra.mxu0 0.0
        %1974 = vmatprep.subr.mxu0 0.0
        %1975 = vmatpush1.msra.mxu0 0.0
        %1976 = vmatprep.subr.mxu0 0.0
        %1977 = vmatpush1.msra.mxu0 0.0
        %1978 = vmatprep.subr.mxu0 0.0
        %1979 = vmatpush1.msra.mxu0 0.0
        %1980 = vmatprep.subr.mxu0 0.0
        %1981 = vmatpush1.msra.mxu0 0.0
        %1982 = vmatprep.subr.mxu0 0.0
        %1983 = vmatpush1.msra.mxu0 0.0
        %1984 = vmatprep.subr.mxu0 0.0
        %1985 = vmatpush1.msra.mxu0 0.0
        %1986 = vmatprep.subr.mxu0 0.0
        %1987 = vmatpush1.msra.mxu0 0.0
        %1988 = vmatprep.subr.mxu0 0.0
        %1989 = vmatpush1.msra.mxu0 0.0
        %1990 = vmatprep.subr.mxu0 0.0
        %1991 = vmatpush1.msra.mxu0 0.0
        %1992 = vmatprep.mubr.f32.mxu0 0.0
        %1993 = vmatmul.mubr.f32.gmra.mrb[0].mxu0 %v282
        %v1994 = vpop.f32.mrb[0].mxu0
        %v1995 = vadd.f32 %v1547, %v1994
        %v1996 = vpop.f32.mrb[0].mxu0
        %v1997 = vadd.f32 %v1548, %v1996
        %1998 = vdwg.mxu0
        %v1999 = vtanh.pop %v1924
        %v2000 = vtanh.pop %v1926
        %v2001 = vtanh.pop %v1995
        %v2002 = vtanh.pop %v1997
        %v2003 = vmul.f32 %v430, %v1999
        %v2004 = vmul.f32 %v430, %v2000
        %v2005 = vmul.f32 %v430, %v2001
        %v2006 = vmul.f32 %v430, %v2002
        %v2007 = vadd.f32 %v1532, %v2003
        %v2008 = vadd.f32 %v1533, %v2004
        %v2009 = vadd.f32 %v1534, %v2005
        %v2010 = vadd.f32 %v1535, %v2006
        %2011 = vmatprep.subr.mxu0 %v2008
        %2012 = vmatpush1.msra.mxu0 %v2007
        %2013 = vmatprep.subr.mxu0 0.0
        %2014 = vmatpush1.msra.mxu0 0.0
        %2015 = vmatprep.subr.mxu0 0.0
        %2016 = vmatpush1.msra.mxu0 0.0
        %2017 = vmatprep.subr.mxu0 0.0
        %2018 = vmatpush1.msra.mxu0 0.0
        %2019 = vmatprep.subr.mxu0 0.0
        %2020 = vmatpush1.msra.mxu0 0.0
        %2021 = vmatprep.subr.mxu0 0.0
        %2022 = vmatpush1.msra.mxu0 0.0
        %2023 = vmatprep.subr.mxu0 0.0
        %2024 = vmatpush1.msra.mxu0 0.0
        %2025 = vmatprep.subr.mxu0 0.0
        %2026 = vmatpush1.msra.mxu0 0.0
        %2027 = vmatprep.subr.mxu0 0.0
        %2028 = vmatpush1.msra.mxu0 0.0
        %2029 = vmatprep.subr.mxu0 0.0
        %2030 = vmatpush1.msra.mxu0 0.0
        %2031 = vmatprep.subr.mxu0 0.0
        %2032 = vmatpush1.msra.mxu0 0.0
        %2033 = vmatprep.subr.mxu0 0.0
        %2034 = vmatpush1.msra.mxu0 0.0
        %2035 = vmatprep.subr.mxu0 0.0
        %2036 = vmatpush1.msra.mxu0 0.0
        %2037 = vmatprep.subr.mxu0 0.0
        %2038 = vmatpush1.msra.mxu0 0.0
        %2039 = vmatprep.subr.mxu0 0.0
        %2040 = vmatpush1.msra.mxu0 0.0
        %2041 = vmatprep.subr.mxu0 0.0
        %2042 = vmatpush1.msra.mxu0 0.0
        %2043 = vmatprep.subr.mxu0 0.0
        %2044 = vmatpush1.msra.mxu0 0.0
        %2045 = vmatprep.subr.mxu0 0.0
        %2046 = vmatpush1.msra.mxu0 0.0
        %2047 = vmatprep.subr.mxu0 0.0
        %2048 = vmatpush1.msra.mxu0 0.0
        %2049 = vmatprep.subr.mxu0 0.0
        %2050 = vmatpush1.msra.mxu0 0.0
        %2051 = vmatprep.subr.mxu0 0.0
        %2052 = vmatpush1.msra.mxu0 0.0
        %2053 = vmatprep.subr.mxu0 0.0
        %2054 = vmatpush1.msra.mxu0 0.0
        %2055 = vmatprep.subr.mxu0 0.0
        %2056 = vmatpush1.msra.mxu0 0.0
        %2057 = vmatprep.subr.mxu0 0.0
        %2058 = vmatpush1.msra.mxu0 0.0
        %2059 = vmatprep.subr.mxu0 0.0
        %2060 = vmatpush1.msra.mxu0 0.0
        %2061 = vmatprep.subr.mxu0 0.0
        %2062 = vmatpush1.msra.mxu0 0.0
        %2063 = vmatprep.subr.mxu0 0.0
        %2064 = vmatpush1.msra.mxu0 0.0
        %2065 = vmatprep.subr.mxu0 0.0
        %2066 = vmatpush1.msra.mxu0 0.0
        %2067 = vmatprep.subr.mxu0 0.0
        %2068 = vmatpush1.msra.mxu0 0.0
        %2069 = vmatprep.subr.mxu0 0.0
        %2070 = vmatpush1.msra.mxu0 0.0
        %2071 = vmatprep.subr.mxu0 0.0
        %2072 = vmatpush1.msra.mxu0 0.0
        %2073 = vmatprep.subr.mxu0 0.0
        %2074 = vmatpush1.msra.mxu0 0.0
        %2075 = vmatprep.mubr.f32.mxu0 0.0
        %2076 = vmatmul.mubr.f32.gmra.mrb[0].mxu0 %v282
        %v2077 = vpop.f32.mrb[0].mxu0
        %v2078 = vadd.f32 %v1545, %v2077
        %v2079 = vpop.f32.mrb[0].mxu0
        %v2080 = vadd.f32 %v1546, %v2079
        %2081 = vdwg.mxu0
        %2082 = vmatprep.subr.mxu0 %v2010
        %2083 = vmatpush1.msra.mxu0 %v2009
        %2084 = vmatprep.subr.mxu0 0.0
        %2085 = vmatpush1.msra.mxu0 0.0
        %2086 = vmatprep.subr.mxu0 0.0
        %2087 = vmatpush1.msra.mxu0 0.0
        %2088 = vmatprep.subr.mxu0 0.0
        %2089 = vmatpush1.msra.mxu0 0.0
        %2090 = vmatprep.subr.mxu0 0.0
        %2091 = vmatpush1.msra.mxu0 0.0
        %2092 = vmatprep.subr.mxu0 0.0
        %2093 = vmatpush1.msra.mxu0 0.0
        %2094 = vmatprep.subr.mxu0 0.0
        %2095 = vmatpush1.msra.mxu0 0.0
        %2096 = vmatprep.subr.mxu0 0.0
        %2097 = vmatpush1.msra.mxu0 0.0
        %2098 = vmatprep.subr.mxu0 0.0
        %2099 = vmatpush1.msra.mxu0 0.0
        %2100 = vmatprep.subr.mxu0 0.0
        %2101 = vmatpush1.msra.mxu0 0.0
        %2102 = vmatprep.subr.mxu0 0.0
        %2103 = vmatpush1.msra.mxu0 0.0
        %2104 = vmatprep.subr.mxu0 0.0
        %2105 = vmatpush1.msra.mxu0 0.0
        %2106 = vmatprep.subr.mxu0 0.0
        %2107 = vmatpush1.msra.mxu0 0.0
        %2108 = vmatprep.subr.mxu0 0.0
        %2109 = vmatpush1.msra.mxu0 0.0
        %2110 = vmatprep.subr.mxu0 0.0
        %2111 = vmatpush1.msra.mxu0 0.0
        %2112 = vmatprep.subr.mxu0 0.0
        %2113 = vmatpush1.msra.mxu0 0.0
        %2114 = vmatprep.subr.mxu0 0.0
        %2115 = vmatpush1.msra.mxu0 0.0
        %2116 = vmatprep.subr.mxu0 0.0
        %2117 = vmatpush1.msra.mxu0 0.0
        %2118 = vmatprep.subr.mxu0 0.0
        %2119 = vmatpush1.msra.mxu0 0.0
        %2120 = vmatprep.subr.mxu0 0.0
        %2121 = vmatpush1.msra.mxu0 0.0
        %2122 = vmatprep.subr.mxu0 0.0
        %2123 = vmatpush1.msra.mxu0 0.0
        %2124 = vmatprep.subr.mxu0 0.0
        %2125 = vmatpush1.msra.mxu0 0.0
        %2126 = vmatprep.subr.mxu0 0.0
        %2127 = vmatpush1.msra.mxu0 0.0
        %2128 = vmatprep.subr.mxu0 0.0
        %2129 = vmatpush1.msra.mxu0 0.0
        %2130 = vmatprep.subr.mxu0 0.0
        %2131 = vmatpush1.msra.mxu0 0.0
        %2132 = vmatprep.subr.mxu0 0.0
        %2133 = vmatpush1.msra.mxu0 0.0
        %2134 = vmatprep.subr.mxu0 0.0
        %2135 = vmatpush1.msra.mxu0 0.0
        %2136 = vmatprep.subr.mxu0 0.0
        %2137 = vmatpush1.msra.mxu0 0.0
        %2138 = vmatprep.subr.mxu0 0.0
        %2139 = vmatpush1.msra.mxu0 0.0
        %2140 = vmatprep.subr.mxu0 0.0
        %2141 = vmatpush1.msra.mxu0 0.0
        %2142 = vmatprep.subr.mxu0 0.0
        %2143 = vmatpush1.msra.mxu0 0.0
        %2144 = vmatprep.subr.mxu0 0.0
        %2145 = vmatpush1.msra.mxu0 0.0
        %2146 = vmatprep.mubr.f32.mxu0 0.0
        %2147 = vmatmul.mubr.f32.gmra.mrb[0].mxu0 %v282
        %v2148 = vpop.f32.mrb[0].mxu0
        %v2149 = vadd.f32 %v1547, %v2148
        %v2150 = vpop.f32.mrb[0].mxu0
        %v2151 = vadd.f32 %v1548, %v2150
        %2152 = vdwg.mxu0
        %v2153 = vtanh.pop %v2078
        %v2154 = vtanh.pop %v2080
        %v2155 = vtanh.pop %v2149
        %v2156 = vtanh.pop %v2151
        %v2157 = vmul.f32 %v430, %v2153
        %v2158 = vmul.f32 %v430, %v2154
        %v2159 = vmul.f32 %v430, %v2155
        %v2160 = vmul.f32 %v430, %v2156
        %v2161 = vadd.f32 %v1532, %v2157
        %v2162 = vadd.f32 %v1533, %v2158
        %v2163 = vadd.f32 %v1534, %v2159
        %v2164 = vadd.f32 %v1535, %v2160
        %s2165 = scalar_lea.vmem %s243, 64 [#allocation10]
        %2166 = vst [vmem:[%s2165] sm:$0xff] %v2161
        %2167 = vst [vmem:[%s2165 + $0x8] sm:$0xff] %v2162
        %s2168 = scalar_lea.vmem %s243, 80 [#allocation10]
        %2169 = vst [vmem:[%s2168] sm:$0xff] %v2163
        %2170 = vst [vmem:[%s2168 + $0x8] sm:$0xff] %v2164
        %s2171 = sadd.s32 %s273, 3
        %s2172 = sld [smem:[#allocation4 + %s2171]]
        %v2173 = vstv %s2172
        %v2174 = vadd.f32 %v253, %v2173
        %v2175 = vadd.f32 %v254, %v2173
        %v2176 = vadd.f32 %v255, %v2173
        %v2177 = vadd.f32 %v256, %v2173
        %2178 = vmatprep.subr.mxu0 %v2162
        %2179 = vmatpush1.msra.mxu0 %v2161
        %2180 = vmatprep.subr.mxu0 0.0
        %2181 = vmatpush1.msra.mxu0 0.0
        %2182 = vmatprep.subr.mxu0 0.0
        %2183 = vmatpush1.msra.mxu0 0.0
        %2184 = vmatprep.subr.mxu0 0.0
        %2185 = vmatpush1.msra.mxu0 0.0
        %2186 = vmatprep.subr.mxu0 0.0
        %2187 = vmatpush1.msra.mxu0 0.0
        %2188 = vmatprep.subr.mxu0 0.0
        %2189 = vmatpush1.msra.mxu0 0.0
        %2190 = vmatprep.subr.mxu0 0.0
        %2191 = vmatpush1.msra.mxu0 0.0
        %2192 = vmatprep.subr.mxu0 0.0
        %2193 = vmatpush1.msra.mxu0 0.0
        %2194 = vmatprep.subr.mxu0 0.0
        %2195 = vmatpush1.msra.mxu0 0.0
        %2196 = vmatprep.subr.mxu0 0.0
        %2197 = vmatpush1.msra.mxu0 0.0
        %2198 = vmatprep.subr.mxu0 0.0
        %2199 = vmatpush1.msra.mxu0 0.0
        %2200 = vmatprep.subr.mxu0 0.0
        %2201 = vmatpush1.msra.mxu0 0.0
        %2202 = vmatprep.subr.mxu0 0.0
        %2203 = vmatpush1.msra.mxu0 0.0
        %2204 = vmatprep.subr.mxu0 0.0
        %2205 = vmatpush1.msra.mxu0 0.0
        %2206 = vmatprep.subr.mxu0 0.0
        %2207 = vmatpush1.msra.mxu0 0.0
        %2208 = vmatprep.subr.mxu0 0.0
        %2209 = vmatpush1.msra.mxu0 0.0
        %2210 = vmatprep.subr.mxu0 0.0
        %2211 = vmatpush1.msra.mxu0 0.0
        %2212 = vmatprep.subr.mxu0 0.0
        %2213 = vmatpush1.msra.mxu0 0.0
        %2214 = vmatprep.subr.mxu0 0.0
        %2215 = vmatpush1.msra.mxu0 0.0
        %2216 = vmatprep.subr.mxu0 0.0
        %2217 = vmatpush1.msra.mxu0 0.0
        %2218 = vmatprep.subr.mxu0 0.0
        %2219 = vmatpush1.msra.mxu0 0.0
        %2220 = vmatprep.subr.mxu0 0.0
        %2221 = vmatpush1.msra.mxu0 0.0
        %2222 = vmatprep.subr.mxu0 0.0
        %2223 = vmatpush1.msra.mxu0 0.0
        %2224 = vmatprep.subr.mxu0 0.0
        %2225 = vmatpush1.msra.mxu0 0.0
        %2226 = vmatprep.subr.mxu0 0.0
        %2227 = vmatpush1.msra.mxu0 0.0
        %2228 = vmatprep.subr.mxu0 0.0
        %2229 = vmatpush1.msra.mxu0 0.0
        %2230 = vmatprep.subr.mxu0 0.0
        %2231 = vmatpush1.msra.mxu0 0.0
        %2232 = vmatprep.subr.mxu0 0.0
        %2233 = vmatpush1.msra.mxu0 0.0
        %2234 = vmatprep.subr.mxu0 0.0
        %2235 = vmatpush1.msra.mxu0 0.0
        %2236 = vmatprep.subr.mxu0 0.0
        %2237 = vmatpush1.msra.mxu0 0.0
        %2238 = vmatprep.subr.mxu0 0.0
        %2239 = vmatpush1.msra.mxu0 0.0
        %2240 = vmatprep.subr.mxu0 0.0
        %2241 = vmatpush1.msra.mxu0 0.0
        %2242 = vmatprep.mubr.f32.mxu0 0.0
        %2243 = vmatmul.mubr.f32.gmra.mrb[0].mxu0 %v282
        %v2244 = vpop.f32.mrb[0].mxu0
        %v2245 = vadd.f32 %v2174, %v2244
        %v2246 = vpop.f32.mrb[0].mxu0
        %v2247 = vadd.f32 %v2175, %v2246
        %2248 = vdwg.mxu0
        %2249 = vmatprep.subr.mxu0 %v2164
        %2250 = vmatpush1.msra.mxu0 %v2163
        %2251 = vmatprep.subr.mxu0 0.0
        %2252 = vmatpush1.msra.mxu0 0.0
        %2253 = vmatprep.subr.mxu0 0.0
        %2254 = vmatpush1.msra.mxu0 0.0
        %2255 = vmatprep.subr.mxu0 0.0
        %2256 = vmatpush1.msra.mxu0 0.0
        %2257 = vmatprep.subr.mxu0 0.0
        %2258 = vmatpush1.msra.mxu0 0.0
        %2259 = vmatprep.subr.mxu0 0.0
        %2260 = vmatpush1.msra.mxu0 0.0
        %2261 = vmatprep.subr.mxu0 0.0
        %2262 = vmatpush1.msra.mxu0 0.0
        %2263 = vmatprep.subr.mxu0 0.0
        %2264 = vmatpush1.msra.mxu0 0.0
        %2265 = vmatprep.subr.mxu0 0.0
        %2266 = vmatpush1.msra.mxu0 0.0
        %2267 = vmatprep.subr.mxu0 0.0
        %2268 = vmatpush1.msra.mxu0 0.0
        %2269 = vmatprep.subr.mxu0 0.0
        %2270 = vmatpush1.msra.mxu0 0.0
        %2271 = vmatprep.subr.mxu0 0.0
        %2272 = vmatpush1.msra.mxu0 0.0
        %2273 = vmatprep.subr.mxu0 0.0
        %2274 = vmatpush1.msra.mxu0 0.0
        %2275 = vmatprep.subr.mxu0 0.0
        %2276 = vmatpush1.msra.mxu0 0.0
        %2277 = vmatprep.subr.mxu0 0.0
        %2278 = vmatpush1.msra.mxu0 0.0
        %2279 = vmatprep.subr.mxu0 0.0
        %2280 = vmatpush1.msra.mxu0 0.0
        %2281 = vmatprep.subr.mxu0 0.0
        %2282 = vmatpush1.msra.mxu0 0.0
        %2283 = vmatprep.subr.mxu0 0.0
        %2284 = vmatpush1.msra.mxu0 0.0
        %2285 = vmatprep.subr.mxu0 0.0
        %2286 = vmatpush1.msra.mxu0 0.0
        %2287 = vmatprep.subr.mxu0 0.0
        %2288 = vmatpush1.msra.mxu0 0.0
        %2289 = vmatprep.subr.mxu0 0.0
        %2290 = vmatpush1.msra.mxu0 0.0
        %2291 = vmatprep.subr.mxu0 0.0
        %2292 = vmatpush1.msra.mxu0 0.0
        %2293 = vmatprep.subr.mxu0 0.0
        %2294 = vmatpush1.msra.mxu0 0.0
        %2295 = vmatprep.subr.mxu0 0.0
        %2296 = vmatpush1.msra.mxu0 0.0
        %2297 = vmatprep.subr.mxu0 0.0
        %2298 = vmatpush1.msra.mxu0 0.0
        %2299 = vmatprep.subr.mxu0 0.0
        %2300 = vmatpush1.msra.mxu0 0.0
        %2301 = vmatprep.subr.mxu0 0.0
        %2302 = vmatpush1.msra.mxu0 0.0
        %2303 = vmatprep.subr.mxu0 0.0
        %2304 = vmatpush1.msra.mxu0 0.0
        %2305 = vmatprep.subr.mxu0 0.0
        %2306 = vmatpush1.msra.mxu0 0.0
        %2307 = vmatprep.subr.mxu0 0.0
        %2308 = vmatpush1.msra.mxu0 0.0
        %2309 = vmatprep.subr.mxu0 0.0
        %2310 = vmatpush1.msra.mxu0 0.0
        %2311 = vmatprep.subr.mxu0 0.0
        %2312 = vmatpush1.msra.mxu0 0.0
        %2313 = vmatprep.mubr.f32.mxu0 0.0
        %2314 = vmatmul.mubr.f32.gmra.mrb[0].mxu0 %v282
        %v2315 = vpop.f32.mrb[0].mxu0
        %v2316 = vadd.f32 %v2176, %v2315
        %v2317 = vpop.f32.mrb[0].mxu0
        %v2318 = vadd.f32 %v2177, %v2317
        %2319 = vdwg.mxu0
        %v2320 = vtanh.pop %v2245
        %v2321 = vtanh.pop %v2247
        %v2322 = vtanh.pop %v2316
        %v2323 = vtanh.pop %v2318
        %v2324 = vmul.f32 %v430, %v2320
        %v2325 = vmul.f32 %v430, %v2321
        %v2326 = vmul.f32 %v430, %v2322
        %v2327 = vmul.f32 %v430, %v2323
        %v2328 = vadd.f32 %v2161, %v2324
        %v2329 = vadd.f32 %v2162, %v2325
        %v2330 = vadd.f32 %v2163, %v2326
        %v2331 = vadd.f32 %v2164, %v2327
        %2332 = vmatprep.subr.mxu0 %v2329
        %2333 = vmatpush1.msra.mxu0 %v2328
        %2334 = vmatprep.subr.mxu0 0.0
        %2335 = vmatpush1.msra.mxu0 0.0
        %2336 = vmatprep.subr.mxu0 0.0
        %2337 = vmatpush1.msra.mxu0 0.0
        %2338 = vmatprep.subr.mxu0 0.0
        %2339 = vmatpush1.msra.mxu0 0.0
        %2340 = vmatprep.subr.mxu0 0.0
        %2341 = vmatpush1.msra.mxu0 0.0
        %2342 = vmatprep.subr.mxu0 0.0
        %2343 = vmatpush1.msra.mxu0 0.0
        %2344 = vmatprep.subr.mxu0 0.0
        %2345 = vmatpush1.msra.mxu0 0.0
        %2346 = vmatprep.subr.mxu0 0.0
        %2347 = vmatpush1.msra.mxu0 0.0
        %2348 = vmatprep.subr.mxu0 0.0
        %2349 = vmatpush1.msra.mxu0 0.0
        %2350 = vmatprep.subr.mxu0 0.0
        %2351 = vmatpush1.msra.mxu0 0.0
        %2352 = vmatprep.subr.mxu0 0.0
        %2353 = vmatpush1.msra.mxu0 0.0
        %2354 = vmatprep.subr.mxu0 0.0
        %2355 = vmatpush1.msra.mxu0 0.0
        %2356 = vmatprep.subr.mxu0 0.0
        %2357 = vmatpush1.msra.mxu0 0.0
        %2358 = vmatprep.subr.mxu0 0.0
        %2359 = vmatpush1.msra.mxu0 0.0
        %2360 = vmatprep.subr.mxu0 0.0
        %2361 = vmatpush1.msra.mxu0 0.0
        %2362 = vmatprep.subr.mxu0 0.0
        %2363 = vmatpush1.msra.mxu0 0.0
        %2364 = vmatprep.subr.mxu0 0.0
        %2365 = vmatpush1.msra.mxu0 0.0
        %2366 = vmatprep.subr.mxu0 0.0
        %2367 = vmatpush1.msra.mxu0 0.0
        %2368 = vmatprep.subr.mxu0 0.0
        %2369 = vmatpush1.msra.mxu0 0.0
        %2370 = vmatprep.subr.mxu0 0.0
        %2371 = vmatpush1.msra.mxu0 0.0
        %2372 = vmatprep.subr.mxu0 0.0
        %2373 = vmatpush1.msra.mxu0 0.0
        %2374 = vmatprep.subr.mxu0 0.0
        %2375 = vmatpush1.msra.mxu0 0.0
        %2376 = vmatprep.subr.mxu0 0.0
        %2377 = vmatpush1.msra.mxu0 0.0
        %2378 = vmatprep.subr.mxu0 0.0
        %2379 = vmatpush1.msra.mxu0 0.0
        %2380 = vmatprep.subr.mxu0 0.0
        %2381 = vmatpush1.msra.mxu0 0.0
        %2382 = vmatprep.subr.mxu0 0.0
        %2383 = vmatpush1.msra.mxu0 0.0
        %2384 = vmatprep.subr.mxu0 0.0
        %2385 = vmatpush1.msra.mxu0 0.0
        %2386 = vmatprep.subr.mxu0 0.0
        %2387 = vmatpush1.msra.mxu0 0.0
        %2388 = vmatprep.subr.mxu0 0.0
        %2389 = vmatpush1.msra.mxu0 0.0
        %2390 = vmatprep.subr.mxu0 0.0
        %2391 = vmatpush1.msra.mxu0 0.0
        %2392 = vmatprep.subr.mxu0 0.0
        %2393 = vmatpush1.msra.mxu0 0.0
        %2394 = vmatprep.subr.mxu0 0.0
        %2395 = vmatpush1.msra.mxu0 0.0
        %2396 = vmatprep.mubr.f32.mxu0 0.0
        %2397 = vmatmul.mubr.f32.gmra.mrb[0].mxu0 %v282
        %v2398 = vpop.f32.mrb[0].mxu0
        %v2399 = vadd.f32 %v2174, %v2398
        %v2400 = vpop.f32.mrb[0].mxu0
        %v2401 = vadd.f32 %v2175, %v2400
        %2402 = vdwg.mxu0
        %2403 = vmatprep.subr.mxu0 %v2331
        %2404 = vmatpush1.msra.mxu0 %v2330
        %2405 = vmatprep.subr.mxu0 0.0
        %2406 = vmatpush1.msra.mxu0 0.0
        %2407 = vmatprep.subr.mxu0 0.0
        %2408 = vmatpush1.msra.mxu0 0.0
        %2409 = vmatprep.subr.mxu0 0.0
        %2410 = vmatpush1.msra.mxu0 0.0
        %2411 = vmatprep.subr.mxu0 0.0
        %2412 = vmatpush1.msra.mxu0 0.0
        %2413 = vmatprep.subr.mxu0 0.0
        %2414 = vmatpush1.msra.mxu0 0.0
        %2415 = vmatprep.subr.mxu0 0.0
        %2416 = vmatpush1.msra.mxu0 0.0
        %2417 = vmatprep.subr.mxu0 0.0
        %2418 = vmatpush1.msra.mxu0 0.0
        %2419 = vmatprep.subr.mxu0 0.0
        %2420 = vmatpush1.msra.mxu0 0.0
        %2421 = vmatprep.subr.mxu0 0.0
        %2422 = vmatpush1.msra.mxu0 0.0
        %2423 = vmatprep.subr.mxu0 0.0
        %2424 = vmatpush1.msra.mxu0 0.0
        %2425 = vmatprep.subr.mxu0 0.0
        %2426 = vmatpush1.msra.mxu0 0.0
        %2427 = vmatprep.subr.mxu0 0.0
        %2428 = vmatpush1.msra.mxu0 0.0
        %2429 = vmatprep.subr.mxu0 0.0
        %2430 = vmatpush1.msra.mxu0 0.0
        %2431 = vmatprep.subr.mxu0 0.0
        %2432 = vmatpush1.msra.mxu0 0.0
        %2433 = vmatprep.subr.mxu0 0.0
        %2434 = vmatpush1.msra.mxu0 0.0
        %2435 = vmatprep.subr.mxu0 0.0
        %2436 = vmatpush1.msra.mxu0 0.0
        %2437 = vmatprep.subr.mxu0 0.0
        %2438 = vmatpush1.msra.mxu0 0.0
        %2439 = vmatprep.subr.mxu0 0.0
        %2440 = vmatpush1.msra.mxu0 0.0
        %2441 = vmatprep.subr.mxu0 0.0
        %2442 = vmatpush1.msra.mxu0 0.0
        %2443 = vmatprep.subr.mxu0 0.0
        %2444 = vmatpush1.msra.mxu0 0.0
        %2445 = vmatprep.subr.mxu0 0.0
        %2446 = vmatpush1.msra.mxu0 0.0
        %2447 = vmatprep.subr.mxu0 0.0
        %2448 = vmatpush1.msra.mxu0 0.0
        %2449 = vmatprep.subr.mxu0 0.0
        %2450 = vmatpush1.msra.mxu0 0.0
        %2451 = vmatprep.subr.mxu0 0.0
        %2452 = vmatpush1.msra.mxu0 0.0
        %2453 = vmatprep.subr.mxu0 0.0
        %2454 = vmatpush1.msra.mxu0 0.0
        %2455 = vmatprep.subr.mxu0 0.0
        %2456 = vmatpush1.msra.mxu0 0.0
        %2457 = vmatprep.subr.mxu0 0.0
        %2458 = vmatpush1.msra.mxu0 0.0
        %2459 = vmatprep.subr.mxu0 0.0
        %2460 = vmatpush1.msra.mxu0 0.0
        %2461 = vmatprep.subr.mxu0 0.0
        %2462 = vmatpush1.msra.mxu0 0.0
        %2463 = vmatprep.subr.mxu0 0.0
        %2464 = vmatpush1.msra.mxu0 0.0
        %2465 = vmatprep.subr.mxu0 0.0
        %2466 = vmatpush1.msra.mxu0 0.0
        %2467 = vmatprep.mubr.f32.mxu0 0.0
        %2468 = vmatmul.mubr.f32.gmra.mrb[0].mxu0 %v282
        %v2469 = vpop.f32.mrb[0].mxu0
        %v2470 = vadd.f32 %v2176, %v2469
        %v2471 = vpop.f32.mrb[0].mxu0
        %v2472 = vadd.f32 %v2177, %v2471
        %2473 = vdwg.mxu0
        %v2474 = vtanh.pop %v2399
        %v2475 = vtanh.pop %v2401
        %v2476 = vtanh.pop %v2470
        %v2477 = vtanh.pop %v2472
        %v2478 = vmul.f32 %v430, %v2474
        %v2479 = vmul.f32 %v430, %v2475
        %v2480 = vmul.f32 %v430, %v2476
        %v2481 = vmul.f32 %v430, %v2477
        %v2482 = vadd.f32 %v2161, %v2478
        %v2483 = vadd.f32 %v2162, %v2479
        %v2484 = vadd.f32 %v2163, %v2480
        %v2485 = vadd.f32 %v2164, %v2481
        %2486 = vmatprep.subr.mxu0 %v2483
        %2487 = vmatpush1.msra.mxu0 %v2482
        %2488 = vmatprep.subr.mxu0 0.0
        %2489 = vmatpush1.msra.mxu0 0.0
        %2490 = vmatprep.subr.mxu0 0.0
        %2491 = vmatpush1.msra.mxu0 0.0
        %2492 = vmatprep.subr.mxu0 0.0
        %2493 = vmatpush1.msra.mxu0 0.0
        %2494 = vmatprep.subr.mxu0 0.0
        %2495 = vmatpush1.msra.mxu0 0.0
        %2496 = vmatprep.subr.mxu0 0.0
        %2497 = vmatpush1.msra.mxu0 0.0
        %2498 = vmatprep.subr.mxu0 0.0
        %2499 = vmatpush1.msra.mxu0 0.0
        %2500 = vmatprep.subr.mxu0 0.0
        %2501 = vmatpush1.msra.mxu0 0.0
        %2502 = vmatprep.subr.mxu0 0.0
        %2503 = vmatpush1.msra.mxu0 0.0
        %2504 = vmatprep.subr.mxu0 0.0
        %2505 = vmatpush1.msra.mxu0 0.0
        %2506 = vmatprep.subr.mxu0 0.0
        %2507 = vmatpush1.msra.mxu0 0.0
        %2508 = vmatprep.subr.mxu0 0.0
        %2509 = vmatpush1.msra.mxu0 0.0
        %2510 = vmatprep.subr.mxu0 0.0
        %2511 = vmatpush1.msra.mxu0 0.0
        %2512 = vmatprep.subr.mxu0 0.0
        %2513 = vmatpush1.msra.mxu0 0.0
        %2514 = vmatprep.subr.mxu0 0.0
        %2515 = vmatpush1.msra.mxu0 0.0
        %2516 = vmatprep.subr.mxu0 0.0
        %2517 = vmatpush1.msra.mxu0 0.0
        %2518 = vmatprep.subr.mxu0 0.0
        %2519 = vmatpush1.msra.mxu0 0.0
        %2520 = vmatprep.subr.mxu0 0.0
        %2521 = vmatpush1.msra.mxu0 0.0
        %2522 = vmatprep.subr.mxu0 0.0
        %2523 = vmatpush1.msra.mxu0 0.0
        %2524 = vmatprep.subr.mxu0 0.0
        %2525 = vmatpush1.msra.mxu0 0.0
        %2526 = vmatprep.subr.mxu0 0.0
        %2527 = vmatpush1.msra.mxu0 0.0
        %2528 = vmatprep.subr.mxu0 0.0
        %2529 = vmatpush1.msra.mxu0 0.0
        %2530 = vmatprep.subr.mxu0 0.0
        %2531 = vmatpush1.msra.mxu0 0.0
        %2532 = vmatprep.subr.mxu0 0.0
        %2533 = vmatpush1.msra.mxu0 0.0
        %2534 = vmatprep.subr.mxu0 0.0
        %2535 = vmatpush1.msra.mxu0 0.0
        %2536 = vmatprep.subr.mxu0 0.0
        %2537 = vmatpush1.msra.mxu0 0.0
        %2538 = vmatprep.subr.mxu0 0.0
        %2539 = vmatpush1.msra.mxu0 0.0
        %2540 = vmatprep.subr.mxu0 0.0
        %2541 = vmatpush1.msra.mxu0 0.0
        %2542 = vmatprep.subr.mxu0 0.0
        %2543 = vmatpush1.msra.mxu0 0.0
        %2544 = vmatprep.subr.mxu0 0.0
        %2545 = vmatpush1.msra.mxu0 0.0
        %2546 = vmatprep.subr.mxu0 0.0
        %2547 = vmatpush1.msra.mxu0 0.0
        %2548 = vmatprep.subr.mxu0 0.0
        %2549 = vmatpush1.msra.mxu0 0.0
        %2550 = vmatprep.mubr.f32.mxu0 0.0
        %2551 = vmatmul.mubr.f32.gmra.mrb[0].mxu0 %v282
        %v2552 = vpop.f32.mrb[0].mxu0
        %v2553 = vadd.f32 %v2174, %v2552
        %v2554 = vpop.f32.mrb[0].mxu0
        %v2555 = vadd.f32 %v2175, %v2554
        %2556 = vdwg.mxu0
        %2557 = vmatprep.subr.mxu0 %v2485
        %2558 = vmatpush1.msra.mxu0 %v2484
        %2559 = vmatprep.subr.mxu0 0.0
        %2560 = vmatpush1.msra.mxu0 0.0
        %2561 = vmatprep.subr.mxu0 0.0
        %2562 = vmatpush1.msra.mxu0 0.0
        %2563 = vmatprep.subr.mxu0 0.0
        %2564 = vmatpush1.msra.mxu0 0.0
        %2565 = vmatprep.subr.mxu0 0.0
        %2566 = vmatpush1.msra.mxu0 0.0
        %2567 = vmatprep.subr.mxu0 0.0
        %2568 = vmatpush1.msra.mxu0 0.0
        %2569 = vmatprep.subr.mxu0 0.0
        %2570 = vmatpush1.msra.mxu0 0.0
        %2571 = vmatprep.subr.mxu0 0.0
        %2572 = vmatpush1.msra.mxu0 0.0
        %2573 = vmatprep.subr.mxu0 0.0
        %2574 = vmatpush1.msra.mxu0 0.0
        %2575 = vmatprep.subr.mxu0 0.0
        %2576 = vmatpush1.msra.mxu0 0.0
        %2577 = vmatprep.subr.mxu0 0.0
        %2578 = vmatpush1.msra.mxu0 0.0
        %2579 = vmatprep.subr.mxu0 0.0
        %2580 = vmatpush1.msra.mxu0 0.0
        %2581 = vmatprep.subr.mxu0 0.0
        %2582 = vmatpush1.msra.mxu0 0.0
        %2583 = vmatprep.subr.mxu0 0.0
        %2584 = vmatpush1.msra.mxu0 0.0
        %2585 = vmatprep.subr.mxu0 0.0
        %2586 = vmatpush1.msra.mxu0 0.0
        %2587 = vmatprep.subr.mxu0 0.0
        %2588 = vmatpush1.msra.mxu0 0.0
        %2589 = vmatprep.subr.mxu0 0.0
        %2590 = vmatpush1.msra.mxu0 0.0
        %2591 = vmatprep.subr.mxu0 0.0
        %2592 = vmatpush1.msra.mxu0 0.0
        %2593 = vmatprep.subr.mxu0 0.0
        %2594 = vmatpush1.msra.mxu0 0.0
        %2595 = vmatprep.subr.mxu0 0.0
        %2596 = vmatpush1.msra.mxu0 0.0
        %2597 = vmatprep.subr.mxu0 0.0
        %2598 = vmatpush1.msra.mxu0 0.0
        %2599 = vmatprep.subr.mxu0 0.0
        %2600 = vmatpush1.msra.mxu0 0.0
        %2601 = vmatprep.subr.mxu0 0.0
        %2602 = vmatpush1.msra.mxu0 0.0
        %2603 = vmatprep.subr.mxu0 0.0
        %2604 = vmatpush1.msra.mxu0 0.0
        %2605 = vmatprep.subr.mxu0 0.0
        %2606 = vmatpush1.msra.mxu0 0.0
        %2607 = vmatprep.subr.mxu0 0.0
        %2608 = vmatpush1.msra.mxu0 0.0
        %2609 = vmatprep.subr.mxu0 0.0
        %2610 = vmatpush1.msra.mxu0 0.0
        %2611 = vmatprep.subr.mxu0 0.0
        %2612 = vmatpush1.msra.mxu0 0.0
        %2613 = vmatprep.subr.mxu0 0.0
        %2614 = vmatpush1.msra.mxu0 0.0
        %2615 = vmatprep.subr.mxu0 0.0
        %2616 = vmatpush1.msra.mxu0 0.0
        %2617 = vmatprep.subr.mxu0 0.0
        %2618 = vmatpush1.msra.mxu0 0.0
        %2619 = vmatprep.subr.mxu0 0.0
        %2620 = vmatpush1.msra.mxu0 0.0
        %2621 = vmatprep.mubr.f32.mxu0 0.0
        %2622 = vmatmul.mubr.f32.gmra.mrb[0].mxu0 %v282
        %v2623 = vpop.f32.mrb[0].mxu0
        %v2624 = vadd.f32 %v2176, %v2623
        %v2625 = vpop.f32.mrb[0].mxu0
        %v2626 = vadd.f32 %v2177, %v2625
        %2627 = vdwg.mxu0
        %v2628 = vtanh.pop %v2553
        %v2629 = vtanh.pop %v2555
        %v2630 = vtanh.pop %v2624
        %v2631 = vtanh.pop %v2626
        %v2632 = vmul.f32 %v430, %v2628
        %v2633 = vmul.f32 %v430, %v2629
        %v2634 = vmul.f32 %v430, %v2630
        %v2635 = vmul.f32 %v430, %v2631
        %v2636 = vadd.f32 %v2161, %v2632
        %v2637 = vadd.f32 %v2162, %v2633
        %v2638 = vadd.f32 %v2163, %v2634
        %v2639 = vadd.f32 %v2164, %v2635
        %2640 = vmatprep.subr.mxu0 %v2637
        %2641 = vmatpush1.msra.mxu0 %v2636
        %2642 = vmatprep.subr.mxu0 0.0
        %2643 = vmatpush1.msra.mxu0 0.0
        %2644 = vmatprep.subr.mxu0 0.0
        %2645 = vmatpush1.msra.mxu0 0.0
        %2646 = vmatprep.subr.mxu0 0.0
        %2647 = vmatpush1.msra.mxu0 0.0
        %2648 = vmatprep.subr.mxu0 0.0
        %2649 = vmatpush1.msra.mxu0 0.0
        %2650 = vmatprep.subr.mxu0 0.0
        %2651 = vmatpush1.msra.mxu0 0.0
        %2652 = vmatprep.subr.mxu0 0.0
        %2653 = vmatpush1.msra.mxu0 0.0
        %2654 = vmatprep.subr.mxu0 0.0
        %2655 = vmatpush1.msra.mxu0 0.0
        %2656 = vmatprep.subr.mxu0 0.0
        %2657 = vmatpush1.msra.mxu0 0.0
        %2658 = vmatprep.subr.mxu0 0.0
        %2659 = vmatpush1.msra.mxu0 0.0
        %2660 = vmatprep.subr.mxu0 0.0
        %2661 = vmatpush1.msra.mxu0 0.0
        %2662 = vmatprep.subr.mxu0 0.0
        %2663 = vmatpush1.msra.mxu0 0.0
        %2664 = vmatprep.subr.mxu0 0.0
        %2665 = vmatpush1.msra.mxu0 0.0
        %2666 = vmatprep.subr.mxu0 0.0
        %2667 = vmatpush1.msra.mxu0 0.0
        %2668 = vmatprep.subr.mxu0 0.0
        %2669 = vmatpush1.msra.mxu0 0.0
        %2670 = vmatprep.subr.mxu0 0.0
        %2671 = vmatpush1.msra.mxu0 0.0
        %2672 = vmatprep.subr.mxu0 0.0
        %2673 = vmatpush1.msra.mxu0 0.0
        %2674 = vmatprep.subr.mxu0 0.0
        %2675 = vmatpush1.msra.mxu0 0.0
        %2676 = vmatprep.subr.mxu0 0.0
        %2677 = vmatpush1.msra.mxu0 0.0
        %2678 = vmatprep.subr.mxu0 0.0
        %2679 = vmatpush1.msra.mxu0 0.0
        %2680 = vmatprep.subr.mxu0 0.0
        %2681 = vmatpush1.msra.mxu0 0.0
        %2682 = vmatprep.subr.mxu0 0.0
        %2683 = vmatpush1.msra.mxu0 0.0
        %2684 = vmatprep.subr.mxu0 0.0
        %2685 = vmatpush1.msra.mxu0 0.0
        %2686 = vmatprep.subr.mxu0 0.0
        %2687 = vmatpush1.msra.mxu0 0.0
        %2688 = vmatprep.subr.mxu0 0.0
        %2689 = vmatpush1.msra.mxu0 0.0
        %2690 = vmatprep.subr.mxu0 0.0
        %2691 = vmatpush1.msra.mxu0 0.0
        %2692 = vmatprep.subr.mxu0 0.0
        %2693 = vmatpush1.msra.mxu0 0.0
        %2694 = vmatprep.subr.mxu0 0.0
        %2695 = vmatpush1.msra.mxu0 0.0
        %2696 = vmatprep.subr.mxu0 0.0
        %2697 = vmatpush1.msra.mxu0 0.0
        %2698 = vmatprep.subr.mxu0 0.0
        %2699 = vmatpush1.msra.mxu0 0.0
        %2700 = vmatprep.subr.mxu0 0.0
        %2701 = vmatpush1.msra.mxu0 0.0
        %2702 = vmatprep.subr.mxu0 0.0
        %2703 = vmatpush1.msra.mxu0 0.0
        %2704 = vmatprep.mubr.f32.mxu0 0.0
        %2705 = vmatmul.mubr.f32.gmra.mrb[0].mxu0 %v282
        %v2706 = vpop.f32.mrb[0].mxu0
        %v2707 = vadd.f32 %v2174, %v2706
        %v2708 = vpop.f32.mrb[0].mxu0
        %v2709 = vadd.f32 %v2175, %v2708
        %2710 = vdwg.mxu0
        %2711 = vmatprep.subr.mxu0 %v2639
        %2712 = vmatpush1.msra.mxu0 %v2638
        %2713 = vmatprep.subr.mxu0 0.0
        %2714 = vmatpush1.msra.mxu0 0.0
        %2715 = vmatprep.subr.mxu0 0.0
        %2716 = vmatpush1.msra.mxu0 0.0
        %2717 = vmatprep.subr.mxu0 0.0
        %2718 = vmatpush1.msra.mxu0 0.0
        %2719 = vmatprep.subr.mxu0 0.0
        %2720 = vmatpush1.msra.mxu0 0.0
        %2721 = vmatprep.subr.mxu0 0.0
        %2722 = vmatpush1.msra.mxu0 0.0
        %2723 = vmatprep.subr.mxu0 0.0
        %2724 = vmatpush1.msra.mxu0 0.0
        %2725 = vmatprep.subr.mxu0 0.0
        %2726 = vmatpush1.msra.mxu0 0.0
        %2727 = vmatprep.subr.mxu0 0.0
        %2728 = vmatpush1.msra.mxu0 0.0
        %2729 = vmatprep.subr.mxu0 0.0
        %2730 = vmatpush1.msra.mxu0 0.0
        %2731 = vmatprep.subr.mxu0 0.0
        %2732 = vmatpush1.msra.mxu0 0.0
        %2733 = vmatprep.subr.mxu0 0.0
        %2734 = vmatpush1.msra.mxu0 0.0
        %2735 = vmatprep.subr.mxu0 0.0
        %2736 = vmatpush1.msra.mxu0 0.0
        %2737 = vmatprep.subr.mxu0 0.0
        %2738 = vmatpush1.msra.mxu0 0.0
        %2739 = vmatprep.subr.mxu0 0.0
        %2740 = vmatpush1.msra.mxu0 0.0
        %2741 = vmatprep.subr.mxu0 0.0
        %2742 = vmatpush1.msra.mxu0 0.0
        %2743 = vmatprep.subr.mxu0 0.0
        %2744 = vmatpush1.msra.mxu0 0.0
        %2745 = vmatprep.subr.mxu0 0.0
        %2746 = vmatpush1.msra.mxu0 0.0
        %2747 = vmatprep.subr.mxu0 0.0
        %2748 = vmatpush1.msra.mxu0 0.0
        %2749 = vmatprep.subr.mxu0 0.0
        %2750 = vmatpush1.msra.mxu0 0.0
        %2751 = vmatprep.subr.mxu0 0.0
        %2752 = vmatpush1.msra.mxu0 0.0
        %2753 = vmatprep.subr.mxu0 0.0
        %2754 = vmatpush1.msra.mxu0 0.0
        %2755 = vmatprep.subr.mxu0 0.0
        %2756 = vmatpush1.msra.mxu0 0.0
        %2757 = vmatprep.subr.mxu0 0.0
        %2758 = vmatpush1.msra.mxu0 0.0
        %2759 = vmatprep.subr.mxu0 0.0
        %2760 = vmatpush1.msra.mxu0 0.0
        %2761 = vmatprep.subr.mxu0 0.0
        %2762 = vmatpush1.msra.mxu0 0.0
        %2763 = vmatprep.subr.mxu0 0.0
        %2764 = vmatpush1.msra.mxu0 0.0
        %2765 = vmatprep.subr.mxu0 0.0
        %2766 = vmatpush1.msra.mxu0 0.0
        %2767 = vmatprep.subr.mxu0 0.0
        %2768 = vmatpush1.msra.mxu0 0.0
        %2769 = vmatprep.subr.mxu0 0.0
        %2770 = vmatpush1.msra.mxu0 0.0
        %2771 = vmatprep.subr.mxu0 0.0
        %2772 = vmatpush1.msra.mxu0 0.0
        %2773 = vmatprep.subr.mxu0 0.0
        %2774 = vmatpush1.msra.mxu0 0.0
        %2775 = vmatprep.mubr.f32.mxu0 0.0
        %2776 = vmatmul.mubr.f32.gmra.mrb[0].mxu0 %v282
        %v2777 = vpop.f32.mrb[0].mxu0
        %v2778 = vadd.f32 %v2176, %v2777
        %v2779 = vpop.f32.mrb[0].mxu0
        %v2780 = vadd.f32 %v2177, %v2779
        %2781 = vdwg.mxu0
        %v2782 = vtanh.pop %v2707
        %v2783 = vtanh.pop %v2709
        %v2784 = vtanh.pop %v2778
        %v2785 = vtanh.pop %v2780
        %v2786 = vmul.f32 %v430, %v2782
        %v2787 = vmul.f32 %v430, %v2783
        %v2788 = vmul.f32 %v430, %v2784
        %v2789 = vmul.f32 %v430, %v2785
        %v2790 = vadd.f32 %v2161, %v2786
        %v2791 = vadd.f32 %v2162, %v2787
        %v2792 = vadd.f32 %v2163, %v2788
        %v2793 = vadd.f32 %v2164, %v2789
        %s2794 = scalar_lea.vmem %s243, 96 [#allocation10]
        %2795 = vst [vmem:[%s2794] sm:$0xff] %v2790
        %2796 = vst [vmem:[%s2794 + $0x8] sm:$0xff] %v2791
        %s2797 = scalar_lea.vmem %s243, 112 [#allocation10]
        %2798 = vst [vmem:[%s2797] sm:$0xff] %v2792
        %2799 = vst [vmem:[%s2797 + $0x8] sm:$0xff] %v2793
        %2800 = vst [vmem:[#allocation2] sm:$0xff] %v2790
        %2801 = vst [vmem:[#allocation2 + $0x8] sm:$0xff] %v2791
        %2802 = vst [vmem:[#allocation2 + $0x10] sm:$0xff] %v2792
        %2803 = vst [vmem:[#allocation2 + $0x18] sm:$0xff] %v2793
        %s2804 = sand.u32 %s123, 1
        %s2805 = scalar_lea.sflag [#allocation7], %s2804
        %s2806 = sand.u32 %s123, 1
        %s2807 = smul.addr %s2806, 128
        %s2808 = scalar_lea.vmem [#allocation10], %s2807
        // Predicated region
        $region45: #{tpu_custom_call.1} parent=31 // pred_check
          %p2809 = pneg %p133
        $region46: #{tpu_custom_call.1} parent=31 // pred_check_branch
          %2811 = sbr.rel (%p2809) target = $region48
        $region47: #{tpu_custom_call.1} parent=31 // pred_region
          #allocation12 [shape = 'u32[6]{0}', space=smem, size = 0x18, scoped, tag = 'DMA stride descriptor']
          %s2812 = smul.u32 4, %s33
          %s2813 = smul.u32 2, %s32
          %s2815 = ssub.s32 2048, 2048
          %2816 = vsyncadd %s2805, %s2815
          %s2817 = smul.addr %s2813, 2
          %s2818 = smul.addr %s2812, 8
          %s2819 = sadd.s32 %s2817, %s2818
          %s2820 = smul.addr %s2819, 128
          %s2821 = scalar_lea.hbm %s4, %s2820
          %s2823 = sshll.u32 1, 14
          %s2824 = sxor.u32 4294967295, %s2823
          %s2827 = sshll.u32 7, 18
          %s2828 = sxor.u32 4294967295, %s2827
          %s2829 = sand.u32 0, %s2828
          %s2831 = sor.u32 %s2829, 0
          %s2833 = sshll.u32 3, 24
          %s2834 = sxor.u32 4294967295, %s2833
          %s2835 = sand.u32 %s2831, %s2834
          %s2837 = sor.u32 %s2835, 0
          %s2838 = sshll.u32 %s2808, 4
          %s2839 = int_to_ptr.vmem [resolvable:$true] %s2838
          %2845 = sst [smem:[#allocation12]] 512
          %s2846 = scalar_lea.smem [#allocation12], 1
          %2847 = sst [smem:[%s2846]] 1024
          %s2848 = scalar_lea.smem [#allocation12], 2
          %2849 = sst [smem:[%s2848]] 2
          %s2850 = scalar_lea.smem [#allocation12], 3
          %2851 = sst [smem:[%s2850]] 256
          %s2852 = scalar_lea.smem [#allocation12], 4
          %2853 = sst [smem:[%s2852]] 256
          %s2854 = scalar_lea.smem [#allocation12], 5
          %2855 = sst [smem:[%s2854]] 16
          %2857 = dma.general %s2839, 2048, %s2821, %s2805, [#allocation11], [#allocation12], %s2837, 0
        $region48: #{tpu_custom_call.1} parent=31 // pred_fallthru
          _
      $region32: #{tpu_custom_call.1} parent=5 // pred_fallthru
        _
      %p2858 = scmp.le.s32.totalorder 2, %s23
      // Predicated region
      $region49: #{tpu_custom_call.1} parent=5 // pred_check
        %p2859 = pneg %p2858
      $region50: #{tpu_custom_call.1} parent=5 // pred_check_branch
        %2861 = sbr.rel (%p2859) target = $region52
      $region51: #{tpu_custom_call.1} parent=5 // pred_region
        %s2862 = ssub.s32 %s23, 2
        // Predicated region
        $region53: #{tpu_custom_call.1} parent=51 // pred_check
          %p2863 = pneg %p139
        $region54: #{tpu_custom_call.1} parent=51 // pred_check_branch
          %2865 = sbr.rel (%p2863) target = $region56
        $region55: #{tpu_custom_call.1} parent=51 // pred_region
          %s2866 = sand.u32 %s124, 1
          %s2867 = scalar_lea.sflag [#allocation7], %s2866
          %s2868 = sand.u32 %s124, 1
          %s2869 = smul.addr %s2868, 128
          %s2870 = scalar_lea.vmem [#allocation10], %s2869
          %2871 = dma.done %s2867, 2048
        $region56: #{tpu_custom_call.1} parent=51 // pred_fallthru
          _
      $region52: #{tpu_custom_call.1} parent=5 // pred_fallthru
        _
    $region6: #{tpu_custom_call.1} parent=1 // loop_footer
      %s27 = sadd.s32 1, %s23
    $region7: #{tpu_custom_call.1} parent=1 // loop_footer_branch
      %22 = sbr.rel target = $region3
    $region8: #{tpu_custom_call.1} parent=1 // loop_exit
      _
    %2872 = vsyncpa [#allocation6], 1
    %s2873 = scalar_lea.sflag [#allocation6], 1
    %2874 = vsyncpa %s2873, 1
    %2875 = vsyncpa [#allocation9], 1
    %s2876 = scalar_lea.sflag [#allocation9], 1
    %2877 = vsyncpa %s2876, 1
    %2878 = vsyncpa [#allocation7], 1
    %s2879 = scalar_lea.sflag [#allocation7], 1
    %2880 = vsyncpa %s2879, 1

</llo_original>
